<compile_context>
chip_gen: v5e
topology: v5e:2x2
jax: 0.10.0
libtpu: 0.0.40
codegen_flags: <defaults>
</compile_context>

<pallas_src>
import functools

import jax
import jax.numpy as jnp
from jax.experimental import pallas as pl
from jax.experimental.pallas import tpu as pltpu


# ----------------------------------------------------------------------------
# small helpers
# ----------------------------------------------------------------------------
def _round_up(x, m):
    return (x + m - 1) // m * m


def _cdiv(a, b):
    return -(-a // b)


def _row_tile(width_f32, budget_bytes=128 * 1024, lo=16, hi=512):
    """Largest multiple-of-8 row count so a (rows, width) f32 value <= budget."""
    t = (budget_bytes // (4 * max(int(width_f32), 1))) // 8 * 8
    return int(max(lo, min(hi, t)))


def _vmem_limit(working_set_bytes):
    # generation-aware: computed from the actual buffers, capped at v7x's
    # 64 MiB physical VMEM (v5e/v6e have 128 MiB so this is always safe)
    return int(min(max(int(1.5 * working_set_bytes) + (4 << 20), 16 << 20),
                   64 << 20))


# ----------------------------------------------------------------------------
# Fully fused bottleneck kernel (stride == 1)
# ----------------------------------------------------------------------------
def _fused_block_kernel(xp_ref, w1_ref, b1_ref, w2_ref, b2_ref, w3_ref, b3_ref,
                        *rest, Hp, Wp, RB, SUB, CH, pack, has_proj):
    """Grid step (n, t): batch image n, flat output rows [t*RB, (t+1)*RB).

    xp_ref : (S, Cin)   zero-padded input image, spatially flattened (whole
                        image resident in VMEM; block index only depends on n)
    h1_scr : (RB + 2*Wp + 2, planes)  per-tile conv1 output incl. 3x3 halo
    w2_ref : (3, 3P, P) if pack else (9, P, P)
    o_ref  : (RB, Cout) flat output rows; row q maps to padded position q+Wp+1
    """
    if has_proj:
        ws_ref, bs_ref, o_ref, h1_scr = rest
    else:
        o_ref, h1_scr = rest
    cdt = h1_scr.dtype
    S_t = h1_scr.shape[0]                       # RB + 2*Wp + 2
    q0 = pl.program_id(1) * RB                  # first flat output row of tile

    # --- conv1 (1x1, BN folded) + ReLU over this tile's padded rows ---------
    w1 = w1_ref[...]
    b1 = b1_ref[...]

    def conv1_chunk(scr_off, ln):
        start = q0 + scr_off                    # absolute flat padded row
        xc = xp_ref[pl.ds(start, ln), :]
        h = jnp.dot(xc.astype(cdt), w1, preferred_element_type=jnp.float32)
        h = jnp.maximum(h + b1, 0.0)
        # zero h1 at padding rows/cols (the conv1 bias would otherwise leak
        # into the 3x3).  Column index via f32 floor-div: exact here.
        rid = (jax.lax.broadcasted_iota(jnp.int32, (ln, 1), 0)
               + start).astype(jnp.float32)
        col = rid - float(Wp) * jnp.floor(rid * (1.0 / Wp))
        keep = ((rid >= float(Wp)) & (rid < float((Hp - 1) * Wp))
                & (col > 0.5) & (col < float(Wp) - 1.5))
        h1_scr[pl.ds(scr_off, ln), :] = jnp.where(keep, h, 0.0).astype(cdt)

    off = 0
    while off < S_t:                            # static unrolled chunk loop
        ln = min(CH, S_t - off)
        conv1_chunk(off, ln)
        off += ln

    # --- conv2 (3x3) -> conv3 (1x1) -> shortcut -> ReLU per row sub-tile ----
    def sub_tile(r):
        acc = None
        if pack:     # taps of one kernel row packed along K (K = 3*planes)
            for di in range(3):
                patch = jnp.concatenate(
                    [h1_scr[pl.ds(r + di * Wp + dj, SUB), :] for dj in range(3)],
                    axis=-1)
                d = jnp.dot(patch, w2_ref[di],
                            preferred_element_type=jnp.float32)
                acc = d if acc is None else acc + d
        else:
            # TODO(synk): packing taps along K for planes not a multiple of 128
            # needs sub-lane-tile concatenation; keep the 9-tap form there.
            for di in range(3):
                for dj in range(3):
                    patch = h1_scr[pl.ds(r + di * Wp + dj, SUB), :]
                    d = jnp.dot(patch, w2_ref[3 * di + dj],
                                preferred_element_type=jnp.float32)
                    acc = d if acc is None else acc + d
        h2 = jnp.maximum(acc + b2_ref[...], 0.0).astype(cdt)

        main = jnp.dot(h2, w3_ref[...],
                       preferred_element_type=jnp.float32) + b3_ref[...]

        x_res = xp_ref[pl.ds(Wp + 1 + q0 + r, SUB), :]
        if has_proj:
            sc = jnp.dot(x_res.astype(cdt), ws_ref[...],
                         preferred_element_type=jnp.float32) + bs_ref[...]
        else:
            sc = x_res.astype(jnp.float32)      # identity shortcut stays f32
        o_ref[pl.ds(r, SUB), :] = jnp.maximum(main + sc, 0.0).astype(o_ref.dtype)

    nsub = RB // SUB
    if nsub == 1:
        sub_tile(0)
    else:
        def body(j, carry):
            sub_tile(pl.multiple_of(j * SUB, SUB))
            return carry
        jax.lax.fori_loop(0, nsub, body, 0)


def bottleneck_block_fused(x_nhwc, p, *, has_proj, compute_dtype,
                           out_dtype=jnp.float32):
    """Whole Bottleneck block (stride=1) as a single pallas_call."""
    N, H, W, Cin = x_nhwc.shape
    planes = p["w1"].shape[0]
    Cout = p["w3"].shape[0]
    Hp, Wp = H + 2, W + 2
    HpWp = Hp * Wp
    nrows = (H - 1) * Wp + W            # flat output window (2 junk cols / row)
    cdt = compute_dtype

    # row tiling: grid tile RB (multiple of SUB); in-kernel sub-tile SUB sized
    # so the largest f32 live value (SUB x Cout) stays ~<= 128 KB.
    SUB = _row_tile(Cout)
    if nrows <= 512:
        SUB = min(SUB, _round_up(nrows, 8))
        RB = _round_up(nrows, SUB)
    else:
        RB = _round_up(512, SUB)
    T = _cdiv(nrows, RB)
    nrows_pad = T * RB
    S = nrows_pad + 2 * Wp + 2          # padded flat rows the kernel may touch
    S_t = RB + 2 * Wp + 2               # per-tile scratch rows (incl. halo)
    CH = _row_tile(planes, lo=64)       # conv1 chunk rows
    pack = (planes % 128 == 0)          # lane-tile aligned K-packing of taps

    # identity shortcut is read from the input slab -> keep it f32 so the
    # residual add keeps reference precision even with bf16 compute
    in_dtype = cdt if has_proj else jnp.float32

    # pad + flatten once in XLA (one layout pass over the activations)
    # TODO(synk): chained stride-1 blocks could carry this padded flat layout
    # between blocks and skip the pad/unflatten passes entirely.
    xp = jnp.pad(x_nhwc, ((0, 0), (1, 1), (1, 1), (0, 0)))
    xp = xp.reshape(N, HpWp, Cin)
    if S > HpWp:
        xp = jnp.pad(xp, ((0, 0), (0, S - HpWp), (0, 0)))
    xp = xp.astype(in_dtype)

    # fold BN scales into conv weights; only bias (+ReLU) stays in the kernel
    w1 = (p["w1"][:, :, 0, 0].T * p["s1"][None, :]).astype(cdt)          # (Cin,P)
    w2 = jnp.transpose(p["w2"], (2, 3, 1, 0))                            # di,dj,ci,co
    w2 = w2.reshape(3, 3 * planes, planes) if pack else w2.reshape(9, planes, planes)
    w2 = (w2 * p["s2"][None, None, :]).astype(cdt)
    w3 = (p["w3"][:, :, 0, 0].T * p["s3"][None, :]).astype(cdt)          # (P,4P)
    b1 = p["b1"].reshape(1, planes).astype(jnp.float32)
    b2 = p["b2"].reshape(1, planes).astype(jnp.float32)
    b3 = p["b3"].reshape(1, Cout).astype(jnp.float32)

    inputs = [xp, w1, b1, w2, b2, w3, b3]
    w2_block = (3, 3 * planes, planes) if pack else (9, planes, planes)
    in_specs = [
        pl.BlockSpec((None, S, Cin), lambda n, t: (n, 0, 0)),
        pl.BlockSpec((Cin, planes), lambda n, t: (0, 0)),
        pl.BlockSpec((1, planes), lambda n, t: (0, 0)),
        pl.BlockSpec(w2_block, lambda n, t: (0, 0, 0)),
        pl.BlockSpec((1, planes), lambda n, t: (0, 0)),
        pl.BlockSpec((planes, Cout), lambda n, t: (0, 0)),
        pl.BlockSpec((1, Cout), lambda n, t: (0, 0)),
    ]
    if has_proj:
        ws = (p["ws"][:, :, 0, 0].T * p["ss"][None, :]).astype(cdt)      # (Cin,4P)
        bs = p["bs"].reshape(1, Cout).astype(jnp.float32)
        inputs += [ws, bs]
        in_specs += [
            pl.BlockSpec((Cin, Cout), lambda n, t: (0, 0)),
            pl.BlockSpec((1, Cout), lambda n, t: (0, 0)),
        ]

    kernel = functools.partial(_fused_block_kernel, Hp=Hp, Wp=Wp, RB=RB,
                               SUB=SUB, CH=CH, pack=pack, has_proj=has_proj)

    flops = N * (2 * T * S_t * Cin * planes                 # conv1 (+ halo)
                 + 2 * 9 * nrows_pad * planes * planes      # conv2
                 + 2 * nrows_pad * planes * Cout            # conv3
                 + (2 * nrows_pad * Cin * Cout if has_proj else 0))
    wbytes = sum(int(a.size) * jnp.dtype(a.dtype).itemsize for a in inputs[1:])
    out_isz = jnp.dtype(out_dtype).itemsize
    bytes_accessed = (int(xp.size) * jnp.dtype(in_dtype).itemsize + wbytes
                      + N * nrows_pad * Cout * out_isz)
    work = (2 * S * Cin * jnp.dtype(in_dtype).itemsize      # input slab (dbl buf)
            + 2 * RB * Cout * out_isz                       # output tile
            + 2 * wbytes                                    # weights / biases
            + S_t * planes * jnp.dtype(cdt).itemsize)       # h1 scratch

    out = pl.pallas_call(
        kernel,
        out_shape=jax.ShapeDtypeStruct((N, nrows_pad, Cout), out_dtype),
        grid_spec=pltpu.PrefetchScalarGridSpec(
            num_scalar_prefetch=0,
            grid=(N, T),
            in_specs=in_specs,
            out_specs=pl.BlockSpec((None, RB, Cout), lambda n, t: (n, t, 0)),
            scratch_shapes=[pltpu.VMEM((S_t, planes), cdt)],
        ),
        compiler_params=pltpu.CompilerParams(
            dimension_semantics=("parallel", "parallel"),
            vmem_limit_bytes=_vmem_limit(work)),
        cost_estimate=pl.CostEstimate(flops=int(flops), transcendentals=0,
                                      bytes_accessed=int(bytes_accessed)),
    )(*inputs)

    # unflatten: output row q = oi*Wp + oj; drop the 2 junk pad columns per row
    target = H * Wp
    if nrows_pad >= target:
        out = out[:, :target, :]
    else:
        out = jnp.pad(out, ((0, 0), (0, target - nrows_pad), (0, 0)))
    out = out.reshape(N, H, Wp, Cout)[:, :, :W, :]
    return out


# ----------------------------------------------------------------------------
# Fallback kernels (stride > 1 downsample blocks)
# ----------------------------------------------------------------------------
def _matmul_bias_kernel(x_ref, w_ref, b_ref, o_ref, *, relu):
    y = jnp.dot(x_ref[...], w_ref[...], preferred_element_type=jnp.float32)
    y = y + b_ref[...]
    if relu:
        y = jnp.maximum(y, 0.0)
    o_ref[...] = y.astype(o_ref.dtype)


def _residual_out_kernel(h_ref, w3_ref, b3_ref, xs_ref, ws_ref, bs_ref, o_ref):
    main = jnp.dot(h_ref[...], w3_ref[...],
                   preferred_element_type=jnp.float32) + b3_ref[...]
    sc = jnp.dot(xs_ref[...], ws_ref[...],
                 preferred_element_type=jnp.float32) + bs_ref[...]
    o_ref[...] = jnp.maximum(main + sc, 0.0).astype(o_ref.dtype)


def matmul_bias(x, w, bias, *, relu, out_dtype):
    M, K = x.shape
    Cout = w.shape[1]
    TM = 512 if M >= 512 else _round_up(M, 8)
    Mp = _round_up(M, TM)
    if Mp != M:
        x = jnp.pad(x, ((0, Mp - M), (0, 0)))
    b = bias.reshape(1, Cout).astype(jnp.float32)
    isz = jnp.dtype(x.dtype).itemsize
    work = 2 * TM * (K + Cout) * 4 + 2 * (K * Cout * isz + Cout * 4)
    out = pl.pallas_call(
        functools.partial(_matmul_bias_kernel, relu=relu),
        out_shape=jax.ShapeDtypeStruct((Mp, Cout), out_dtype),
        grid_spec=pltpu.PrefetchScalarGridSpec(
            num_scalar_prefetch=0,
            grid=(Mp // TM,),
            in_specs=[
                pl.BlockSpec((TM, K), lambda i: (i, 0)),
                pl.BlockSpec((K, Cout), lambda i: (0, 0)),
                pl.BlockSpec((1, Cout), lambda i: (0, 0)),
            ],
            out_specs=pl.BlockSpec((TM, Cout), lambda i: (i, 0)),
        ),
        compiler_params=pltpu.CompilerParams(
            dimension_semantics=("parallel",),
            vmem_limit_bytes=_vmem_limit(work)),
        cost_estimate=pl.CostEstimate(
            flops=int(2 * Mp * K * Cout), transcendentals=0,
            bytes_accessed=int(Mp * K * isz + K * Cout * isz + Cout * 4
                               + Mp * Cout * jnp.dtype(out_dtype).itemsize)),
    )(x, w, b)
    return out[:M] if Mp != M else out


def residual_out(h, w3, b3, x_sc, ws, bs):
    M, P = h.shape
    Cin = x_sc.shape[1]
    Cout = w3.shape[1]
    TM = 512 if M >= 512 else _round_up(M, 8)
    Mp = _round_up(M, TM)
    if Mp != M:
        h = jnp.pad(h, ((0, Mp - M), (0, 0)))
        x_sc = jnp.pad(x_sc, ((0, Mp - M), (0, 0)))
    isz = jnp.dtype(h.dtype).itemsize
    work = 2 * TM * (P + Cin + Cout) * 4 + 2 * (P + Cin) * Cout * isz
    out = pl.pallas_call(
        _residual_out_kernel,
        out_shape=jax.ShapeDtypeStruct((Mp, Cout), jnp.float32),
        grid_spec=pltpu.PrefetchScalarGridSpec(
            num_scalar_prefetch=0,
            grid=(Mp // TM,),
            in_specs=[
                pl.BlockSpec((TM, P), lambda i: (i, 0)),
                pl.BlockSpec((P, Cout), lambda i: (0, 0)),
                pl.BlockSpec((1, Cout), lambda i: (0, 0)),
                pl.BlockSpec((TM, Cin), lambda i: (i, 0)),
                pl.BlockSpec((Cin, Cout), lambda i: (0, 0)),
                pl.BlockSpec((1, Cout), lambda i: (0, 0)),
            ],
            out_specs=pl.BlockSpec((TM, Cout), lambda i: (i, 0)),
        ),
        compiler_params=pltpu.CompilerParams(
            dimension_semantics=("parallel",),
            vmem_limit_bytes=_vmem_limit(work)),
        cost_estimate=pl.CostEstimate(
            flops=int(2 * Mp * (P + Cin) * Cout), transcendentals=0,
            bytes_accessed=int(Mp * (P + Cin) * isz + (P + Cin) * Cout * isz
                               + 2 * Cout * 4 + Mp * Cout * 4)),
    )(h, w3, b3.reshape(1, Cout).astype(jnp.float32),
      x_sc, ws, bs.reshape(1, Cout).astype(jnp.float32))
    return out[:M] if Mp != M else out


def im2col_3x3(x, stride):
    """x: (N, H, W, C), padding=1. Returns (N*Ho*Wo, 9*C), Ho, Wo."""
    N, H, W, C = x.shape
    xp = jnp.pad(x, ((0, 0), (1, 1), (1, 1), (0, 0)))
    Ho = (H + 2 - 3) // stride + 1
    Wo = (W + 2 - 3) // stride + 1
    cols = []
    for di in range(3):
        for dj in range(3):
            cols.append(xp[:, di:di + Ho * stride:stride,
                           dj:dj + Wo * stride:stride, :])
    patches = jnp.concatenate(cols, axis=-1)
    return patches.reshape(N * Ho * Wo, 9 * C), Ho, Wo


# ----------------------------------------------------------------------------
# Parameter construction (deterministic, synthetic running stats)
# ----------------------------------------------------------------------------
def fold_bn(gamma, beta, mean, var, eps=1e-5):
    scale = gamma / jnp.sqrt(var + eps)
    bias = beta - mean * scale
    return scale, bias


def init_bottleneck_params(key, in_planes, planes, stride, expansion=4):
    ks = list(jax.random.split(key, 8))
    out_planes = expansion * planes

    def conv_w(k, cin, cout, kh=1, kw=1):
        fan_in = cin * kh * kw
        return jax.random.normal(k, (cout, cin, kh, kw), jnp.float32) / jnp.sqrt(fan_in)

    def bn_params(k, c):
        k1, k2, k3, k4 = jax.random.split(k, 4)
        gamma = 1.0 + 0.1 * jax.random.normal(k1, (c,), jnp.float32)
        beta = 0.1 * jax.random.normal(k2, (c,), jnp.float32)
        mean = 0.1 * jax.random.normal(k3, (c,), jnp.float32)
        var = 1.0 + 0.1 * jax.random.uniform(k4, (c,), jnp.float32)
        return fold_bn(gamma, beta, mean, var)

    p = {}
    p["w1"] = conv_w(ks[0], in_planes, planes)                   # 1x1
    p["s1"], p["b1"] = bn_params(ks[1], planes)
    p["w2"] = conv_w(ks[2], planes, planes, 3, 3)                # 3x3
    p["s2"], p["b2"] = bn_params(ks[3], planes)
    p["w3"] = conv_w(ks[4], planes, out_planes)                  # 1x1
    p["s3"], p["b3"] = bn_params(ks[5], out_planes)
    if (stride != 1) or (in_planes != out_planes):
        p["ws"] = conv_w(ks[6], in_planes, out_planes)           # 1x1 projection
        p["ss"], p["bs"] = bn_params(ks[7], out_planes)
    return p


# ----------------------------------------------------------------------------
# Bottleneck forward (NCHW in, NCHW out)
# ----------------------------------------------------------------------------
def bottleneck_forward(x_nchw, p, stride, compute_dtype=jnp.float32):
    N, Cin, H, W = x_nchw.shape
    x = jnp.transpose(x_nchw, (0, 2, 3, 1))                      # NHWC
    planes = p["w1"].shape[0]
    out_planes = p["w3"].shape[0]
    has_proj = "ws" in p
    cdt = compute_dtype

    if stride == 1:
        out = bottleneck_block_fused(x, p, has_proj=has_proj, compute_dtype=cdt)
        return jnp.transpose(out, (0, 3, 1, 2))

    # TODO(synk): the strided (downsample) path still materializes im2col
    # patches in XLA; fuse it like the stride==1 path with strided taps.
    w1f = (p["w1"][:, :, 0, 0].T * p["s1"][None, :]).astype(cdt)
    h1 = matmul_bias(x.reshape(N * H * W, Cin).astype(cdt), w1f, p["b1"],
                     relu=True, out_dtype=cdt)
    h1 = h1.reshape(N, H, W, planes)

    patches, Ho, Wo = im2col_3x3(h1, stride)
    w2f = (jnp.transpose(p["w2"], (2, 3, 1, 0)).reshape(9 * planes, planes)
           * p["s2"][None, :]).astype(cdt)
    h2 = matmul_bias(patches, w2f, p["b2"], relu=True, out_dtype=cdt)

    w3f = (p["w3"][:, :, 0, 0].T * p["s3"][None, :]).astype(cdt)
    wsf = (p["ws"][:, :, 0, 0].T * p["ss"][None, :]).astype(cdt)
    x_sc = x[:, ::stride, ::stride, :].reshape(N * Ho * Wo, Cin).astype(cdt)
    out = residual_out(h2, w3f, p["b3"], x_sc, wsf, p["bs"])
    out = out.reshape(N, Ho, Wo, out_planes)
    return jnp.transpose(out, (0, 3, 1, 2))


# ----------------------------------------------------------------------------
# Pure-JAX reference (eval-mode BatchNorm)
# ----------------------------------------------------------------------------
def bottleneck_ref(x_nchw, p, stride):
    def conv(x, w, s):
        return jax.lax.conv_general_dilated(
            x, w, window_strides=(s, s),
            padding=[(w.shape[2] // 2,) * 2, (w.shape[3] // 2,) * 2],
            dimension_numbers=("NCHW", "OIHW", "NCHW"))

    def bn(x, scale, bias):
        return x * scale[None, :, None, None] + bias[None, :, None, None]

    h = jax.nn.relu(bn(conv(x_nchw, p["w1"], 1), p["s1"], p["b1"]))
    h = jax.nn.relu(bn(conv(h, p["w2"], stride), p["s2"], p["b2"]))
    h = bn(conv(h, p["w3"], 1), p["s3"], p["b3"])
    if "ws" in p:
        sc = bn(conv(x_nchw, p["ws"], stride), p["ss"], p["bs"])
    else:
        sc = x_nchw
    return jax.nn.relu(h + sc)


# ----------------------------------------------------------------------------
if __name__ == "__main__":
    key = jax.random.PRNGKey(0)
    N = 2

    # (name, in_planes, planes, stride, H, W, compute_dtype, atol, rtol)
    configs = [
        ("proj_f32",         4,   4, 1, 16, 16, jnp.float32,  2e-3, 2e-3),
        ("identity_f32",    16,   4, 1, 16, 16, jnp.float32,  2e-3, 2e-3),
        ("proj_bf16",        4,   4, 1, 16, 16, jnp.bfloat16, 1e-1, 5e-2),
        ("identity_bf16",   16,   4, 1, 16, 16, jnp.bfloat16, 1e-1, 5e-2),
        ("packK_proj_f32", 128, 128, 1,  8,  8, jnp.float32,  5e-3, 5e-3),
        ("downsample_f32",   4,   4, 2, 16, 16, jnp.float32,  2e-3, 2e-3),
    ]

    for idx, (name, cin, planes, stride, H, W, cdt, atol, rtol) in enumerate(configs):
        k_x, k_p = jax.random.split(jax.random.fold_in(key, idx))
        x = jax.random.normal(k_x, (N, cin, H, W), jnp.float32)
        params = init_bottleneck_params(k_p, cin, planes, stride)

        out = jax.block_until_ready(
            bottleneck_forward(x, params, stride, compute_dtype=cdt))
        ref = jax.block_until_ready(bottleneck_ref(x, params, stride))

        Ho = (H + 2 - 3) // stride + 1
        Wo = (W + 2 - 3) // stride + 1
        assert out.shape == ref.shape == (N, 4 * planes, Ho, Wo), name
        err = float(jnp.max(jnp.abs(out - ref)))
        assert jnp.allclose(out, ref, atol=atol, rtol=rtol), \
            f"{name}: mismatch, max|diff|={err}"

    print("KERNEL_OK")
</pallas_src>

<mosaic_0001>
module attributes {stable_mosaic.version = 11 : i64} {
  func.func @_fused_block_kernel(%arg0: i32, %arg1: i32, %arg2: memref<1x326x4xf32, #tpu.memory_space<vmem>>, %arg3: memref<4x4xf32, #tpu.memory_space<vmem>>, %arg4: memref<1x4xf32, #tpu.memory_space<vmem>>, %arg5: memref<9x4x4xf32, #tpu.memory_space<vmem>>, %arg6: memref<1x4xf32, #tpu.memory_space<vmem>>, %arg7: memref<4x16xf32, #tpu.memory_space<vmem>>, %arg8: memref<1x16xf32, #tpu.memory_space<vmem>>, %arg9: memref<4x16xf32, #tpu.memory_space<vmem>>, %arg10: memref<1x16xf32, #tpu.memory_space<vmem>>, %arg11: memref<1x288x16xf32, #tpu.memory_space<vmem>>, %arg12: memref<326x4xf32, #tpu.memory_space<vmem>>) attributes {dimension_semantics = [#tpu.dimension_semantics<parallel>, #tpu.dimension_semantics<parallel>], iteration_bounds = array<i64: 2, 1>, scalar_prefetch = 0 : i64, scratch_operands = 1 : i64, tpu.core_type = #tpu.core_type<tc>, window_params = [{transform_indices = @transform_0, window_bounds = array<i64: 1, 326, 4>}, {pipeline_mode = #tpu.pipeline_mode<synchronous>, transform_indices = @transform_1, window_bounds = array<i64: 4, 4>}, {pipeline_mode = #tpu.pipeline_mode<synchronous>, transform_indices = @transform_2, window_bounds = array<i64: 1, 4>}, {pipeline_mode = #tpu.pipeline_mode<synchronous>, transform_indices = @transform_3, window_bounds = array<i64: 9, 4, 4>}, {pipeline_mode = #tpu.pipeline_mode<synchronous>, transform_indices = @transform_4, window_bounds = array<i64: 1, 4>}, {pipeline_mode = #tpu.pipeline_mode<synchronous>, transform_indices = @transform_5, window_bounds = array<i64: 4, 16>}, {pipeline_mode = #tpu.pipeline_mode<synchronous>, transform_indices = @transform_6, window_bounds = array<i64: 1, 16>}, {pipeline_mode = #tpu.pipeline_mode<synchronous>, transform_indices = @transform_7, window_bounds = array<i64: 4, 16>}, {pipeline_mode = #tpu.pipeline_mode<synchronous>, transform_indices = @transform_8, window_bounds = array<i64: 1, 16>}, {transform_indices = @transform_9, window_bounds = array<i64: 1, 288, 16>}]} {
    %c288_i32 = arith.constant 288 : i32
    %0 = arith.muli %arg1, %c288_i32 : i32
    %c0 = arith.constant 0 : index
    %c0_0 = arith.constant 0 : index
    %1 = vector.load %arg3[%c0, %c0_0] : memref<4x4xf32, #tpu.memory_space<vmem>>, vector<4x4xf32>
    %c0_1 = arith.constant 0 : index
    %c0_2 = arith.constant 0 : index
    %2 = vector.load %arg4[%c0_1, %c0_2] : memref<1x4xf32, #tpu.memory_space<vmem>>, vector<1x4xf32>
    %c0_i32 = arith.constant 0 : i32
    %3 = arith.addi %0, %c0_i32 : i32
    %c0_3 = arith.constant 0 : index
    %4 = arith.index_cast %3 : i32 to index
    %c0_4 = arith.constant 0 : index
    %5 = vector.load %arg2[%c0_3, %4, %c0_4] : memref<1x326x4xf32, #tpu.memory_space<vmem>>, vector<1x326x4xf32>
    %6 = vector.shape_cast %5 : vector<1x326x4xf32> to vector<326x4xf32>
    %cst = arith.constant dense<0.000000e+00> : vector<326x4xf32>
    %7 = tpu.matmul %6, %1, %cst {dimension_numbers = #tpu.dot_dimension_numbers<[1], [0], [0], [1], [0, 0, 1, 1], [], []>} : vector<326x4xf32>, vector<4x4xf32>, vector<326x4xf32> -> vector<326x4xf32>
    %8 = vector.broadcast %2 : vector<1x4xf32> to vector<326x4xf32>
    %9 = arith.addf %7, %8 : vector<326x4xf32>
    %cst_5 = arith.constant 0.000000e+00 : f32
    %10 = vector.broadcast %cst_5 : f32 to vector<326x4xf32>
    %11 = arith.maximumf %9, %10 : vector<326x4xf32>
    %12 = tpu.iota {dimensions = array<i32: 0>} : vector<326x1xi32>
    %13 = vector.broadcast %3 : i32 to vector<326x1xi32>
    %14 = arith.addi %12, %13 : vector<326x1xi32>
    %15 = arith.sitofp %14 : vector<326x1xi32> to vector<326x1xf32>
    %cst_6 = arith.constant 0.055555556 : f32
    %16 = vector.broadcast %cst_6 : f32 to vector<326x1xf32>
    %17 = arith.mulf %15, %16 : vector<326x1xf32>
    %18 = math.floor %17 : vector<326x1xf32>
    %cst_7 = arith.constant 1.800000e+01 : f32
    %19 = vector.broadcast %cst_7 : f32 to vector<326x1xf32>
    %20 = arith.mulf %19, %18 : vector<326x1xf32>
    %21 = arith.subf %15, %20 : vector<326x1xf32>
    %cst_8 = arith.constant 1.800000e+01 : f32
    %22 = vector.broadcast %cst_8 : f32 to vector<326x1xf32>
    %23 = arith.cmpf oge, %15, %22 : vector<326x1xf32>
    %cst_9 = arith.constant 3.060000e+02 : f32
    %24 = vector.broadcast %cst_9 : f32 to vector<326x1xf32>
    %25 = arith.cmpf olt, %15, %24 : vector<326x1xf32>
    %26 = arith.andi %23, %25 : vector<326x1xi1>
    %cst_10 = arith.constant 5.000000e-01 : f32
    %27 = vector.broadcast %cst_10 : f32 to vector<326x1xf32>
    %28 = arith.cmpf ogt, %21, %27 : vector<326x1xf32>
    %29 = arith.andi %26, %28 : vector<326x1xi1>
    %cst_11 = arith.constant 1.650000e+01 : f32
    %30 = vector.broadcast %cst_11 : f32 to vector<326x1xf32>
    %31 = arith.cmpf olt, %21, %30 : vector<326x1xf32>
    %32 = arith.andi %29, %31 : vector<326x1xi1>
    %cst_12 = arith.constant 0.000000e+00 : f32
    %33 = vector.shape_cast %32 : vector<326x1xi1> to vector<326x1xi1>
    %34 = vector.broadcast %33 : vector<326x1xi1> to vector<326x4xi1>
    %35 = vector.broadcast %cst_12 : f32 to vector<326x4xf32>
    %36 = arith.select %34, %11, %35 : vector<326x4xi1>, vector<326x4xf32>
    %c0_13 = arith.constant 0 : index
    %c0_14 = arith.constant 0 : index
    %37 = vector.load %arg12[%c0_13, %c0_14] : memref<326x4xf32, #tpu.memory_space<vmem>>, vector<326x4xf32>
    tpu.vector_store %arg12[%c0_13, %c0_14], %36 {strides = array<i32>} : memref<326x4xf32, #tpu.memory_space<vmem>>, vector<326x4xf32>,
    %c0_15 = arith.constant 0 : index
    %c0_16 = arith.constant 0 : index
    %38 = vector.load %arg12[%c0_15, %c0_16] : memref<326x4xf32, #tpu.memory_space<vmem>>, vector<288x4xf32>
    %c0_17 = arith.constant 0 : index
    %c0_18 = arith.constant 0 : index
    %c0_19 = arith.constant 0 : index
    %39 = vector.load %arg5[%c0_17, %c0_18, %c0_19] : memref<9x4x4xf32, #tpu.memory_space<vmem>>, vector<1x4x4xf32>
    %40 = vector.shape_cast %39 : vector<1x4x4xf32> to vector<4x4xf32>
    %cst_20 = arith.constant dense<0.000000e+00> : vector<288x4xf32>
    %41 = tpu.matmul %38, %40, %cst_20 {dimension_numbers = #tpu.dot_dimension_numbers<[1], [0], [0], [1], [0, 0, 1, 1], [], []>} : vector<288x4xf32>, vector<4x4xf32>, vector<288x4xf32> -> vector<288x4xf32>
    %c1 = arith.constant 1 : index
    %c0_21 = arith.constant 0 : index
    %42 = vector.load %arg12[%c1, %c0_21] : memref<326x4xf32, #tpu.memory_space<vmem>>, vector<288x4xf32>
    %c1_22 = arith.constant 1 : index
    %c0_23 = arith.constant 0 : index
    %c0_24 = arith.constant 0 : index
    %43 = vector.load %arg5[%c1_22, %c0_23, %c0_24] : memref<9x4x4xf32, #tpu.memory_space<vmem>>, vector<1x4x4xf32>
    %44 = vector.shape_cast %43 : vector<1x4x4xf32> to vector<4x4xf32>
    %cst_25 = arith.constant dense<0.000000e+00> : vector<288x4xf32>
    %45 = tpu.matmul %42, %44, %cst_25 {dimension_numbers = #tpu.dot_dimension_numbers<[1], [0], [0], [1], [0, 0, 1, 1], [], []>} : vector<288x4xf32>, vector<4x4xf32>, vector<288x4xf32> -> vector<288x4xf32>
    %46 = arith.addf %41, %45 : vector<288x4xf32>
    %c2 = arith.constant 2 : index
    %c0_26 = arith.constant 0 : index
    %47 = vector.load %arg12[%c2, %c0_26] : memref<326x4xf32, #tpu.memory_space<vmem>>, vector<288x4xf32>
    %c2_27 = arith.constant 2 : index
    %c0_28 = arith.constant 0 : index
    %c0_29 = arith.constant 0 : index
    %48 = vector.load %arg5[%c2_27, %c0_28, %c0_29] : memref<9x4x4xf32, #tpu.memory_space<vmem>>, vector<1x4x4xf32>
    %49 = vector.shape_cast %48 : vector<1x4x4xf32> to vector<4x4xf32>
    %cst_30 = arith.constant dense<0.000000e+00> : vector<288x4xf32>
    %50 = tpu.matmul %47, %49, %cst_30 {dimension_numbers = #tpu.dot_dimension_numbers<[1], [0], [0], [1], [0, 0, 1, 1], [], []>} : vector<288x4xf32>, vector<4x4xf32>, vector<288x4xf32> -> vector<288x4xf32>
    %51 = arith.addf %46, %50 : vector<288x4xf32>
    %c18 = arith.constant 18 : index
    %c0_31 = arith.constant 0 : index
    %52 = vector.load %arg12[%c18, %c0_31] : memref<326x4xf32, #tpu.memory_space<vmem>>, vector<288x4xf32>
    %c3 = arith.constant 3 : index
    %c0_32 = arith.constant 0 : index
    %c0_33 = arith.constant 0 : index
    %53 = vector.load %arg5[%c3, %c0_32, %c0_33] : memref<9x4x4xf32, #tpu.memory_space<vmem>>, vector<1x4x4xf32>
    %54 = vector.shape_cast %53 : vector<1x4x4xf32> to vector<4x4xf32>
    %cst_34 = arith.constant dense<0.000000e+00> : vector<288x4xf32>
    %55 = tpu.matmul %52, %54, %cst_34 {dimension_numbers = #tpu.dot_dimension_numbers<[1], [0], [0], [1], [0, 0, 1, 1], [], []>} : vector<288x4xf32>, vector<4x4xf32>, vector<288x4xf32> -> vector<288x4xf32>
    %56 = arith.addf %51, %55 : vector<288x4xf32>
    %c19 = arith.constant 19 : index
    %c0_35 = arith.constant 0 : index
    %57 = vector.load %arg12[%c19, %c0_35] : memref<326x4xf32, #tpu.memory_space<vmem>>, vector<288x4xf32>
    %c4 = arith.constant 4 : index
    %c0_36 = arith.constant 0 : index
    %c0_37 = arith.constant 0 : index
    %58 = vector.load %arg5[%c4, %c0_36, %c0_37] : memref<9x4x4xf32, #tpu.memory_space<vmem>>, vector<1x4x4xf32>
    %59 = vector.shape_cast %58 : vector<1x4x4xf32> to vector<4x4xf32>
    %cst_38 = arith.constant dense<0.000000e+00> : vector<288x4xf32>
    %60 = tpu.matmul %57, %59, %cst_38 {dimension_numbers = #tpu.dot_dimension_numbers<[1], [0], [0], [1], [0, 0, 1, 1], [], []>} : vector<288x4xf32>, vector<4x4xf32>, vector<288x4xf32> -> vector<288x4xf32>
    %61 = arith.addf %56, %60 : vector<288x4xf32>
    %c20 = arith.constant 20 : index
    %c0_39 = arith.constant 0 : index
    %62 = vector.load %arg12[%c20, %c0_39] : memref<326x4xf32, #tpu.memory_space<vmem>>, vector<288x4xf32>
    %c5 = arith.constant 5 : index
    %c0_40 = arith.constant 0 : index
    %c0_41 = arith.constant 0 : index
    %63 = vector.load %arg5[%c5, %c0_40, %c0_41] : memref<9x4x4xf32, #tpu.memory_space<vmem>>, vector<1x4x4xf32>
    %64 = vector.shape_cast %63 : vector<1x4x4xf32> to vector<4x4xf32>
    %cst_42 = arith.constant dense<0.000000e+00> : vector<288x4xf32>
    %65 = tpu.matmul %62, %64, %cst_42 {dimension_numbers = #tpu.dot_dimension_numbers<[1], [0], [0], [1], [0, 0, 1, 1], [], []>} : vector<288x4xf32>, vector<4x4xf32>, vector<288x4xf32> -> vector<288x4xf32>
    %66 = arith.addf %61, %65 : vector<288x4xf32>
    %c36 = arith.constant 36 : index
    %c0_43 = arith.constant 0 : index
    %67 = vector.load %arg12[%c36, %c0_43] : memref<326x4xf32, #tpu.memory_space<vmem>>, vector<288x4xf32>
    %c6 = arith.constant 6 : index
    %c0_44 = arith.constant 0 : index
    %c0_45 = arith.constant 0 : index
    %68 = vector.load %arg5[%c6, %c0_44, %c0_45] : memref<9x4x4xf32, #tpu.memory_space<vmem>>, vector<1x4x4xf32>
    %69 = vector.shape_cast %68 : vector<1x4x4xf32> to vector<4x4xf32>
    %cst_46 = arith.constant dense<0.000000e+00> : vector<288x4xf32>
    %70 = tpu.matmul %67, %69, %cst_46 {dimension_numbers = #tpu.dot_dimension_numbers<[1], [0], [0], [1], [0, 0, 1, 1], [], []>} : vector<288x4xf32>, vector<4x4xf32>, vector<288x4xf32> -> vector<288x4xf32>
    %71 = arith.addf %66, %70 : vector<288x4xf32>
    %c37 = arith.constant 37 : index
    %c0_47 = arith.constant 0 : index
    %72 = vector.load %arg12[%c37, %c0_47] : memref<326x4xf32, #tpu.memory_space<vmem>>, vector<288x4xf32>
    %c7 = arith.constant 7 : index
    %c0_48 = arith.constant 0 : index
    %c0_49 = arith.constant 0 : index
    %73 = vector.load %arg5[%c7, %c0_48, %c0_49] : memref<9x4x4xf32, #tpu.memory_space<vmem>>, vector<1x4x4xf32>
    %74 = vector.shape_cast %73 : vector<1x4x4xf32> to vector<4x4xf32>
    %cst_50 = arith.constant dense<0.000000e+00> : vector<288x4xf32>
    %75 = tpu.matmul %72, %74, %cst_50 {dimension_numbers = #tpu.dot_dimension_numbers<[1], [0], [0], [1], [0, 0, 1, 1], [], []>} : vector<288x4xf32>, vector<4x4xf32>, vector<288x4xf32> -> vector<288x4xf32>
    %76 = arith.addf %71, %75 : vector<288x4xf32>
    %c38 = arith.constant 38 : index
    %c0_51 = arith.constant 0 : index
    %77 = vector.load %arg12[%c38, %c0_51] : memref<326x4xf32, #tpu.memory_space<vmem>>, vector<288x4xf32>
    %c8 = arith.constant 8 : index
    %c0_52 = arith.constant 0 : index
    %c0_53 = arith.constant 0 : index
    %78 = vector.load %arg5[%c8, %c0_52, %c0_53] : memref<9x4x4xf32, #tpu.memory_space<vmem>>, vector<1x4x4xf32>
    %79 = vector.shape_cast %78 : vector<1x4x4xf32> to vector<4x4xf32>
    %cst_54 = arith.constant dense<0.000000e+00> : vector<288x4xf32>
    %80 = tpu.matmul %77, %79, %cst_54 {dimension_numbers = #tpu.dot_dimension_numbers<[1], [0], [0], [1], [0, 0, 1, 1], [], []>} : vector<288x4xf32>, vector<4x4xf32>, vector<288x4xf32> -> vector<288x4xf32>
    %81 = arith.addf %76, %80 : vector<288x4xf32>
    %c0_55 = arith.constant 0 : index
    %c0_56 = arith.constant 0 : index
    %82 = vector.load %arg6[%c0_55, %c0_56] : memref<1x4xf32, #tpu.memory_space<vmem>>, vector<1x4xf32>
    %83 = vector.broadcast %82 : vector<1x4xf32> to vector<288x4xf32>
    %84 = arith.addf %81, %83 : vector<288x4xf32>
    %cst_57 = arith.constant 0.000000e+00 : f32
    %85 = vector.broadcast %cst_57 : f32 to vector<288x4xf32>
    %86 = arith.maximumf %84, %85 : vector<288x4xf32>
    %c0_58 = arith.constant 0 : index
    %c0_59 = arith.constant 0 : index
    %87 = vector.load %arg7[%c0_58, %c0_59] : memref<4x16xf32, #tpu.memory_space<vmem>>, vector<4x16xf32>
    %cst_60 = arith.constant dense<0.000000e+00> : vector<288x16xf32>
    %88 = tpu.matmul %86, %87, %cst_60 {dimension_numbers = #tpu.dot_dimension_numbers<[1], [0], [0], [1], [0, 0, 1, 1], [], []>} : vector<288x4xf32>, vector<4x16xf32>, vector<288x16xf32> -> vector<288x16xf32>
    %c0_61 = arith.constant 0 : index
    %c0_62 = arith.constant 0 : index
    %89 = vector.load %arg8[%c0_61, %c0_62] : memref<1x16xf32, #tpu.memory_space<vmem>>, vector<1x16xf32>
    %90 = vector.broadcast %89 : vector<1x16xf32> to vector<288x16xf32>
    %91 = arith.addf %88, %90 : vector<288x16xf32>
    %c19_i32 = arith.constant 19 : i32
    %92 = arith.addi %c19_i32, %0 : i32
    %c0_i32_63 = arith.constant 0 : i32
    %93 = arith.addi %92, %c0_i32_63 : i32
    %c0_64 = arith.constant 0 : index
    %94 = arith.index_cast %93 : i32 to index
    %c0_65 = arith.constant 0 : index
    %95 = vector.load %arg2[%c0_64, %94, %c0_65] : memref<1x326x4xf32, #tpu.memory_space<vmem>>, vector<1x288x4xf32>
    %96 = vector.shape_cast %95 : vector<1x288x4xf32> to vector<288x4xf32>
    %c0_66 = arith.constant 0 : index
    %c0_67 = arith.constant 0 : index
    %97 = vector.load %arg9[%c0_66, %c0_67] : memref<4x16xf32, #tpu.memory_space<vmem>>, vector<4x16xf32>
    %cst_68 = arith.constant dense<0.000000e+00> : vector<288x16xf32>
    %98 = tpu.matmul %96, %97, %cst_68 {dimension_numbers = #tpu.dot_dimension_numbers<[1], [0], [0], [1], [0, 0, 1, 1], [], []>} : vector<288x4xf32>, vector<4x16xf32>, vector<288x16xf32> -> vector<288x16xf32>
    %c0_69 = arith.constant 0 : index
    %c0_70 = arith.constant 0 : index
    %99 = vector.load %arg10[%c0_69, %c0_70] : memref<1x16xf32, #tpu.memory_space<vmem>>, vector<1x16xf32>
    %100 = vector.broadcast %99 : vector<1x16xf32> to vector<288x16xf32>
    %101 = arith.addf %98, %100 : vector<288x16xf32>
    %102 = arith.addf %91, %101 : vector<288x16xf32>
    %cst_71 = arith.constant 0.000000e+00 : f32
    %103 = vector.broadcast %cst_71 : f32 to vector<288x16xf32>
    %104 = arith.maximumf %102, %103 : vector<288x16xf32>
    %c0_72 = arith.constant 0 : index
    %c0_73 = arith.constant 0 : index
    %c0_74 = arith.constant 0 : index
    %105 = vector.load %arg11[%c0_72, %c0_73, %c0_74] : memref<1x288x16xf32, #tpu.memory_space<vmem>>, vector<1x288x16xf32>
    %106 = vector.shape_cast %105 : vector<1x288x16xf32> to vector<288x16xf32>
    %107 = vector.shape_cast %104 : vector<288x16xf32> to vector<1x288x16xf32>
    tpu.vector_store %arg11[%c0_72, %c0_73, %c0_74], %107 {strides = array<i32>} : memref<1x288x16xf32, #tpu.memory_space<vmem>>, vector<1x288x16xf32>,
    return
  }
  func.func @transform_0(%arg0: i32, %arg1: i32) -> (i32, i32, i32) {
    %c0_i32 = arith.constant 0 : i32
    %c0_i32_0 = arith.constant 0 : i32
    %c0_i32_1 = arith.constant 0 : i32
    return %arg0, %c0_i32, %c0_i32_0 : i32, i32, i32
  }
  func.func @transform_1(%arg0: i32, %arg1: i32) -> (i32, i32) {
    %c0_i32 = arith.constant 0 : i32
    %c0_i32_0 = arith.constant 0 : i32
    %c0_i32_1 = arith.constant 0 : i32
    return %c0_i32, %c0_i32_0 : i32, i32
  }
  func.func @transform_2(%arg0: i32, %arg1: i32) -> (i32, i32) {
    %c0_i32 = arith.constant 0 : i32
    %c0_i32_0 = arith.constant 0 : i32
    %c0_i32_1 = arith.constant 0 : i32
    return %c0_i32, %c0_i32_0 : i32, i32
  }
  func.func @transform_3(%arg0: i32, %arg1: i32) -> (i32, i32, i32) {
    %c0_i32 = arith.constant 0 : i32
    %c0_i32_0 = arith.constant 0 : i32
    %c0_i32_1 = arith.constant 0 : i32
    %c0_i32_2 = arith.constant 0 : i32
    return %c0_i32, %c0_i32_0, %c0_i32_1 : i32, i32, i32
  }
  func.func @transform_4(%arg0: i32, %arg1: i32) -> (i32, i32) {
    %c0_i32 = arith.constant 0 : i32
    %c0_i32_0 = arith.constant 0 : i32
    %c0_i32_1 = arith.constant 0 : i32
    return %c0_i32, %c0_i32_0 : i32, i32
  }
  func.func @transform_5(%arg0: i32, %arg1: i32) -> (i32, i32) {
    %c0_i32 = arith.constant 0 : i32
    %c0_i32_0 = arith.constant 0 : i32
    %c0_i32_1 = arith.constant 0 : i32
    return %c0_i32, %c0_i32_0 : i32, i32
  }
  func.func @transform_6(%arg0: i32, %arg1: i32) -> (i32, i32) {
    %c0_i32 = arith.constant 0 : i32
    %c0_i32_0 = arith.constant 0 : i32
    %c0_i32_1 = arith.constant 0 : i32
    return %c0_i32, %c0_i32_0 : i32, i32
  }
  func.func @transform_7(%arg0: i32, %arg1: i32) -> (i32, i32) {
    %c0_i32 = arith.constant 0 : i32
    %c0_i32_0 = arith.constant 0 : i32
    %c0_i32_1 = arith.constant 0 : i32
    return %c0_i32, %c0_i32_0 : i32, i32
  }
  func.func @transform_8(%arg0: i32, %arg1: i32) -> (i32, i32) {
    %c0_i32 = arith.constant 0 : i32
    %c0_i32_0 = arith.constant 0 : i32
    %c0_i32_1 = arith.constant 0 : i32
    return %c0_i32, %c0_i32_0 : i32, i32
  }
  func.func @transform_9(%arg0: i32, %arg1: i32) -> (i32, i32, i32) {
    %c0_i32 = arith.constant 0 : i32
    %c0_i32_0 = arith.constant 0 : i32
    return %arg0, %arg1, %c0_i32 : i32, i32, i32
  }
}

</mosaic_0001>

<llo_original>
// kernel: tpu_custom_call.1
$region0: #{tpu_custom_call.1}
  #allocation0 [shape = 'u32[]', space=smem, size = 0x4, offset = 0x4, fixed_abs, tag = 'smem constant byte address 0x4 - core index']
  #allocation1 [shape = 'u32[72,128]{1,0:T(1,128)}', space=vmem, size = 0x9000, scoped, tag = 'internal scratch']
  #allocation2 [shape = 'f32[326,4]{1,0:T(8,128)}', space=vmem, size = 0x29000, scoped, tag = 'scratch operand']
  %s0 = inlined_call_operand.vmem [shape: f32[2,326,4], index: 0, kind: input, shape index: {}]
  %s1 = inlined_call_operand.vmem [shape: f32[4,4], index: 1, kind: input, shape index: {}]
  %s2 = inlined_call_operand.vmem [shape: f32[1,4], index: 2, kind: input, shape index: {}]
  %s3 = inlined_call_operand.vmem [shape: f32[9,4,4], index: 3, kind: input, shape index: {}]
  %s4 = inlined_call_operand.vmem [shape: f32[1,4], index: 4, kind: input, shape index: {}]
  %s5 = inlined_call_operand.vmem [shape: f32[4,16], index: 5, kind: input, shape index: {}]
  %s6 = inlined_call_operand.vmem [shape: f32[1,16], index: 6, kind: input, shape index: {}]
  %s7 = inlined_call_operand.vmem [shape: f32[4,16], index: 7, kind: input, shape index: {}]
  %s8 = inlined_call_operand.vmem [shape: f32[1,16], index: 8, kind: input, shape index: {}]
  %s9 = inlined_call_operand.vmem [shape: f32[2,288,16], index: 9, kind: output, shape index: {}]
  %s10 = sld [smem:[#allocation0]]
  $region69: #{tpu_custom_call.1} parent=0
    _
  %s12 = ssub.s32 1, %s10
  %s13 = scalar_select 0, %s12, %s10
  loop: start=0, step=1, limit=4
  $region2: #{tpu_custom_call.1} parent=0 // loop_pre_header
    _
  $region3: #{tpu_custom_call.1} parent=0 // loop_header
    %s15 = sphi 0, %s19
    %p16 = scmp.ge.s32.totalorder %s15, 4
    %s22 = sphi 0, %s34
    %s23 = sphi 0, %s30
    %s24 = sphi 0, %s22
    %s25 = sphi 0, %s23
    %s26 = sphi 0, %s24
    %s27 = sphi 0, %s25
    %s37 = sphi 0, %s39
    %s40 = sphi 0, %s37
    %s41 = sphi 0, %s40
    %s57 = sphi 0, %s41
    %s61 = sphi 0, %s61
    %s63 = sphi 0, %s61
    %s64 = sphi 0, %s63
    %s78 = sphi 0, %s64
    %s82 = sphi 0, %s82
    %s84 = sphi 0, %s82
    %s85 = sphi 0, %s84
    %s99 = sphi 0, %s85
    %s103 = sphi 0, %s103
    %s105 = sphi 0, %s103
    %s106 = sphi 0, %s105
    %s120 = sphi 0, %s106
    %s124 = sphi 0, %s124
    %s126 = sphi 0, %s124
    %s127 = sphi 0, %s126
    %s141 = sphi 0, %s127
    %s145 = sphi 0, %s145
    %s147 = sphi 0, %s145
    %s148 = sphi 0, %s147
    %s162 = sphi 0, %s148
    %s166 = sphi 0, %s166
    %s168 = sphi 0, %s166
    %s169 = sphi 0, %s168
    %s183 = sphi 0, %s169
    %s187 = sphi 0, %s187
    %s189 = sphi 0, %s187
    %s190 = sphi 0, %s189
    %s204 = sphi 0, %s190
    %s208 = sphi 0, %s208
    %s210 = sphi 0, %s208
    %s211 = sphi 0, %s210
    %s225 = sphi 0, %s211
    %s233 = sphi 0, %s235
    %s236 = sphi 0, %s233
    %s237 = sphi 0, %s236
    %s253 = sphi 0, %s237
  $region4: #{tpu_custom_call.1} parent=0 // loop_header_branch
    %18 = sbr.rel (%p16) target = $region8
  $region5: #{tpu_custom_call.1} parent=0 // loop_body
    %s20 = ssub.s32 %s15, 1
    %s21 = ssub.s32 %s15, 2
    %s28 = sadd.s32 1, %s23
    %p29 = scmp.ge.s32.totalorder %s28, 1
    %s30 = scalar_select %p29, 0, %s28
    %s31 = sadd.s32 1, %s22
    %s32 = scalar_select %p29, %s31, %s22
    %p33 = scmp.ge.s32.totalorder %s32, 2
    %s34 = scalar_select %p33, 0, %s32
    %s35 = ssub.s32 %s22, %s34
    %p36 = scmp.eq.s32.totalorder %s35, 0
    %s38 = sadd.s32 %s37, 1
    %s39 = scalar_select %p36, %s37, %s38
    %p42 = pneg %p36
    %p43 = scmp.eq.s32.totalorder %s15, 1
    %p44 = por %p42, %p43
    %p45 = scmp.ne.s32.totalorder %s37, %s40
    %p46 = scmp.eq.s32.totalorder %s15, 0
    %p47 = por %p45, %p46
    %p48 = scmp.ne.s32.totalorder %s37, %s40
    %p49 = scmp.eq.s32.totalorder %s20, 1
    %p50 = por %p48, %p49
    %p51 = scmp.ne.s32.totalorder %s40, %s41
    %p52 = scmp.eq.s32.totalorder %s20, 0
    %p53 = por %p51, %p52
    %p54 = scmp.ne.s32.totalorder %s40, %s41
    %p55 = scmp.eq.s32.totalorder %s21, 1
    %p56 = por %p54, %p55
    %p58 = scmp.ne.s32.totalorder %s41, %s57
    %p59 = scmp.eq.s32.totalorder %s21, 0
    %p60 = por %p58, %p59
    %s62 = sadd.s32 %s61, 1
    %p65 = scmp.eq.s32.totalorder %s15, 1
    %p66 = scmp.ne.s32.totalorder %s61, %s63
    %p67 = scmp.eq.s32.totalorder %s15, 0
    %p68 = por %p66, %p67
    %p69 = scmp.ne.s32.totalorder %s61, %s63
    %p70 = scmp.eq.s32.totalorder %s20, 1
    %p71 = por %p69, %p70
    %p72 = scmp.ne.s32.totalorder %s63, %s64
    %p73 = scmp.eq.s32.totalorder %s20, 0
    %p74 = por %p72, %p73
    %p75 = scmp.ne.s32.totalorder %s63, %s64
    %p76 = scmp.eq.s32.totalorder %s21, 1
    %p77 = por %p75, %p76
    %p79 = scmp.ne.s32.totalorder %s64, %s78
    %p80 = scmp.eq.s32.totalorder %s21, 0
    %p81 = por %p79, %p80
    %s83 = sadd.s32 %s82, 1
    %p86 = scmp.eq.s32.totalorder %s15, 1
    %p87 = scmp.ne.s32.totalorder %s82, %s84
    %p88 = scmp.eq.s32.totalorder %s15, 0
    %p89 = por %p87, %p88
    %p90 = scmp.ne.s32.totalorder %s82, %s84
    %p91 = scmp.eq.s32.totalorder %s20, 1
    %p92 = por %p90, %p91
    %p93 = scmp.ne.s32.totalorder %s84, %s85
    %p94 = scmp.eq.s32.totalorder %s20, 0
    %p95 = por %p93, %p94
    %p96 = scmp.ne.s32.totalorder %s84, %s85
    %p97 = scmp.eq.s32.totalorder %s21, 1
    %p98 = por %p96, %p97
    %p100 = scmp.ne.s32.totalorder %s85, %s99
    %p101 = scmp.eq.s32.totalorder %s21, 0
    %p102 = por %p100, %p101
    %s104 = sadd.s32 %s103, 1
    %p107 = scmp.eq.s32.totalorder %s15, 1
    %p108 = scmp.ne.s32.totalorder %s103, %s105
    %p109 = scmp.eq.s32.totalorder %s15, 0
    %p110 = por %p108, %p109
    %p111 = scmp.ne.s32.totalorder %s103, %s105
    %p112 = scmp.eq.s32.totalorder %s20, 1
    %p113 = por %p111, %p112
    %p114 = scmp.ne.s32.totalorder %s105, %s106
    %p115 = scmp.eq.s32.totalorder %s20, 0
    %p116 = por %p114, %p115
    %p117 = scmp.ne.s32.totalorder %s105, %s106
    %p118 = scmp.eq.s32.totalorder %s21, 1
    %p119 = por %p117, %p118
    %p121 = scmp.ne.s32.totalorder %s106, %s120
    %p122 = scmp.eq.s32.totalorder %s21, 0
    %p123 = por %p121, %p122
    %s125 = sadd.s32 %s124, 1
    %p128 = scmp.eq.s32.totalorder %s15, 1
    %p129 = scmp.ne.s32.totalorder %s124, %s126
    %p130 = scmp.eq.s32.totalorder %s15, 0
    %p131 = por %p129, %p130
    %p132 = scmp.ne.s32.totalorder %s124, %s126
    %p133 = scmp.eq.s32.totalorder %s20, 1
    %p134 = por %p132, %p133
    %p135 = scmp.ne.s32.totalorder %s126, %s127
    %p136 = scmp.eq.s32.totalorder %s20, 0
    %p137 = por %p135, %p136
    %p138 = scmp.ne.s32.totalorder %s126, %s127
    %p139 = scmp.eq.s32.totalorder %s21, 1
    %p140 = por %p138, %p139
    %p142 = scmp.ne.s32.totalorder %s127, %s141
    %p143 = scmp.eq.s32.totalorder %s21, 0
    %p144 = por %p142, %p143
    %s146 = sadd.s32 %s145, 1
    %p149 = scmp.eq.s32.totalorder %s15, 1
    %p150 = scmp.ne.s32.totalorder %s145, %s147
    %p151 = scmp.eq.s32.totalorder %s15, 0
    %p152 = por %p150, %p151
    %p153 = scmp.ne.s32.totalorder %s145, %s147
    %p154 = scmp.eq.s32.totalorder %s20, 1
    %p155 = por %p153, %p154
    %p156 = scmp.ne.s32.totalorder %s147, %s148
    %p157 = scmp.eq.s32.totalorder %s20, 0
    %p158 = por %p156, %p157
    %p159 = scmp.ne.s32.totalorder %s147, %s148
    %p160 = scmp.eq.s32.totalorder %s21, 1
    %p161 = por %p159, %p160
    %p163 = scmp.ne.s32.totalorder %s148, %s162
    %p164 = scmp.eq.s32.totalorder %s21, 0
    %p165 = por %p163, %p164
    %s167 = sadd.s32 %s166, 1
    %p170 = scmp.eq.s32.totalorder %s15, 1
    %p171 = scmp.ne.s32.totalorder %s166, %s168
    %p172 = scmp.eq.s32.totalorder %s15, 0
    %p173 = por %p171, %p172
    %p174 = scmp.ne.s32.totalorder %s166, %s168
    %p175 = scmp.eq.s32.totalorder %s20, 1
    %p176 = por %p174, %p175
    %p177 = scmp.ne.s32.totalorder %s168, %s169
    %p178 = scmp.eq.s32.totalorder %s20, 0
    %p179 = por %p177, %p178
    %p180 = scmp.ne.s32.totalorder %s168, %s169
    %p181 = scmp.eq.s32.totalorder %s21, 1
    %p182 = por %p180, %p181
    %p184 = scmp.ne.s32.totalorder %s169, %s183
    %p185 = scmp.eq.s32.totalorder %s21, 0
    %p186 = por %p184, %p185
    %s188 = sadd.s32 %s187, 1
    %p191 = scmp.eq.s32.totalorder %s15, 1
    %p192 = scmp.ne.s32.totalorder %s187, %s189
    %p193 = scmp.eq.s32.totalorder %s15, 0
    %p194 = por %p192, %p193
    %p195 = scmp.ne.s32.totalorder %s187, %s189
    %p196 = scmp.eq.s32.totalorder %s20, 1
    %p197 = por %p195, %p196
    %p198 = scmp.ne.s32.totalorder %s189, %s190
    %p199 = scmp.eq.s32.totalorder %s20, 0
    %p200 = por %p198, %p199
    %p201 = scmp.ne.s32.totalorder %s189, %s190
    %p202 = scmp.eq.s32.totalorder %s21, 1
    %p203 = por %p201, %p202
    %p205 = scmp.ne.s32.totalorder %s190, %s204
    %p206 = scmp.eq.s32.totalorder %s21, 0
    %p207 = por %p205, %p206
    %s209 = sadd.s32 %s208, 1
    %p212 = scmp.eq.s32.totalorder %s15, 1
    %p213 = scmp.ne.s32.totalorder %s208, %s210
    %p214 = scmp.eq.s32.totalorder %s15, 0
    %p215 = por %p213, %p214
    %p216 = scmp.ne.s32.totalorder %s208, %s210
    %p217 = scmp.eq.s32.totalorder %s20, 1
    %p218 = por %p216, %p217
    %p219 = scmp.ne.s32.totalorder %s210, %s211
    %p220 = scmp.eq.s32.totalorder %s20, 0
    %p221 = por %p219, %p220
    %p222 = scmp.ne.s32.totalorder %s210, %s211
    %p223 = scmp.eq.s32.totalorder %s21, 1
    %p224 = por %p222, %p223
    %p226 = scmp.ne.s32.totalorder %s211, %s225
    %p227 = scmp.eq.s32.totalorder %s21, 0
    %p228 = por %p226, %p227
    %s229 = ssub.s32 %s22, %s34
    %s230 = ssub.s32 %s23, %s30
    %s231 = sor.u32 %s229, %s230
    %p232 = scmp.eq.s32.totalorder %s231, 0
    %s234 = sadd.s32 %s233, 1
    %s235 = scalar_select %p232, %s233, %s234
    %p238 = pneg %p232
    %p239 = scmp.eq.s32.totalorder %s15, 1
    %p240 = por %p238, %p239
    %p241 = scmp.ne.s32.totalorder %s233, %s236
    %p242 = scmp.eq.s32.totalorder %s15, 0
    %p243 = por %p241, %p242
    %p244 = scmp.ne.s32.totalorder %s233, %s236
    %p245 = scmp.eq.s32.totalorder %s20, 1
    %p246 = por %p244, %p245
    %p247 = scmp.ne.s32.totalorder %s236, %s237
    %p248 = scmp.eq.s32.totalorder %s20, 0
    %p249 = por %p247, %p248
    %p250 = scmp.ne.s32.totalorder %s236, %s237
    %p251 = scmp.eq.s32.totalorder %s21, 1
    %p252 = por %p250, %p251
    %p254 = scmp.ne.s32.totalorder %s237, %s253
    %p255 = scmp.eq.s32.totalorder %s21, 0
    %p256 = por %p254, %p255
    %p257 = scmp.le.s32.totalorder 1, %s15
    %p258 = scmp.lt.s32.totalorder %s15, 3
    %p259 = pnand %p257, %p258
    %p260 = pneg %p259
    // Predicated region
    $region9: #{tpu_custom_call.1} parent=5 // pred_check
      _
    $region10: #{tpu_custom_call.1} parent=5 // pred_check_branch
      %262 = sbr.rel (%p259) target = $region12
    $region11: #{tpu_custom_call.1} parent=5 // pred_region
      %s263 = ssub.s32 %s15, 1
      // Predicated region
      $region13: #{tpu_custom_call.1} parent=11 // pred_check
        %p264 = pneg %p74
      $region14: #{tpu_custom_call.1} parent=11 // pred_check_branch
        %266 = sbr.rel (%p264) target = $region16
      $region15: #{tpu_custom_call.1} parent=11 // pred_region
        _
      $region16: #{tpu_custom_call.1} parent=11 // pred_fallthru
        _
      // Predicated region
      $region17: #{tpu_custom_call.1} parent=11 // pred_check
        %p267 = pneg %p95
      $region18: #{tpu_custom_call.1} parent=11 // pred_check_branch
        %269 = sbr.rel (%p267) target = $region20
      $region19: #{tpu_custom_call.1} parent=11 // pred_region
        _
      $region20: #{tpu_custom_call.1} parent=11 // pred_fallthru
        _
      // Predicated region
      $region21: #{tpu_custom_call.1} parent=11 // pred_check
        %p270 = pneg %p116
      $region22: #{tpu_custom_call.1} parent=11 // pred_check_branch
        %272 = sbr.rel (%p270) target = $region24
      $region23: #{tpu_custom_call.1} parent=11 // pred_region
        _
      $region24: #{tpu_custom_call.1} parent=11 // pred_fallthru
        _
      // Predicated region
      $region25: #{tpu_custom_call.1} parent=11 // pred_check
        %p273 = pneg %p137
      $region26: #{tpu_custom_call.1} parent=11 // pred_check_branch
        %275 = sbr.rel (%p273) target = $region28
      $region27: #{tpu_custom_call.1} parent=11 // pred_region
        _
      $region28: #{tpu_custom_call.1} parent=11 // pred_fallthru
        _
      // Predicated region
      $region29: #{tpu_custom_call.1} parent=11 // pred_check
        %p276 = pneg %p158
      $region30: #{tpu_custom_call.1} parent=11 // pred_check_branch
        %278 = sbr.rel (%p276) target = $region32
      $region31: #{tpu_custom_call.1} parent=11 // pred_region
        _
      $region32: #{tpu_custom_call.1} parent=11 // pred_fallthru
        _
      // Predicated region
      $region33: #{tpu_custom_call.1} parent=11 // pred_check
        %p279 = pneg %p179
      $region34: #{tpu_custom_call.1} parent=11 // pred_check_branch
        %281 = sbr.rel (%p279) target = $region36
      $region35: #{tpu_custom_call.1} parent=11 // pred_region
        _
      $region36: #{tpu_custom_call.1} parent=11 // pred_fallthru
        _
      // Predicated region
      $region37: #{tpu_custom_call.1} parent=11 // pred_check
        %p282 = pneg %p200
      $region38: #{tpu_custom_call.1} parent=11 // pred_check_branch
        %284 = sbr.rel (%p282) target = $region40
      $region39: #{tpu_custom_call.1} parent=11 // pred_region
        _
      $region40: #{tpu_custom_call.1} parent=11 // pred_fallthru
        _
      // Predicated region
      $region41: #{tpu_custom_call.1} parent=11 // pred_check
        %p285 = pneg %p221
      $region42: #{tpu_custom_call.1} parent=11 // pred_check_branch
        %287 = sbr.rel (%p285) target = $region44
      $region43: #{tpu_custom_call.1} parent=11 // pred_region
        _
      $region44: #{tpu_custom_call.1} parent=11 // pred_fallthru
        _
    $region12: #{tpu_custom_call.1} parent=5 // pred_fallthru
      _
    %p288 = scmp.lt.s32.totalorder %s15, 2
    // Predicated region
    $region45: #{tpu_custom_call.1} parent=5 // pred_check
      %p289 = pneg %p288
    $region46: #{tpu_custom_call.1} parent=5 // pred_check_branch
      %291 = sbr.rel (%p289) target = $region48
    $region47: #{tpu_custom_call.1} parent=5 // pred_region
      // Predicated region
      $region49: #{tpu_custom_call.1} parent=47 // pred_check
        %p292 = pneg %p47
      $region50: #{tpu_custom_call.1} parent=47 // pred_check_branch
        %294 = sbr.rel (%p292) target = $region52
      $region51: #{tpu_custom_call.1} parent=47 // pred_region
        %p295 = scmp.lt.s32.totalorder %s22, 1
        %s296 = scalar_select %p295, %s22, 1
        %s297 = smul.addr %s296, 41
        %s298 = smul.addr %s297, 8
        %s299 = scalar_lea.vmem %s0, %s298
      $region52: #{tpu_custom_call.1} parent=47 // pred_fallthru
        _
    $region48: #{tpu_custom_call.1} parent=5 // pred_fallthru
      _
    %p300 = scmp.le.s32.totalorder 1, %s15
    %p301 = scmp.lt.s32.totalorder %s15, 3
    %p302 = pnand %p300, %p301
    %p303 = pneg %p302
    // Predicated region
    $region53: #{tpu_custom_call.1} parent=5 // pred_check
      _
    $region54: #{tpu_custom_call.1} parent=5 // pred_check_branch
      %305 = sbr.rel (%p302) target = $region56
    $region55: #{tpu_custom_call.1} parent=5 // pred_region
      %s306 = ssub.s32 %s15, 1
      %p307 = scmp.lt.s32.totalorder %s24, 1
      %s308 = scalar_select %p307, %s24, 1
      %s309 = smul.addr %s308, 41
      %s310 = smul.addr %s309, 8
      %s311 = scalar_lea.vmem %s0, %s310
      %p312 = pneg %p53
      %p313 = pneg %p50
      %p314 = pneg %p74
      %p315 = pneg %p71
      %p316 = pneg %p95
      %p317 = pneg %p92
      %p318 = pneg %p116
      %p319 = pneg %p113
      %p320 = pneg %p137
      %p321 = pneg %p134
      %p322 = pneg %p158
      %p323 = pneg %p155
      %p324 = pneg %p179
      %p325 = pneg %p176
      %p326 = pneg %p200
      %p327 = pneg %p197
      %p328 = pneg %p221
      %p329 = pneg %p218
      %p330 = pneg %p249
      %p331 = pneg %p246
      %s332 = smul.u32 36, %s25
      %p333 = scmp.lt.s32.totalorder %s24, 1
      %s334 = scalar_select %p333, %s24, 1
      %p335 = scmp.lt.s32.totalorder %s332, 35
      %s336 = scalar_select %p335, %s332, 35
      %s337 = smul.addr %s334, 36
      %s338 = sadd.s32 %s336, %s337
      %s339 = smul.addr %s338, 8
      %s340 = scalar_lea.vmem %s9, %s339
      %p341 = scmp.lt.s32.totalorder %s24, 1
      %s342 = scalar_select %p341, %s24, 1
      %s343 = smul.addr %s342, 41
      %s344 = smul.addr %s343, 8
      %s345 = scalar_lea.vmem %s0, %s344
      %s346 = smul.u32 36, %s25
      %p347 = scmp.lt.s32.totalorder %s24, 1
      %s348 = scalar_select %p347, %s24, 1
      %p349 = scmp.lt.s32.totalorder %s346, 35
      %s350 = scalar_select %p349, %s346, 35
      %s351 = smul.addr %s348, 36
      %s352 = sadd.s32 %s350, %s351
      %s353 = smul.addr %s352, 8
      %s354 = scalar_lea.vmem %s9, %s353
      %s355 = smul.u32 36, %s25
      %s356 = smul.u32 %s25, 288
      %v357 = vld [vmem:[%s1] sm:$0xf]
      %v358 = vld [vmem:[%s2] sm:$0x1]
      %s359 = scalar_lea.vmem %s345, %s356
      %v360 = vld [vmem:[%s359] sm:$0xff]
      %v361 = vld [vmem:[%s359 + $0x8] sm:$0xff]
      %v362 = vld [vmem:[%s359 + $0x10] sm:$0xff]
      %v363 = vld [vmem:[%s359 + $0x18] sm:$0xff]
      %v364 = vld [vmem:[%s359 + $0x20] sm:$0xff]
      %v365 = vld [vmem:[%s359 + $0x28] sm:$0xff]
      %v366 = vld [vmem:[%s359 + $0x30] sm:$0xff]
      %v367 = vld [vmem:[%s359 + $0x38] sm:$0xff]
      %v368 = vld [vmem:[%s359 + $0x40] sm:$0xff]
      %v369 = vld [vmem:[%s359 + $0x48] sm:$0xff]
      %v370 = vld [vmem:[%s359 + $0x50] sm:$0xff]
      %v371 = vld [vmem:[%s359 + $0x58] sm:$0xff]
      %v372 = vld [vmem:[%s359 + $0x60] sm:$0xff]
      %v373 = vld [vmem:[%s359 + $0x68] sm:$0xff]
      %v374 = vld [vmem:[%s359 + $0x70] sm:$0xff]
      %v375 = vld [vmem:[%s359 + $0x78] sm:$0xff]
      %v376 = vld [vmem:[%s359 + $0x80] sm:$0xff]
      %v377 = vld [vmem:[%s359 + $0x88] sm:$0xff]
      %v378 = vld [vmem:[%s359 + $0x90] sm:$0xff]
      %v379 = vld [vmem:[%s359 + $0x98] sm:$0xff]
      %v380 = vld [vmem:[%s359 + $0xa0] sm:$0xff]
      %v381 = vld [vmem:[%s359 + $0xa8] sm:$0xff]
      %v382 = vld [vmem:[%s359 + $0xb0] sm:$0xff]
      %v383 = vld [vmem:[%s359 + $0xb8] sm:$0xff]
      %v384 = vld [vmem:[%s359 + $0xc0] sm:$0xff]
      %v385 = vld [vmem:[%s359 + $0xc8] sm:$0xff]
      %v386 = vld [vmem:[%s359 + $0xd0] sm:$0xff]
      %v387 = vld [vmem:[%s359 + $0xd8] sm:$0xff]
      %v388 = vld [vmem:[%s359 + $0xe0] sm:$0xff]
      %v389 = vld [vmem:[%s359 + $0xe8] sm:$0xff]
      %v390 = vld [vmem:[%s359 + $0xf0] sm:$0xff]
      %v391 = vld [vmem:[%s359 + $0xf8] sm:$0xff]
      %v392 = vld [vmem:[%s359 + $0x100] sm:$0xff]
      %v393 = vld [vmem:[%s359 + $0x108] sm:$0xff]
      %v394 = vld [vmem:[%s359 + $0x110] sm:$0xff]
      %v395 = vld [vmem:[%s359 + $0x118] sm:$0xff]
      %v396 = vld [vmem:[%s359 + $0x120] sm:$0xff]
      %v397 = vld [vmem:[%s359 + $0x128] sm:$0xff]
      %v398 = vld [vmem:[%s359 + $0x130] sm:$0xff]
      %v399 = vld [vmem:[%s359 + $0x138] sm:$0xff]
      %v400 = vld [vmem:[%s359 + $0x140] sm:$0x3f]
      %v402 = vperm.slane %v358, 0
      %vm404 = vcmask 31744
      %v406 = vsel %vm404, %v360, 0
      %v409 = vsel %vm404, %v361, 0
      %v412 = vsel %vm404, %v362, 0
      %v415 = vsel %vm404, %v363, 0
      %v418 = vsel %vm404, %v364, 0
      %v421 = vsel %vm404, %v365, 0
      %v424 = vsel %vm404, %v366, 0
      %v427 = vsel %vm404, %v367, 0
      %v430 = vsel %vm404, %v368, 0
      %v433 = vsel %vm404, %v369, 0
      %v436 = vsel %vm404, %v370, 0
      %v439 = vsel %vm404, %v371, 0
      %v442 = vsel %vm404, %v372, 0
      %v445 = vsel %vm404, %v373, 0
      %v448 = vsel %vm404, %v374, 0
      %v451 = vsel %vm404, %v375, 0
      %v454 = vsel %vm404, %v376, 0
      %v457 = vsel %vm404, %v377, 0
      %v460 = vsel %vm404, %v378, 0
      %v463 = vsel %vm404, %v379, 0
      %v466 = vsel %vm404, %v380, 0
      %v469 = vsel %vm404, %v381, 0
      %v472 = vsel %vm404, %v382, 0
      %v475 = vsel %vm404, %v383, 0
      %v478 = vsel %vm404, %v384, 0
      %v481 = vsel %vm404, %v385, 0
      %v484 = vsel %vm404, %v386, 0
      %v487 = vsel %vm404, %v387, 0
      %v490 = vsel %vm404, %v388, 0
      %v493 = vsel %vm404, %v389, 0
      %v496 = vsel %vm404, %v390, 0
      %v499 = vsel %vm404, %v391, 0
      %v502 = vsel %vm404, %v392, 0
      %v505 = vsel %vm404, %v393, 0
      %v508 = vsel %vm404, %v394, 0
      %v511 = vsel %vm404, %v395, 0
      %v514 = vsel %vm404, %v396, 0
      %v517 = vsel %vm404, %v397, 0
      %v520 = vsel %vm404, %v398, 0
      %v523 = vsel %vm404, %v399, 0
      %v526 = vsel %vm404, %v400, 0
      %vm528 = vcmask 1043456
      %v530 = vsel %vm528, %v357, 0
      %532 = vmatpush.msra.mxu0 0.0
      %533 = vmatpush.msra.mxu0 0.0
      %534 = vmatpush.msra.mxu0 0.0
      %535 = vmatpush.msra.mxu0 0.0
      %536 = vmatpush.msra.mxu0 0.0
      %537 = vmatpush.msra.mxu0 0.0
      %538 = vmatpush.msra.mxu0 0.0
      %539 = vmatpush.msra.mxu0 0.0
      %540 = vmatpush.msra.mxu0 0.0
      %541 = vmatpush.msra.mxu0 0.0
      %542 = vmatpush.msra.mxu0 0.0
      %543 = vmatpush.msra.mxu0 0.0
      %544 = vmatpush.msra.mxu0 0.0
      %545 = vmatpush.msra.mxu0 0.0
      %546 = vmatpush.msra.mxu0 0.0
      %547 = vmatpush.msra.mxu0 %v530
      %548 = vmatmul.f32.gmra.mxu0 %v406
      %v549 = vpop.f32.mrf.mxu0
      %v550 = vadd.f32 %v402, %v549
      %551 = vmatmul.f32.gmra.mxu0 %v409
      %v552 = vpop.f32.mrf.mxu0
      %v553 = vadd.f32 %v402, %v552
      %554 = vmatmul.f32.gmra.mxu0 %v412
      %v555 = vpop.f32.mrf.mxu0
      %v556 = vadd.f32 %v402, %v555
      %557 = vmatmul.f32.gmra.mxu0 %v415
      %v558 = vpop.f32.mrf.mxu0
      %v559 = vadd.f32 %v402, %v558
      %560 = vmatmul.f32.gmra.mxu0 %v418
      %v561 = vpop.f32.mrf.mxu0
      %v562 = vadd.f32 %v402, %v561
      %563 = vmatmul.f32.gmra.mxu0 %v421
      %v564 = vpop.f32.mrf.mxu0
      %v565 = vadd.f32 %v402, %v564
      %566 = vmatmul.f32.gmra.mxu0 %v424
      %v567 = vpop.f32.mrf.mxu0
      %v568 = vadd.f32 %v402, %v567
      %569 = vmatmul.f32.gmra.mxu0 %v427
      %v570 = vpop.f32.mrf.mxu0
      %v571 = vadd.f32 %v402, %v570
      %572 = vmatmul.f32.gmra.mxu0 %v430
      %v573 = vpop.f32.mrf.mxu0
      %v574 = vadd.f32 %v402, %v573
      %575 = vmatmul.f32.gmra.mxu0 %v433
      %v576 = vpop.f32.mrf.mxu0
      %v577 = vadd.f32 %v402, %v576
      %578 = vmatmul.f32.gmra.mxu0 %v436
      %v579 = vpop.f32.mrf.mxu0
      %v580 = vadd.f32 %v402, %v579
      %581 = vmatmul.f32.gmra.mxu0 %v439
      %v582 = vpop.f32.mrf.mxu0
      %v583 = vadd.f32 %v402, %v582
      %584 = vmatmul.f32.gmra.mxu0 %v442
      %v585 = vpop.f32.mrf.mxu0
      %v586 = vadd.f32 %v402, %v585
      %587 = vmatmul.f32.gmra.mxu0 %v445
      %v588 = vpop.f32.mrf.mxu0
      %v589 = vadd.f32 %v402, %v588
      %590 = vmatmul.f32.gmra.mxu0 %v448
      %v591 = vpop.f32.mrf.mxu0
      %v592 = vadd.f32 %v402, %v591
      %593 = vmatmul.f32.gmra.mxu0 %v451
      %v594 = vpop.f32.mrf.mxu0
      %v595 = vadd.f32 %v402, %v594
      %596 = vmatmul.f32.gmra.mxu0 %v454
      %v597 = vpop.f32.mrf.mxu0
      %v598 = vadd.f32 %v402, %v597
      %599 = vmatmul.f32.gmra.mxu0 %v457
      %v600 = vpop.f32.mrf.mxu0
      %v601 = vadd.f32 %v402, %v600
      %602 = vmatmul.f32.gmra.mxu0 %v460
      %v603 = vpop.f32.mrf.mxu0
      %v604 = vadd.f32 %v402, %v603
      %605 = vmatmul.f32.gmra.mxu0 %v463
      %v606 = vpop.f32.mrf.mxu0
      %v607 = vadd.f32 %v402, %v606
      %608 = vmatmul.f32.gmra.mxu0 %v466
      %v609 = vpop.f32.mrf.mxu0
      %v610 = vadd.f32 %v402, %v609
      %611 = vmatmul.f32.gmra.mxu0 %v469
      %v612 = vpop.f32.mrf.mxu0
      %v613 = vadd.f32 %v402, %v612
      %614 = vmatmul.f32.gmra.mxu0 %v472
      %v615 = vpop.f32.mrf.mxu0
      %v616 = vadd.f32 %v402, %v615
      %617 = vmatmul.f32.gmra.mxu0 %v475
      %v618 = vpop.f32.mrf.mxu0
      %v619 = vadd.f32 %v402, %v618
      %620 = vmatmul.f32.gmra.mxu0 %v478
      %v621 = vpop.f32.mrf.mxu0
      %v622 = vadd.f32 %v402, %v621
      %623 = vmatmul.f32.gmra.mxu0 %v481
      %v624 = vpop.f32.mrf.mxu0
      %v625 = vadd.f32 %v402, %v624
      %626 = vmatmul.f32.gmra.mxu0 %v484
      %v627 = vpop.f32.mrf.mxu0
      %v628 = vadd.f32 %v402, %v627
      %629 = vmatmul.f32.gmra.mxu0 %v487
      %v630 = vpop.f32.mrf.mxu0
      %v631 = vadd.f32 %v402, %v630
      %632 = vmatmul.f32.gmra.mxu0 %v490
      %v633 = vpop.f32.mrf.mxu0
      %v634 = vadd.f32 %v402, %v633
      %635 = vmatmul.f32.gmra.mxu0 %v493
      %v636 = vpop.f32.mrf.mxu0
      %v637 = vadd.f32 %v402, %v636
      %638 = vmatmul.f32.gmra.mxu0 %v496
      %v639 = vpop.f32.mrf.mxu0
      %v640 = vadd.f32 %v402, %v639
      %641 = vmatmul.f32.gmra.mxu0 %v499
      %v642 = vpop.f32.mrf.mxu0
      %v643 = vadd.f32 %v402, %v642
      %644 = vmatmul.f32.gmra.mxu0 %v502
      %v645 = vpop.f32.mrf.mxu0
      %v646 = vadd.f32 %v402, %v645
      %647 = vmatmul.f32.gmra.mxu0 %v505
      %v648 = vpop.f32.mrf.mxu0
      %v649 = vadd.f32 %v402, %v648
      %650 = vmatmul.f32.gmra.mxu0 %v508
      %v651 = vpop.f32.mrf.mxu0
      %v652 = vadd.f32 %v402, %v651
      %653 = vmatmul.f32.gmra.mxu0 %v511
      %v654 = vpop.f32.mrf.mxu0
      %v655 = vadd.f32 %v402, %v654
      %656 = vmatmul.f32.gmra.mxu0 %v514
      %v657 = vpop.f32.mrf.mxu0
      %v658 = vadd.f32 %v402, %v657
      %659 = vmatmul.f32.gmra.mxu0 %v517
      %v660 = vpop.f32.mrf.mxu0
      %v661 = vadd.f32 %v402, %v660
      %662 = vmatmul.f32.gmra.mxu0 %v520
      %v663 = vpop.f32.mrf.mxu0
      %v664 = vadd.f32 %v402, %v663
      %665 = vmatmul.f32.gmra.mxu0 %v523
      %v666 = vpop.f32.mrf.mxu0
      %v667 = vadd.f32 %v402, %v666
      %668 = vmatmul.f32.gmra.mxu0 %v526
      %v669 = vpop.f32.mrf.mxu0
      %v670 = vadd.f32 %v402, %v669
      %671 = vdwg.mxu0
      %v672 = vmax.f32 %v550, 0.0
      %v673 = vmax.f32 %v553, 0.0
      %v674 = vmax.f32 %v556, 0.0
      %v675 = vmax.f32 %v559, 0.0
      %v676 = vmax.f32 %v562, 0.0
      %v677 = vmax.f32 %v565, 0.0
      %v678 = vmax.f32 %v568, 0.0
      %v679 = vmax.f32 %v571, 0.0
      %v680 = vmax.f32 %v574, 0.0
      %v681 = vmax.f32 %v577, 0.0
      %v682 = vmax.f32 %v580, 0.0
      %v683 = vmax.f32 %v583, 0.0
      %v684 = vmax.f32 %v586, 0.0
      %v685 = vmax.f32 %v589, 0.0
      %v686 = vmax.f32 %v592, 0.0
      %v687 = vmax.f32 %v595, 0.0
      %v688 = vmax.f32 %v598, 0.0
      %v689 = vmax.f32 %v601, 0.0
      %v690 = vmax.f32 %v604, 0.0
      %v691 = vmax.f32 %v607, 0.0
      %v692 = vmax.f32 %v610, 0.0
      %v693 = vmax.f32 %v613, 0.0
      %v694 = vmax.f32 %v616, 0.0
      %v695 = vmax.f32 %v619, 0.0
      %v696 = vmax.f32 %v622, 0.0
      %v697 = vmax.f32 %v625, 0.0
      %v698 = vmax.f32 %v628, 0.0
      %v699 = vmax.f32 %v631, 0.0
      %v700 = vmax.f32 %v634, 0.0
      %v701 = vmax.f32 %v637, 0.0
      %v702 = vmax.f32 %v640, 0.0
      %v703 = vmax.f32 %v643, 0.0
      %v704 = vmax.f32 %v646, 0.0
      %v705 = vmax.f32 %v649, 0.0
      %v706 = vmax.f32 %v652, 0.0
      %v707 = vmax.f32 %v655, 0.0
      %v708 = vmax.f32 %v658, 0.0
      %v709 = vmax.f32 %v661, 0.0
      %v710 = vmax.f32 %v664, 0.0
      %v711 = vmax.f32 %v667, 0.0
      %v712 = vmax.f32 %v670, 0.0
      %v713 = vlaneseq
      %v714 = vshrl.u32 %v713, 7
      %v715 = vadd.s32 %v714, 8
      %v716 = vadd.s32 %v714, 16
      %v717 = vadd.s32 %v714, 24
      %v718 = vadd.s32 %v714, 32
      %v719 = vadd.s32 %v714, 40
      %v720 = vadd.s32 %v714, 48
      %v721 = vadd.s32 %v714, 56
      %v722 = vadd.s32 %v714, 64
      %v723 = vadd.s32 %v714, 72
      %v724 = vadd.s32 %v714, 80
      %v725 = vadd.s32 %v714, 88
      %v726 = vadd.s32 %v714, 96
      %v727 = vadd.s32 %v714, 104
      %v728 = vadd.s32 %v714, 112
      %v729 = vadd.s32 %v714, 120
      %v730 = vadd.s32 %v714, 128
      %v731 = vadd.s32 %v714, 136
      %v732 = vadd.s32 %v714, 144
      %v733 = vadd.s32 %v714, 152
      %v734 = vadd.s32 %v714, 160
      %v735 = vadd.s32 %v714, 168
      %v736 = vadd.s32 %v714, 176
      %v737 = vadd.s32 %v714, 184
      %v738 = vadd.s32 %v714, 192
      %v739 = vadd.s32 %v714, 200
      %v740 = vadd.s32 %v714, 208
      %v741 = vadd.s32 %v714, 216
      %v742 = vadd.s32 %v714, 224
      %v743 = vadd.s32 %v714, 232
      %v744 = vadd.s32 %v714, 240
      %v745 = vadd.s32 %v714, 248
      %v746 = vadd.s32 %v714, 256
      %v747 = vadd.s32 %v714, 264
      %v748 = vadd.s32 %v714, 272
      %v749 = vadd.s32 %v714, 280
      %v750 = vadd.s32 %v714, 288
      %v751 = vadd.s32 %v714, 296
      %v752 = vadd.s32 %v714, 304
      %v753 = vadd.s32 %v714, 312
      %v754 = vadd.s32 %v714, 320
      %v755 = vstv %s356
      %v756 = vadd.s32 %v714, %v755
      %v757 = vadd.s32 %v715, %v755
      %v758 = vadd.s32 %v716, %v755
      %v759 = vadd.s32 %v717, %v755
      %v760 = vadd.s32 %v718, %v755
      %v761 = vadd.s32 %v719, %v755
      %v762 = vadd.s32 %v720, %v755
      %v763 = vadd.s32 %v721, %v755
      %v764 = vadd.s32 %v722, %v755
      %v765 = vadd.s32 %v723, %v755
      %v766 = vadd.s32 %v724, %v755
      %v767 = vadd.s32 %v725, %v755
      %v768 = vadd.s32 %v726, %v755
      %v769 = vadd.s32 %v727, %v755
      %v770 = vadd.s32 %v728, %v755
      %v771 = vadd.s32 %v729, %v755
      %v772 = vadd.s32 %v730, %v755
      %v773 = vadd.s32 %v731, %v755
      %v774 = vadd.s32 %v732, %v755
      %v775 = vadd.s32 %v733, %v755
      %v776 = vadd.s32 %v734, %v755
      %v777 = vadd.s32 %v735, %v755
      %v778 = vadd.s32 %v736, %v755
      %v779 = vadd.s32 %v737, %v755
      %v780 = vadd.s32 %v738, %v755
      %v781 = vadd.s32 %v739, %v755
      %v782 = vadd.s32 %v740, %v755
      %v783 = vadd.s32 %v741, %v755
      %v784 = vadd.s32 %v742, %v755
      %v785 = vadd.s32 %v743, %v755
      %v786 = vadd.s32 %v744, %v755
      %v787 = vadd.s32 %v745, %v755
      %v788 = vadd.s32 %v746, %v755
      %v789 = vadd.s32 %v747, %v755
      %v790 = vadd.s32 %v748, %v755
      %v791 = vadd.s32 %v749, %v755
      %v792 = vadd.s32 %v750, %v755
      %v793 = vadd.s32 %v751, %v755
      %v794 = vadd.s32 %v752, %v755
      %v795 = vadd.s32 %v753, %v755
      %v796 = vadd.s32 %v754, %v755
      %v797 = vcvt.s32.f32 %v756
      %v798 = vcvt.s32.f32 %v757
      %v799 = vcvt.s32.f32 %v758
      %v800 = vcvt.s32.f32 %v759
      %v801 = vcvt.s32.f32 %v760
      %v802 = vcvt.s32.f32 %v761
      %v803 = vcvt.s32.f32 %v762
      %v804 = vcvt.s32.f32 %v763
      %v805 = vcvt.s32.f32 %v764
      %v806 = vcvt.s32.f32 %v765
      %v807 = vcvt.s32.f32 %v766
      %v808 = vcvt.s32.f32 %v767
      %v809 = vcvt.s32.f32 %v768
      %v810 = vcvt.s32.f32 %v769
      %v811 = vcvt.s32.f32 %v770
      %v812 = vcvt.s32.f32 %v771
      %v813 = vcvt.s32.f32 %v772
      %v814 = vcvt.s32.f32 %v773
      %v815 = vcvt.s32.f32 %v774
      %v816 = vcvt.s32.f32 %v775
      %v817 = vcvt.s32.f32 %v776
      %v818 = vcvt.s32.f32 %v777
      %v819 = vcvt.s32.f32 %v778
      %v820 = vcvt.s32.f32 %v779
      %v821 = vcvt.s32.f32 %v780
      %v822 = vcvt.s32.f32 %v781
      %v823 = vcvt.s32.f32 %v782
      %v824 = vcvt.s32.f32 %v783
      %v825 = vcvt.s32.f32 %v784
      %v826 = vcvt.s32.f32 %v785
      %v827 = vcvt.s32.f32 %v786
      %v828 = vcvt.s32.f32 %v787
      %v829 = vcvt.s32.f32 %v788
      %v830 = vcvt.s32.f32 %v789
      %v831 = vcvt.s32.f32 %v790
      %v832 = vcvt.s32.f32 %v791
      %v833 = vcvt.s32.f32 %v792
      %v834 = vcvt.s32.f32 %v793
      %v835 = vcvt.s32.f32 %v794
      %v836 = vcvt.s32.f32 %v795
      %v837 = vcvt.s32.f32 %v796
      %v838 = vmul.f32 %v797, 0.055555556
      %v839 = vmul.f32 %v798, 0.055555556
      %v840 = vmul.f32 %v799, 0.055555556
      %v841 = vmul.f32 %v800, 0.055555556
      %v842 = vmul.f32 %v801, 0.055555556
      %v843 = vmul.f32 %v802, 0.055555556
      %v844 = vmul.f32 %v803, 0.055555556
      %v845 = vmul.f32 %v804, 0.055555556
      %v846 = vmul.f32 %v805, 0.055555556
      %v847 = vmul.f32 %v806, 0.055555556
      %v848 = vmul.f32 %v807, 0.055555556
      %v849 = vmul.f32 %v808, 0.055555556
      %v850 = vmul.f32 %v809, 0.055555556
      %v851 = vmul.f32 %v810, 0.055555556
      %v852 = vmul.f32 %v811, 0.055555556
      %v853 = vmul.f32 %v812, 0.055555556
      %v854 = vmul.f32 %v813, 0.055555556
      %v855 = vmul.f32 %v814, 0.055555556
      %v856 = vmul.f32 %v815, 0.055555556
      %v857 = vmul.f32 %v816, 0.055555556
      %v858 = vmul.f32 %v817, 0.055555556
      %v859 = vmul.f32 %v818, 0.055555556
      %v860 = vmul.f32 %v819, 0.055555556
      %v861 = vmul.f32 %v820, 0.055555556
      %v862 = vmul.f32 %v821, 0.055555556
      %v863 = vmul.f32 %v822, 0.055555556
      %v864 = vmul.f32 %v823, 0.055555556
      %v865 = vmul.f32 %v824, 0.055555556
      %v866 = vmul.f32 %v825, 0.055555556
      %v867 = vmul.f32 %v826, 0.055555556
      %v868 = vmul.f32 %v827, 0.055555556
      %v869 = vmul.f32 %v828, 0.055555556
      %v870 = vmul.f32 %v829, 0.055555556
      %v871 = vmul.f32 %v830, 0.055555556
      %v872 = vmul.f32 %v831, 0.055555556
      %v873 = vmul.f32 %v832, 0.055555556
      %v874 = vmul.f32 %v833, 0.055555556
      %v875 = vmul.f32 %v834, 0.055555556
      %v876 = vmul.f32 %v835, 0.055555556
      %v877 = vmul.f32 %v836, 0.055555556
      %v878 = vmul.f32 %v837, 0.055555556
      %v879 = vfloor.f32 %v838
      %v880 = vfloor.f32 %v839
      %v881 = vfloor.f32 %v840
      %v882 = vfloor.f32 %v841
      %v883 = vfloor.f32 %v842
      %v884 = vfloor.f32 %v843
      %v885 = vfloor.f32 %v844
      %v886 = vfloor.f32 %v845
      %v887 = vfloor.f32 %v846
      %v888 = vfloor.f32 %v847
      %v889 = vfloor.f32 %v848
      %v890 = vfloor.f32 %v849
      %v891 = vfloor.f32 %v850
      %v892 = vfloor.f32 %v851
      %v893 = vfloor.f32 %v852
      %v894 = vfloor.f32 %v853
      %v895 = vfloor.f32 %v854
      %v896 = vfloor.f32 %v855
      %v897 = vfloor.f32 %v856
      %v898 = vfloor.f32 %v857
      %v899 = vfloor.f32 %v858
      %v900 = vfloor.f32 %v859
      %v901 = vfloor.f32 %v860
      %v902 = vfloor.f32 %v861
      %v903 = vfloor.f32 %v862
      %v904 = vfloor.f32 %v863
      %v905 = vfloor.f32 %v864
      %v906 = vfloor.f32 %v865
      %v907 = vfloor.f32 %v866
      %v908 = vfloor.f32 %v867
      %v909 = vfloor.f32 %v868
      %v910 = vfloor.f32 %v869
      %v911 = vfloor.f32 %v870
      %v912 = vfloor.f32 %v871
      %v913 = vfloor.f32 %v872
      %v914 = vfloor.f32 %v873
      %v915 = vfloor.f32 %v874
      %v916 = vfloor.f32 %v875
      %v917 = vfloor.f32 %v876
      %v918 = vfloor.f32 %v877
      %v919 = vfloor.f32 %v878
      %v920 = vmul.f32 %v879, 18.0
      %v921 = vmul.f32 %v880, 18.0
      %v922 = vmul.f32 %v881, 18.0
      %v923 = vmul.f32 %v882, 18.0
      %v924 = vmul.f32 %v883, 18.0
      %v925 = vmul.f32 %v884, 18.0
      %v926 = vmul.f32 %v885, 18.0
      %v927 = vmul.f32 %v886, 18.0
      %v928 = vmul.f32 %v887, 18.0
      %v929 = vmul.f32 %v888, 18.0
      %v930 = vmul.f32 %v889, 18.0
      %v931 = vmul.f32 %v890, 18.0
      %v932 = vmul.f32 %v891, 18.0
      %v933 = vmul.f32 %v892, 18.0
      %v934 = vmul.f32 %v893, 18.0
      %v935 = vmul.f32 %v894, 18.0
      %v936 = vmul.f32 %v895, 18.0
      %v937 = vmul.f32 %v896, 18.0
      %v938 = vmul.f32 %v897, 18.0
      %v939 = vmul.f32 %v898, 18.0
      %v940 = vmul.f32 %v899, 18.0
      %v941 = vmul.f32 %v900, 18.0
      %v942 = vmul.f32 %v901, 18.0
      %v943 = vmul.f32 %v902, 18.0
      %v944 = vmul.f32 %v903, 18.0
      %v945 = vmul.f32 %v904, 18.0
      %v946 = vmul.f32 %v905, 18.0
      %v947 = vmul.f32 %v906, 18.0
      %v948 = vmul.f32 %v907, 18.0
      %v949 = vmul.f32 %v908, 18.0
      %v950 = vmul.f32 %v909, 18.0
      %v951 = vmul.f32 %v910, 18.0
      %v952 = vmul.f32 %v911, 18.0
      %v953 = vmul.f32 %v912, 18.0
      %v954 = vmul.f32 %v913, 18.0
      %v955 = vmul.f32 %v914, 18.0
      %v956 = vmul.f32 %v915, 18.0
      %v957 = vmul.f32 %v916, 18.0
      %v958 = vmul.f32 %v917, 18.0
      %v959 = vmul.f32 %v918, 18.0
      %v960 = vmul.f32 %v919, 18.0
      %v961 = vsub.f32 %v797, %v920
      %v962 = vsub.f32 %v798, %v921
      %v963 = vsub.f32 %v799, %v922
      %v964 = vsub.f32 %v800, %v923
      %v965 = vsub.f32 %v801, %v924
      %v966 = vsub.f32 %v802, %v925
      %v967 = vsub.f32 %v803, %v926
      %v968 = vsub.f32 %v804, %v927
      %v969 = vsub.f32 %v805, %v928
      %v970 = vsub.f32 %v806, %v929
      %v971 = vsub.f32 %v807, %v930
      %v972 = vsub.f32 %v808, %v931
      %v973 = vsub.f32 %v809, %v932
      %v974 = vsub.f32 %v810, %v933
      %v975 = vsub.f32 %v811, %v934
      %v976 = vsub.f32 %v812, %v935
      %v977 = vsub.f32 %v813, %v936
      %v978 = vsub.f32 %v814, %v937
      %v979 = vsub.f32 %v815, %v938
      %v980 = vsub.f32 %v816, %v939
      %v981 = vsub.f32 %v817, %v940
      %v982 = vsub.f32 %v818, %v941
      %v983 = vsub.f32 %v819, %v942
      %v984 = vsub.f32 %v820, %v943
      %v985 = vsub.f32 %v821, %v944
      %v986 = vsub.f32 %v822, %v945
      %v987 = vsub.f32 %v823, %v946
      %v988 = vsub.f32 %v824, %v947
      %v989 = vsub.f32 %v825, %v948
      %v990 = vsub.f32 %v826, %v949
      %v991 = vsub.f32 %v827, %v950
      %v992 = vsub.f32 %v828, %v951
      %v993 = vsub.f32 %v829, %v952
      %v994 = vsub.f32 %v830, %v953
      %v995 = vsub.f32 %v831, %v954
      %v996 = vsub.f32 %v832, %v955
      %v997 = vsub.f32 %v833, %v956
      %v998 = vsub.f32 %v834, %v957
      %v999 = vsub.f32 %v835, %v958
      %v1000 = vsub.f32 %v836, %v959
      %v1001 = vsub.f32 %v837, %v960
      %vm1002 = vcmp.ge.f32.partialorder %v797, 18.0
      %vm1003 = vcmp.ge.f32.partialorder %v798, 18.0
      %vm1004 = vcmp.ge.f32.partialorder %v799, 18.0
      %vm1005 = vcmp.ge.f32.partialorder %v800, 18.0
      %vm1006 = vcmp.ge.f32.partialorder %v801, 18.0
      %vm1007 = vcmp.ge.f32.partialorder %v802, 18.0
      %vm1008 = vcmp.ge.f32.partialorder %v803, 18.0
      %vm1009 = vcmp.ge.f32.partialorder %v804, 18.0
      %vm1010 = vcmp.ge.f32.partialorder %v805, 18.0
      %vm1011 = vcmp.ge.f32.partialorder %v806, 18.0
      %vm1012 = vcmp.ge.f32.partialorder %v807, 18.0
      %vm1013 = vcmp.ge.f32.partialorder %v808, 18.0
      %vm1014 = vcmp.ge.f32.partialorder %v809, 18.0
      %vm1015 = vcmp.ge.f32.partialorder %v810, 18.0
      %vm1016 = vcmp.ge.f32.partialorder %v811, 18.0
      %vm1017 = vcmp.ge.f32.partialorder %v812, 18.0
      %vm1018 = vcmp.ge.f32.partialorder %v813, 18.0
      %vm1019 = vcmp.ge.f32.partialorder %v814, 18.0
      %vm1020 = vcmp.ge.f32.partialorder %v815, 18.0
      %vm1021 = vcmp.ge.f32.partialorder %v816, 18.0
      %vm1022 = vcmp.ge.f32.partialorder %v817, 18.0
      %vm1023 = vcmp.ge.f32.partialorder %v818, 18.0
      %vm1024 = vcmp.ge.f32.partialorder %v819, 18.0
      %vm1025 = vcmp.ge.f32.partialorder %v820, 18.0
      %vm1026 = vcmp.ge.f32.partialorder %v821, 18.0
      %vm1027 = vcmp.ge.f32.partialorder %v822, 18.0
      %vm1028 = vcmp.ge.f32.partialorder %v823, 18.0
      %vm1029 = vcmp.ge.f32.partialorder %v824, 18.0
      %vm1030 = vcmp.ge.f32.partialorder %v825, 18.0
      %vm1031 = vcmp.ge.f32.partialorder %v826, 18.0
      %vm1032 = vcmp.ge.f32.partialorder %v827, 18.0
      %vm1033 = vcmp.ge.f32.partialorder %v828, 18.0
      %vm1034 = vcmp.ge.f32.partialorder %v829, 18.0
      %vm1035 = vcmp.ge.f32.partialorder %v830, 18.0
      %vm1036 = vcmp.ge.f32.partialorder %v831, 18.0
      %vm1037 = vcmp.ge.f32.partialorder %v832, 18.0
      %vm1038 = vcmp.ge.f32.partialorder %v833, 18.0
      %vm1039 = vcmp.ge.f32.partialorder %v834, 18.0
      %vm1040 = vcmp.ge.f32.partialorder %v835, 18.0
      %vm1041 = vcmp.ge.f32.partialorder %v836, 18.0
      %vm1042 = vcmp.ge.f32.partialorder %v837, 18.0
      %vm1043 = vcmp.lt.f32.partialorder %v797, 306.0
      %vm1044 = vcmp.lt.f32.partialorder %v798, 306.0
      %vm1045 = vcmp.lt.f32.partialorder %v799, 306.0
      %vm1046 = vcmp.lt.f32.partialorder %v800, 306.0
      %vm1047 = vcmp.lt.f32.partialorder %v801, 306.0
      %vm1048 = vcmp.lt.f32.partialorder %v802, 306.0
      %vm1049 = vcmp.lt.f32.partialorder %v803, 306.0
      %vm1050 = vcmp.lt.f32.partialorder %v804, 306.0
      %vm1051 = vcmp.lt.f32.partialorder %v805, 306.0
      %vm1052 = vcmp.lt.f32.partialorder %v806, 306.0
      %vm1053 = vcmp.lt.f32.partialorder %v807, 306.0
      %vm1054 = vcmp.lt.f32.partialorder %v808, 306.0
      %vm1055 = vcmp.lt.f32.partialorder %v809, 306.0
      %vm1056 = vcmp.lt.f32.partialorder %v810, 306.0
      %vm1057 = vcmp.lt.f32.partialorder %v811, 306.0
      %vm1058 = vcmp.lt.f32.partialorder %v812, 306.0
      %vm1059 = vcmp.lt.f32.partialorder %v813, 306.0
      %vm1060 = vcmp.lt.f32.partialorder %v814, 306.0
      %vm1061 = vcmp.lt.f32.partialorder %v815, 306.0
      %vm1062 = vcmp.lt.f32.partialorder %v816, 306.0
      %vm1063 = vcmp.lt.f32.partialorder %v817, 306.0
      %vm1064 = vcmp.lt.f32.partialorder %v818, 306.0
      %vm1065 = vcmp.lt.f32.partialorder %v819, 306.0
      %vm1066 = vcmp.lt.f32.partialorder %v820, 306.0
      %vm1067 = vcmp.lt.f32.partialorder %v821, 306.0
      %vm1068 = vcmp.lt.f32.partialorder %v822, 306.0
      %vm1069 = vcmp.lt.f32.partialorder %v823, 306.0
      %vm1070 = vcmp.lt.f32.partialorder %v824, 306.0
      %vm1071 = vcmp.lt.f32.partialorder %v825, 306.0
      %vm1072 = vcmp.lt.f32.partialorder %v826, 306.0
      %vm1073 = vcmp.lt.f32.partialorder %v827, 306.0
      %vm1074 = vcmp.lt.f32.partialorder %v828, 306.0
      %vm1075 = vcmp.lt.f32.partialorder %v829, 306.0
      %vm1076 = vcmp.lt.f32.partialorder %v830, 306.0
      %vm1077 = vcmp.lt.f32.partialorder %v831, 306.0
      %vm1078 = vcmp.lt.f32.partialorder %v832, 306.0
      %vm1079 = vcmp.lt.f32.partialorder %v833, 306.0
      %vm1080 = vcmp.lt.f32.partialorder %v834, 306.0
      %vm1081 = vcmp.lt.f32.partialorder %v835, 306.0
      %vm1082 = vcmp.lt.f32.partialorder %v836, 306.0
      %vm1083 = vcmp.lt.f32.partialorder %v837, 306.0
      %vm1084 = vmand %vm1002, %vm1043
      %vm1085 = vmand %vm1003, %vm1044
      %vm1086 = vmand %vm1004, %vm1045
      %vm1087 = vmand %vm1005, %vm1046
      %vm1088 = vmand %vm1006, %vm1047
      %vm1089 = vmand %vm1007, %vm1048
      %vm1090 = vmand %vm1008, %vm1049
      %vm1091 = vmand %vm1009, %vm1050
      %vm1092 = vmand %vm1010, %vm1051
      %vm1093 = vmand %vm1011, %vm1052
      %vm1094 = vmand %vm1012, %vm1053
      %vm1095 = vmand %vm1013, %vm1054
      %vm1096 = vmand %vm1014, %vm1055
      %vm1097 = vmand %vm1015, %vm1056
      %vm1098 = vmand %vm1016, %vm1057
      %vm1099 = vmand %vm1017, %vm1058
      %vm1100 = vmand %vm1018, %vm1059
      %vm1101 = vmand %vm1019, %vm1060
      %vm1102 = vmand %vm1020, %vm1061
      %vm1103 = vmand %vm1021, %vm1062
      %vm1104 = vmand %vm1022, %vm1063
      %vm1105 = vmand %vm1023, %vm1064
      %vm1106 = vmand %vm1024, %vm1065
      %vm1107 = vmand %vm1025, %vm1066
      %vm1108 = vmand %vm1026, %vm1067
      %vm1109 = vmand %vm1027, %vm1068
      %vm1110 = vmand %vm1028, %vm1069
      %vm1111 = vmand %vm1029, %vm1070
      %vm1112 = vmand %vm1030, %vm1071
      %vm1113 = vmand %vm1031, %vm1072
      %vm1114 = vmand %vm1032, %vm1073
      %vm1115 = vmand %vm1033, %vm1074
      %vm1116 = vmand %vm1034, %vm1075
      %vm1117 = vmand %vm1035, %vm1076
      %vm1118 = vmand %vm1036, %vm1077
      %vm1119 = vmand %vm1037, %vm1078
      %vm1120 = vmand %vm1038, %vm1079
      %vm1121 = vmand %vm1039, %vm1080
      %vm1122 = vmand %vm1040, %vm1081
      %vm1123 = vmand %vm1041, %vm1082
      %vm1124 = vmand %vm1042, %vm1083
      %vm1125 = vcmp.gt.f32.partialorder %v961, 0.5
      %vm1126 = vcmp.gt.f32.partialorder %v962, 0.5
      %vm1127 = vcmp.gt.f32.partialorder %v963, 0.5
      %vm1128 = vcmp.gt.f32.partialorder %v964, 0.5
      %vm1129 = vcmp.gt.f32.partialorder %v965, 0.5
      %vm1130 = vcmp.gt.f32.partialorder %v966, 0.5
      %vm1131 = vcmp.gt.f32.partialorder %v967, 0.5
      %vm1132 = vcmp.gt.f32.partialorder %v968, 0.5
      %vm1133 = vcmp.gt.f32.partialorder %v969, 0.5
      %vm1134 = vcmp.gt.f32.partialorder %v970, 0.5
      %vm1135 = vcmp.gt.f32.partialorder %v971, 0.5
      %vm1136 = vcmp.gt.f32.partialorder %v972, 0.5
      %vm1137 = vcmp.gt.f32.partialorder %v973, 0.5
      %vm1138 = vcmp.gt.f32.partialorder %v974, 0.5
      %vm1139 = vcmp.gt.f32.partialorder %v975, 0.5
      %vm1140 = vcmp.gt.f32.partialorder %v976, 0.5
      %vm1141 = vcmp.gt.f32.partialorder %v977, 0.5
      %vm1142 = vcmp.gt.f32.partialorder %v978, 0.5
      %vm1143 = vcmp.gt.f32.partialorder %v979, 0.5
      %vm1144 = vcmp.gt.f32.partialorder %v980, 0.5
      %vm1145 = vcmp.gt.f32.partialorder %v981, 0.5
      %vm1146 = vcmp.gt.f32.partialorder %v982, 0.5
      %vm1147 = vcmp.gt.f32.partialorder %v983, 0.5
      %vm1148 = vcmp.gt.f32.partialorder %v984, 0.5
      %vm1149 = vcmp.gt.f32.partialorder %v985, 0.5
      %vm1150 = vcmp.gt.f32.partialorder %v986, 0.5
      %vm1151 = vcmp.gt.f32.partialorder %v987, 0.5
      %vm1152 = vcmp.gt.f32.partialorder %v988, 0.5
      %vm1153 = vcmp.gt.f32.partialorder %v989, 0.5
      %vm1154 = vcmp.gt.f32.partialorder %v990, 0.5
      %vm1155 = vcmp.gt.f32.partialorder %v991, 0.5
      %vm1156 = vcmp.gt.f32.partialorder %v992, 0.5
      %vm1157 = vcmp.gt.f32.partialorder %v993, 0.5
      %vm1158 = vcmp.gt.f32.partialorder %v994, 0.5
      %vm1159 = vcmp.gt.f32.partialorder %v995, 0.5
      %vm1160 = vcmp.gt.f32.partialorder %v996, 0.5
      %vm1161 = vcmp.gt.f32.partialorder %v997, 0.5
      %vm1162 = vcmp.gt.f32.partialorder %v998, 0.5
      %vm1163 = vcmp.gt.f32.partialorder %v999, 0.5
      %vm1164 = vcmp.gt.f32.partialorder %v1000, 0.5
      %vm1165 = vcmp.gt.f32.partialorder %v1001, 0.5
      %vm1166 = vmand %vm1084, %vm1125
      %vm1167 = vmand %vm1085, %vm1126
      %vm1168 = vmand %vm1086, %vm1127
      %vm1169 = vmand %vm1087, %vm1128
      %vm1170 = vmand %vm1088, %vm1129
      %vm1171 = vmand %vm1089, %vm1130
      %vm1172 = vmand %vm1090, %vm1131
      %vm1173 = vmand %vm1091, %vm1132
      %vm1174 = vmand %vm1092, %vm1133
      %vm1175 = vmand %vm1093, %vm1134
      %vm1176 = vmand %vm1094, %vm1135
      %vm1177 = vmand %vm1095, %vm1136
      %vm1178 = vmand %vm1096, %vm1137
      %vm1179 = vmand %vm1097, %vm1138
      %vm1180 = vmand %vm1098, %vm1139
      %vm1181 = vmand %vm1099, %vm1140
      %vm1182 = vmand %vm1100, %vm1141
      %vm1183 = vmand %vm1101, %vm1142
      %vm1184 = vmand %vm1102, %vm1143
      %vm1185 = vmand %vm1103, %vm1144
      %vm1186 = vmand %vm1104, %vm1145
      %vm1187 = vmand %vm1105, %vm1146
      %vm1188 = vmand %vm1106, %vm1147
      %vm1189 = vmand %vm1107, %vm1148
      %vm1190 = vmand %vm1108, %vm1149
      %vm1191 = vmand %vm1109, %vm1150
      %vm1192 = vmand %vm1110, %vm1151
      %vm1193 = vmand %vm1111, %vm1152
      %vm1194 = vmand %vm1112, %vm1153
      %vm1195 = vmand %vm1113, %vm1154
      %vm1196 = vmand %vm1114, %vm1155
      %vm1197 = vmand %vm1115, %vm1156
      %vm1198 = vmand %vm1116, %vm1157
      %vm1199 = vmand %vm1117, %vm1158
      %vm1200 = vmand %vm1118, %vm1159
      %vm1201 = vmand %vm1119, %vm1160
      %vm1202 = vmand %vm1120, %vm1161
      %vm1203 = vmand %vm1121, %vm1162
      %vm1204 = vmand %vm1122, %vm1163
      %vm1205 = vmand %vm1123, %vm1164
      %vm1206 = vmand %vm1124, %vm1165
      %vm1207 = vcmp.lt.f32.partialorder %v961, 16.5
      %vm1208 = vcmp.lt.f32.partialorder %v962, 16.5
      %vm1209 = vcmp.lt.f32.partialorder %v963, 16.5
      %vm1210 = vcmp.lt.f32.partialorder %v964, 16.5
      %vm1211 = vcmp.lt.f32.partialorder %v965, 16.5
      %vm1212 = vcmp.lt.f32.partialorder %v966, 16.5
      %vm1213 = vcmp.lt.f32.partialorder %v967, 16.5
      %vm1214 = vcmp.lt.f32.partialorder %v968, 16.5
      %vm1215 = vcmp.lt.f32.partialorder %v969, 16.5
      %vm1216 = vcmp.lt.f32.partialorder %v970, 16.5
      %vm1217 = vcmp.lt.f32.partialorder %v971, 16.5
      %vm1218 = vcmp.lt.f32.partialorder %v972, 16.5
      %vm1219 = vcmp.lt.f32.partialorder %v973, 16.5
      %vm1220 = vcmp.lt.f32.partialorder %v974, 16.5
      %vm1221 = vcmp.lt.f32.partialorder %v975, 16.5
      %vm1222 = vcmp.lt.f32.partialorder %v976, 16.5
      %vm1223 = vcmp.lt.f32.partialorder %v977, 16.5
      %vm1224 = vcmp.lt.f32.partialorder %v978, 16.5
      %vm1225 = vcmp.lt.f32.partialorder %v979, 16.5
      %vm1226 = vcmp.lt.f32.partialorder %v980, 16.5
      %vm1227 = vcmp.lt.f32.partialorder %v981, 16.5
      %vm1228 = vcmp.lt.f32.partialorder %v982, 16.5
      %vm1229 = vcmp.lt.f32.partialorder %v983, 16.5
      %vm1230 = vcmp.lt.f32.partialorder %v984, 16.5
      %vm1231 = vcmp.lt.f32.partialorder %v985, 16.5
      %vm1232 = vcmp.lt.f32.partialorder %v986, 16.5
      %vm1233 = vcmp.lt.f32.partialorder %v987, 16.5
      %vm1234 = vcmp.lt.f32.partialorder %v988, 16.5
      %vm1235 = vcmp.lt.f32.partialorder %v989, 16.5
      %vm1236 = vcmp.lt.f32.partialorder %v990, 16.5
      %vm1237 = vcmp.lt.f32.partialorder %v991, 16.5
      %vm1238 = vcmp.lt.f32.partialorder %v992, 16.5
      %vm1239 = vcmp.lt.f32.partialorder %v993, 16.5
      %vm1240 = vcmp.lt.f32.partialorder %v994, 16.5
      %vm1241 = vcmp.lt.f32.partialorder %v995, 16.5
      %vm1242 = vcmp.lt.f32.partialorder %v996, 16.5
      %vm1243 = vcmp.lt.f32.partialorder %v997, 16.5
      %vm1244 = vcmp.lt.f32.partialorder %v998, 16.5
      %vm1245 = vcmp.lt.f32.partialorder %v999, 16.5
      %vm1246 = vcmp.lt.f32.partialorder %v1000, 16.5
      %vm1247 = vcmp.lt.f32.partialorder %v1001, 16.5
      %vm1248 = vmand %vm1166, %vm1207
      %vm1249 = vmand %vm1167, %vm1208
      %vm1250 = vmand %vm1168, %vm1209
      %vm1251 = vmand %vm1169, %vm1210
      %vm1252 = vmand %vm1170, %vm1211
      %vm1253 = vmand %vm1171, %vm1212
      %vm1254 = vmand %vm1172, %vm1213
      %vm1255 = vmand %vm1173, %vm1214
      %vm1256 = vmand %vm1174, %vm1215
      %vm1257 = vmand %vm1175, %vm1216
      %vm1258 = vmand %vm1176, %vm1217
      %vm1259 = vmand %vm1177, %vm1218
      %vm1260 = vmand %vm1178, %vm1219
      %vm1261 = vmand %vm1179, %vm1220
      %vm1262 = vmand %vm1180, %vm1221
      %vm1263 = vmand %vm1181, %vm1222
      %vm1264 = vmand %vm1182, %vm1223
      %vm1265 = vmand %vm1183, %vm1224
      %vm1266 = vmand %vm1184, %vm1225
      %vm1267 = vmand %vm1185, %vm1226
      %vm1268 = vmand %vm1186, %vm1227
      %vm1269 = vmand %vm1187, %vm1228
      %vm1270 = vmand %vm1188, %vm1229
      %vm1271 = vmand %vm1189, %vm1230
      %vm1272 = vmand %vm1190, %vm1231
      %vm1273 = vmand %vm1191, %vm1232
      %vm1274 = vmand %vm1192, %vm1233
      %vm1275 = vmand %vm1193, %vm1234
      %vm1276 = vmand %vm1194, %vm1235
      %vm1277 = vmand %vm1195, %vm1236
      %vm1278 = vmand %vm1196, %vm1237
      %vm1279 = vmand %vm1197, %vm1238
      %vm1280 = vmand %vm1198, %vm1239
      %vm1281 = vmand %vm1199, %vm1240
      %vm1282 = vmand %vm1200, %vm1241
      %vm1283 = vmand %vm1201, %vm1242
      %vm1284 = vmand %vm1202, %vm1243
      %vm1285 = vmand %vm1203, %vm1244
      %vm1286 = vmand %vm1204, %vm1245
      %vm1287 = vmand %vm1205, %vm1246
      %vm1288 = vmand %vm1206, %vm1247
      %v1289 = vsel %vm1248, 1, 0
      %v1290 = vsel %vm1249, 1, 0
      %v1291 = vsel %vm1250, 1, 0
      %v1292 = vsel %vm1251, 1, 0
      %v1293 = vsel %vm1252, 1, 0
      %v1294 = vsel %vm1253, 1, 0
      %v1295 = vsel %vm1254, 1, 0
      %v1296 = vsel %vm1255, 1, 0
      %v1297 = vsel %vm1256, 1, 0
      %v1298 = vsel %vm1257, 1, 0
      %v1299 = vsel %vm1258, 1, 0
      %v1300 = vsel %vm1259, 1, 0
      %v1301 = vsel %vm1260, 1, 0
      %v1302 = vsel %vm1261, 1, 0
      %v1303 = vsel %vm1262, 1, 0
      %v1304 = vsel %vm1263, 1, 0
      %v1305 = vsel %vm1264, 1, 0
      %v1306 = vsel %vm1265, 1, 0
      %v1307 = vsel %vm1266, 1, 0
      %v1308 = vsel %vm1267, 1, 0
      %v1309 = vsel %vm1268, 1, 0
      %v1310 = vsel %vm1269, 1, 0
      %v1311 = vsel %vm1270, 1, 0
      %v1312 = vsel %vm1271, 1, 0
      %v1313 = vsel %vm1272, 1, 0
      %v1314 = vsel %vm1273, 1, 0
      %v1315 = vsel %vm1274, 1, 0
      %v1316 = vsel %vm1275, 1, 0
      %v1317 = vsel %vm1276, 1, 0
      %v1318 = vsel %vm1277, 1, 0
      %v1319 = vsel %vm1278, 1, 0
      %v1320 = vsel %vm1279, 1, 0
      %v1321 = vsel %vm1280, 1, 0
      %v1322 = vsel %vm1281, 1, 0
      %v1323 = vsel %vm1282, 1, 0
      %v1324 = vsel %vm1283, 1, 0
      %v1325 = vsel %vm1284, 1, 0
      %v1326 = vsel %vm1285, 1, 0
      %v1327 = vsel %vm1286, 1, 0
      %v1328 = vsel %vm1287, 1, 0
      %v1329 = vsel %vm1288, 1, 0
      %vm1330 = vcmp.eq.s32.totalorder %v1289, 1
      %vm1331 = vcmp.eq.s32.totalorder %v1290, 1
      %vm1332 = vcmp.eq.s32.totalorder %v1291, 1
      %vm1333 = vcmp.eq.s32.totalorder %v1292, 1
      %vm1334 = vcmp.eq.s32.totalorder %v1293, 1
      %vm1335 = vcmp.eq.s32.totalorder %v1294, 1
      %vm1336 = vcmp.eq.s32.totalorder %v1295, 1
      %vm1337 = vcmp.eq.s32.totalorder %v1296, 1
      %vm1338 = vcmp.eq.s32.totalorder %v1297, 1
      %vm1339 = vcmp.eq.s32.totalorder %v1298, 1
      %vm1340 = vcmp.eq.s32.totalorder %v1299, 1
      %vm1341 = vcmp.eq.s32.totalorder %v1300, 1
      %vm1342 = vcmp.eq.s32.totalorder %v1301, 1
      %vm1343 = vcmp.eq.s32.totalorder %v1302, 1
      %vm1344 = vcmp.eq.s32.totalorder %v1303, 1
      %vm1345 = vcmp.eq.s32.totalorder %v1304, 1
      %vm1346 = vcmp.eq.s32.totalorder %v1305, 1
      %vm1347 = vcmp.eq.s32.totalorder %v1306, 1
      %vm1348 = vcmp.eq.s32.totalorder %v1307, 1
      %vm1349 = vcmp.eq.s32.totalorder %v1308, 1
      %vm1350 = vcmp.eq.s32.totalorder %v1309, 1
      %vm1351 = vcmp.eq.s32.totalorder %v1310, 1
      %vm1352 = vcmp.eq.s32.totalorder %v1311, 1
      %vm1353 = vcmp.eq.s32.totalorder %v1312, 1
      %vm1354 = vcmp.eq.s32.totalorder %v1313, 1
      %vm1355 = vcmp.eq.s32.totalorder %v1314, 1
      %vm1356 = vcmp.eq.s32.totalorder %v1315, 1
      %vm1357 = vcmp.eq.s32.totalorder %v1316, 1
      %vm1358 = vcmp.eq.s32.totalorder %v1317, 1
      %vm1359 = vcmp.eq.s32.totalorder %v1318, 1
      %vm1360 = vcmp.eq.s32.totalorder %v1319, 1
      %vm1361 = vcmp.eq.s32.totalorder %v1320, 1
      %vm1362 = vcmp.eq.s32.totalorder %v1321, 1
      %vm1363 = vcmp.eq.s32.totalorder %v1322, 1
      %vm1364 = vcmp.eq.s32.totalorder %v1323, 1
      %vm1365 = vcmp.eq.s32.totalorder %v1324, 1
      %vm1366 = vcmp.eq.s32.totalorder %v1325, 1
      %vm1367 = vcmp.eq.s32.totalorder %v1326, 1
      %vm1368 = vcmp.eq.s32.totalorder %v1327, 1
      %vm1369 = vcmp.eq.s32.totalorder %v1328, 1
      %vm1370 = vcmp.eq.s32.totalorder %v1329, 1
      %v1371 = vsel %vm1330, %v672, 0.0
      %v1372 = vsel %vm1331, %v673, 0.0
      %v1373 = vsel %vm1332, %v674, 0.0
      %v1374 = vsel %vm1333, %v675, 0.0
      %v1375 = vsel %vm1334, %v676, 0.0
      %v1376 = vsel %vm1335, %v677, 0.0
      %v1377 = vsel %vm1336, %v678, 0.0
      %v1378 = vsel %vm1337, %v679, 0.0
      %v1379 = vsel %vm1338, %v680, 0.0
      %v1380 = vsel %vm1339, %v681, 0.0
      %v1381 = vsel %vm1340, %v682, 0.0
      %v1382 = vsel %vm1341, %v683, 0.0
      %v1383 = vsel %vm1342, %v684, 0.0
      %v1384 = vsel %vm1343, %v685, 0.0
      %v1385 = vsel %vm1344, %v686, 0.0
      %v1386 = vsel %vm1345, %v687, 0.0
      %v1387 = vsel %vm1346, %v688, 0.0
      %v1388 = vsel %vm1347, %v689, 0.0
      %v1389 = vsel %vm1348, %v690, 0.0
      %v1390 = vsel %vm1349, %v691, 0.0
      %v1391 = vsel %vm1350, %v692, 0.0
      %v1392 = vsel %vm1351, %v693, 0.0
      %v1393 = vsel %vm1352, %v694, 0.0
      %v1394 = vsel %vm1353, %v695, 0.0
      %v1395 = vsel %vm1354, %v696, 0.0
      %v1396 = vsel %vm1355, %v697, 0.0
      %v1397 = vsel %vm1356, %v698, 0.0
      %v1398 = vsel %vm1357, %v699, 0.0
      %v1399 = vsel %vm1358, %v700, 0.0
      %v1400 = vsel %vm1359, %v701, 0.0
      %v1401 = vsel %vm1360, %v702, 0.0
      %v1402 = vsel %vm1361, %v703, 0.0
      %v1403 = vsel %vm1362, %v704, 0.0
      %v1404 = vsel %vm1363, %v705, 0.0
      %v1405 = vsel %vm1364, %v706, 0.0
      %v1406 = vsel %vm1365, %v707, 0.0
      %v1407 = vsel %vm1366, %v708, 0.0
      %v1408 = vsel %vm1367, %v709, 0.0
      %v1409 = vsel %vm1368, %v710, 0.0
      %v1410 = vsel %vm1369, %v711, 0.0
      %v1411 = vsel %vm1370, %v712, 0.0
      %1412 = vst.msk [vmem:[#allocation2] sm:$0xff] %vm404, %v1371
      %1413 = vst.msk [vmem:[#allocation2 + $0x8] sm:$0xff] %vm404, %v1372
      %1414 = vst.msk [vmem:[#allocation2 + $0x10] sm:$0xff] %vm404, %v1373
      %1415 = vst.msk [vmem:[#allocation2 + $0x18] sm:$0xff] %vm404, %v1374
      %1416 = vst.msk [vmem:[#allocation2 + $0x20] sm:$0xff] %vm404, %v1375
      %1417 = vst.msk [vmem:[#allocation2 + $0x28] sm:$0xff] %vm404, %v1376
      %1418 = vst.msk [vmem:[#allocation2 + $0x30] sm:$0xff] %vm404, %v1377
      %1419 = vst.msk [vmem:[#allocation2 + $0x38] sm:$0xff] %vm404, %v1378
      %1420 = vst.msk [vmem:[#allocation2 + $0x40] sm:$0xff] %vm404, %v1379
      %1421 = vst.msk [vmem:[#allocation2 + $0x48] sm:$0xff] %vm404, %v1380
      %1422 = vst.msk [vmem:[#allocation2 + $0x50] sm:$0xff] %vm404, %v1381
      %1423 = vst.msk [vmem:[#allocation2 + $0x58] sm:$0xff] %vm404, %v1382
      %1424 = vst.msk [vmem:[#allocation2 + $0x60] sm:$0xff] %vm404, %v1383
      %1425 = vst.msk [vmem:[#allocation2 + $0x68] sm:$0xff] %vm404, %v1384
      %1426 = vst.msk [vmem:[#allocation2 + $0x70] sm:$0xff] %vm404, %v1385
      %1427 = vst.msk [vmem:[#allocation2 + $0x78] sm:$0xff] %vm404, %v1386
      %1428 = vst.msk [vmem:[#allocation2 + $0x80] sm:$0xff] %vm404, %v1387
      %1429 = vst.msk [vmem:[#allocation2 + $0x88] sm:$0xff] %vm404, %v1388
      %1430 = vst.msk [vmem:[#allocation2 + $0x90] sm:$0xff] %vm404, %v1389
      %1431 = vst.msk [vmem:[#allocation2 + $0x98] sm:$0xff] %vm404, %v1390
      %1432 = vst.msk [vmem:[#allocation2 + $0xa0] sm:$0xff] %vm404, %v1391
      %1433 = vst.msk [vmem:[#allocation2 + $0xa8] sm:$0xff] %vm404, %v1392
      %1434 = vst.msk [vmem:[#allocation2 + $0xb0] sm:$0xff] %vm404, %v1393
      %1435 = vst.msk [vmem:[#allocation2 + $0xb8] sm:$0xff] %vm404, %v1394
      %1436 = vst.msk [vmem:[#allocation2 + $0xc0] sm:$0xff] %vm404, %v1395
      %1437 = vst.msk [vmem:[#allocation2 + $0xc8] sm:$0xff] %vm404, %v1396
      %1438 = vst.msk [vmem:[#allocation2 + $0xd0] sm:$0xff] %vm404, %v1397
      %1439 = vst.msk [vmem:[#allocation2 + $0xd8] sm:$0xff] %vm404, %v1398
      %1440 = vst.msk [vmem:[#allocation2 + $0xe0] sm:$0xff] %vm404, %v1399
      %1441 = vst.msk [vmem:[#allocation2 + $0xe8] sm:$0xff] %vm404, %v1400
      %1442 = vst.msk [vmem:[#allocation2 + $0xf0] sm:$0xff] %vm404, %v1401
      %1443 = vst.msk [vmem:[#allocation2 + $0xf8] sm:$0xff] %vm404, %v1402
      %1444 = vst.msk [vmem:[#allocation2 + $0x100] sm:$0xff] %vm404, %v1403
      %1445 = vst.msk [vmem:[#allocation2 + $0x108] sm:$0xff] %vm404, %v1404
      %1446 = vst.msk [vmem:[#allocation2 + $0x110] sm:$0xff] %vm404, %v1405
      %1447 = vst.msk [vmem:[#allocation2 + $0x118] sm:$0xff] %vm404, %v1406
      %1448 = vst.msk [vmem:[#allocation2 + $0x120] sm:$0xff] %vm404, %v1407
      %1449 = vst.msk [vmem:[#allocation2 + $0x128] sm:$0xff] %vm404, %v1408
      %1450 = vst.msk [vmem:[#allocation2 + $0x130] sm:$0xff] %vm404, %v1409
      %1451 = vst.msk [vmem:[#allocation2 + $0x138] sm:$0xff] %vm404, %v1410
      %vm1452 = vcmask 29696
      %1453 = vst.msk [vmem:[#allocation2 + $0x140] sm:$0x3f] %vm1452, %v1411
      %v1454 = vld [vmem:[#allocation2] sm:$0xff]
      %v1455 = vld [vmem:[#allocation2 + $0x8] sm:$0xff]
      %v1456 = vld [vmem:[#allocation2 + $0x10] sm:$0xff]
      %v1457 = vld [vmem:[#allocation2 + $0x18] sm:$0xff]
      %v1458 = vld [vmem:[#allocation2 + $0x20] sm:$0xff]
      %v1459 = vld [vmem:[#allocation2 + $0x28] sm:$0xff]
      %v1460 = vld [vmem:[#allocation2 + $0x30] sm:$0xff]
      %v1461 = vld [vmem:[#allocation2 + $0x38] sm:$0xff]
      %v1462 = vld [vmem:[#allocation2 + $0x40] sm:$0xff]
      %v1463 = vld [vmem:[#allocation2 + $0x48] sm:$0xff]
      %v1464 = vld [vmem:[#allocation2 + $0x50] sm:$0xff]
      %v1465 = vld [vmem:[#allocation2 + $0x58] sm:$0xff]
      %v1466 = vld [vmem:[#allocation2 + $0x60] sm:$0xff]
      %v1467 = vld [vmem:[#allocation2 + $0x68] sm:$0xff]
      %v1468 = vld [vmem:[#allocation2 + $0x70] sm:$0xff]
      %v1469 = vld [vmem:[#allocation2 + $0x78] sm:$0xff]
      %v1470 = vld [vmem:[#allocation2 + $0x80] sm:$0xff]
      %v1471 = vld [vmem:[#allocation2 + $0x88] sm:$0xff]
      %v1472 = vld [vmem:[#allocation2 + $0x90] sm:$0xff]
      %v1473 = vld [vmem:[#allocation2 + $0x98] sm:$0xff]
      %v1474 = vld [vmem:[#allocation2 + $0xa0] sm:$0xff]
      %v1475 = vld [vmem:[#allocation2 + $0xa8] sm:$0xff]
      %v1476 = vld [vmem:[#allocation2 + $0xb0] sm:$0xff]
      %v1477 = vld [vmem:[#allocation2 + $0xb8] sm:$0xff]
      %v1478 = vld [vmem:[#allocation2 + $0xc0] sm:$0xff]
      %v1479 = vld [vmem:[#allocation2 + $0xc8] sm:$0xff]
      %v1480 = vld [vmem:[#allocation2 + $0xd0] sm:$0xff]
      %v1481 = vld [vmem:[#allocation2 + $0xd8] sm:$0xff]
      %v1482 = vld [vmem:[#allocation2 + $0xe0] sm:$0xff]
      %v1483 = vld [vmem:[#allocation2 + $0xe8] sm:$0xff]
      %v1484 = vld [vmem:[#allocation2 + $0xf0] sm:$0xff]
      %v1485 = vld [vmem:[#allocation2 + $0xf8] sm:$0xff]
      %v1486 = vld [vmem:[#allocation2 + $0x100] sm:$0xff]
      %v1487 = vld [vmem:[#allocation2 + $0x108] sm:$0xff]
      %v1488 = vld [vmem:[#allocation2 + $0x110] sm:$0xff]
      %v1489 = vld [vmem:[#allocation2 + $0x118] sm:$0xff]
      %v1490 = vld [vmem:[%s3] sm:$0xf]
      %v1491 = vld [vmem:[#allocation2 + $0x1] sm:$0xff]
      %v1492 = vld [vmem:[#allocation2 + $0x9] sm:$0xff]
      %v1493 = vld [vmem:[#allocation2 + $0x11] sm:$0xff]
      %v1494 = vld [vmem:[#allocation2 + $0x19] sm:$0xff]
      %v1495 = vld [vmem:[#allocation2 + $0x21] sm:$0xff]
      %v1496 = vld [vmem:[#allocation2 + $0x29] sm:$0xff]
      %v1497 = vld [vmem:[#allocation2 + $0x31] sm:$0xff]
      %v1498 = vld [vmem:[#allocation2 + $0x39] sm:$0xff]
      %v1499 = vld [vmem:[#allocation2 + $0x41] sm:$0xff]
      %v1500 = vld [vmem:[#allocation2 + $0x49] sm:$0xff]
      %v1501 = vld [vmem:[#allocation2 + $0x51] sm:$0xff]
      %v1502 = vld [vmem:[#allocation2 + $0x59] sm:$0xff]
      %v1503 = vld [vmem:[#allocation2 + $0x61] sm:$0xff]
      %v1504 = vld [vmem:[#allocation2 + $0x69] sm:$0xff]
      %v1505 = vld [vmem:[#allocation2 + $0x71] sm:$0xff]
      %v1506 = vld [vmem:[#allocation2 + $0x79] sm:$0xff]
      %v1507 = vld [vmem:[#allocation2 + $0x81] sm:$0xff]
      %v1508 = vld [vmem:[#allocation2 + $0x89] sm:$0xff]
      %v1509 = vld [vmem:[#allocation2 + $0x91] sm:$0xff]
      %v1510 = vld [vmem:[#allocation2 + $0x99] sm:$0xff]
      %v1511 = vld [vmem:[#allocation2 + $0xa1] sm:$0xff]
      %v1512 = vld [vmem:[#allocation2 + $0xa9] sm:$0xff]
      %v1513 = vld [vmem:[#allocation2 + $0xb1] sm:$0xff]
      %v1514 = vld [vmem:[#allocation2 + $0xb9] sm:$0xff]
      %v1515 = vld [vmem:[#allocation2 + $0xc1] sm:$0xff]
      %v1516 = vld [vmem:[#allocation2 + $0xc9] sm:$0xff]
      %v1517 = vld [vmem:[#allocation2 + $0xd1] sm:$0xff]
      %v1518 = vld [vmem:[#allocation2 + $0xd9] sm:$0xff]
      %v1519 = vld [vmem:[#allocation2 + $0xe1] sm:$0xff]
      %v1520 = vld [vmem:[#allocation2 + $0xe9] sm:$0xff]
      %v1521 = vld [vmem:[#allocation2 + $0xf1] sm:$0xff]
      %v1522 = vld [vmem:[#allocation2 + $0xf9] sm:$0xff]
      %v1523 = vld [vmem:[#allocation2 + $0x101] sm:$0xff]
      %v1524 = vld [vmem:[#allocation2 + $0x109] sm:$0xff]
      %v1525 = vld [vmem:[#allocation2 + $0x111] sm:$0xff]
      %v1526 = vld [vmem:[#allocation2 + $0x119] sm:$0xff]
      %s1527 = scalar_lea.vmem %s3, 4
      %v1528 = vld [vmem:[%s1527] sm:$0xf]
      %v1530 = vsel %vm404, %v1491, 0
      %v1533 = vsel %vm404, %v1492, 0
      %v1536 = vsel %vm404, %v1493, 0
      %v1539 = vsel %vm404, %v1494, 0
      %v1542 = vsel %vm404, %v1495, 0
      %v1545 = vsel %vm404, %v1496, 0
      %v1548 = vsel %vm404, %v1497, 0
      %v1551 = vsel %vm404, %v1498, 0
      %v1554 = vsel %vm404, %v1499, 0
      %v1557 = vsel %vm404, %v1500, 0
      %v1560 = vsel %vm404, %v1501, 0
      %v1563 = vsel %vm404, %v1502, 0
      %v1566 = vsel %vm404, %v1503, 0
      %v1569 = vsel %vm404, %v1504, 0
      %v1572 = vsel %vm404, %v1505, 0
      %v1575 = vsel %vm404, %v1506, 0
      %v1578 = vsel %vm404, %v1507, 0
      %v1581 = vsel %vm404, %v1508, 0
      %v1584 = vsel %vm404, %v1509, 0
      %v1587 = vsel %vm404, %v1510, 0
      %v1590 = vsel %vm404, %v1511, 0
      %v1593 = vsel %vm404, %v1512, 0
      %v1596 = vsel %vm404, %v1513, 0
      %v1599 = vsel %vm404, %v1514, 0
      %v1602 = vsel %vm404, %v1515, 0
      %v1605 = vsel %vm404, %v1516, 0
      %v1608 = vsel %vm404, %v1517, 0
      %v1611 = vsel %vm404, %v1518, 0
      %v1614 = vsel %vm404, %v1519, 0
      %v1617 = vsel %vm404, %v1520, 0
      %v1620 = vsel %vm404, %v1521, 0
      %v1623 = vsel %vm404, %v1522, 0
      %v1626 = vsel %vm404, %v1523, 0
      %v1629 = vsel %vm404, %v1524, 0
      %v1632 = vsel %vm404, %v1525, 0
      %v1635 = vsel %vm404, %v1526, 0
      %v1638 = vsel %vm528, %v1528, 0
      %1640 = vmatpush.msra.mxu0 0.0
      %1641 = vmatpush.msra.mxu0 0.0
      %1642 = vmatpush.msra.mxu0 0.0
      %1643 = vmatpush.msra.mxu0 0.0
      %1644 = vmatpush.msra.mxu0 0.0
      %1645 = vmatpush.msra.mxu0 0.0
      %1646 = vmatpush.msra.mxu0 0.0
      %1647 = vmatpush.msra.mxu0 0.0
      %1648 = vmatpush.msra.mxu0 0.0
      %1649 = vmatpush.msra.mxu0 0.0
      %1650 = vmatpush.msra.mxu0 0.0
      %1651 = vmatpush.msra.mxu0 0.0
      %1652 = vmatpush.msra.mxu0 0.0
      %1653 = vmatpush.msra.mxu0 0.0
      %1654 = vmatpush.msra.mxu0 0.0
      %1655 = vmatpush.msra.mxu0 %v1638
      %1656 = vmatmul.f32.gmra.mxu0 %v1530
      %v1657 = vpop.f32.mrf.mxu0
      %v1658 = vadd.f32 0.0, %v1657
      %1659 = vmatmul.f32.gmra.mxu0 %v1533
      %v1660 = vpop.f32.mrf.mxu0
      %v1661 = vadd.f32 0.0, %v1660
      %1662 = vmatmul.f32.gmra.mxu0 %v1536
      %v1663 = vpop.f32.mrf.mxu0
      %v1664 = vadd.f32 0.0, %v1663
      %1665 = vmatmul.f32.gmra.mxu0 %v1539
      %v1666 = vpop.f32.mrf.mxu0
      %v1667 = vadd.f32 0.0, %v1666
      %1668 = vmatmul.f32.gmra.mxu0 %v1542
      %v1669 = vpop.f32.mrf.mxu0
      %v1670 = vadd.f32 0.0, %v1669
      %1671 = vmatmul.f32.gmra.mxu0 %v1545
      %v1672 = vpop.f32.mrf.mxu0
      %v1673 = vadd.f32 0.0, %v1672
      %1674 = vmatmul.f32.gmra.mxu0 %v1548
      %v1675 = vpop.f32.mrf.mxu0
      %v1676 = vadd.f32 0.0, %v1675
      %1677 = vmatmul.f32.gmra.mxu0 %v1551
      %v1678 = vpop.f32.mrf.mxu0
      %v1679 = vadd.f32 0.0, %v1678
      %1680 = vmatmul.f32.gmra.mxu0 %v1554
      %v1681 = vpop.f32.mrf.mxu0
      %v1682 = vadd.f32 0.0, %v1681
      %1683 = vmatmul.f32.gmra.mxu0 %v1557
      %v1684 = vpop.f32.mrf.mxu0
      %v1685 = vadd.f32 0.0, %v1684
      %1686 = vmatmul.f32.gmra.mxu0 %v1560
      %v1687 = vpop.f32.mrf.mxu0
      %v1688 = vadd.f32 0.0, %v1687
      %1689 = vmatmul.f32.gmra.mxu0 %v1563
      %v1690 = vpop.f32.mrf.mxu0
      %v1691 = vadd.f32 0.0, %v1690
      %1692 = vmatmul.f32.gmra.mxu0 %v1566
      %v1693 = vpop.f32.mrf.mxu0
      %v1694 = vadd.f32 0.0, %v1693
      %1695 = vmatmul.f32.gmra.mxu0 %v1569
      %v1696 = vpop.f32.mrf.mxu0
      %v1697 = vadd.f32 0.0, %v1696
      %1698 = vmatmul.f32.gmra.mxu0 %v1572
      %v1699 = vpop.f32.mrf.mxu0
      %v1700 = vadd.f32 0.0, %v1699
      %1701 = vmatmul.f32.gmra.mxu0 %v1575
      %v1702 = vpop.f32.mrf.mxu0
      %v1703 = vadd.f32 0.0, %v1702
      %1704 = vmatmul.f32.gmra.mxu0 %v1578
      %v1705 = vpop.f32.mrf.mxu0
      %v1706 = vadd.f32 0.0, %v1705
      %1707 = vmatmul.f32.gmra.mxu0 %v1581
      %v1708 = vpop.f32.mrf.mxu0
      %v1709 = vadd.f32 0.0, %v1708
      %1710 = vmatmul.f32.gmra.mxu0 %v1584
      %v1711 = vpop.f32.mrf.mxu0
      %v1712 = vadd.f32 0.0, %v1711
      %1713 = vmatmul.f32.gmra.mxu0 %v1587
      %v1714 = vpop.f32.mrf.mxu0
      %v1715 = vadd.f32 0.0, %v1714
      %1716 = vmatmul.f32.gmra.mxu0 %v1590
      %v1717 = vpop.f32.mrf.mxu0
      %v1718 = vadd.f32 0.0, %v1717
      %1719 = vmatmul.f32.gmra.mxu0 %v1593
      %v1720 = vpop.f32.mrf.mxu0
      %v1721 = vadd.f32 0.0, %v1720
      %1722 = vmatmul.f32.gmra.mxu0 %v1596
      %v1723 = vpop.f32.mrf.mxu0
      %v1724 = vadd.f32 0.0, %v1723
      %1725 = vmatmul.f32.gmra.mxu0 %v1599
      %v1726 = vpop.f32.mrf.mxu0
      %v1727 = vadd.f32 0.0, %v1726
      %1728 = vmatmul.f32.gmra.mxu0 %v1602
      %v1729 = vpop.f32.mrf.mxu0
      %v1730 = vadd.f32 0.0, %v1729
      %1731 = vmatmul.f32.gmra.mxu0 %v1605
      %v1732 = vpop.f32.mrf.mxu0
      %v1733 = vadd.f32 0.0, %v1732
      %1734 = vmatmul.f32.gmra.mxu0 %v1608
      %v1735 = vpop.f32.mrf.mxu0
      %v1736 = vadd.f32 0.0, %v1735
      %1737 = vmatmul.f32.gmra.mxu0 %v1611
      %v1738 = vpop.f32.mrf.mxu0
      %v1739 = vadd.f32 0.0, %v1738
      %1740 = vmatmul.f32.gmra.mxu0 %v1614
      %v1741 = vpop.f32.mrf.mxu0
      %v1742 = vadd.f32 0.0, %v1741
      %1743 = vmatmul.f32.gmra.mxu0 %v1617
      %v1744 = vpop.f32.mrf.mxu0
      %v1745 = vadd.f32 0.0, %v1744
      %1746 = vmatmul.f32.gmra.mxu0 %v1620
      %v1747 = vpop.f32.mrf.mxu0
      %v1748 = vadd.f32 0.0, %v1747
      %1749 = vmatmul.f32.gmra.mxu0 %v1623
      %v1750 = vpop.f32.mrf.mxu0
      %v1751 = vadd.f32 0.0, %v1750
      %1752 = vmatmul.f32.gmra.mxu0 %v1626
      %v1753 = vpop.f32.mrf.mxu0
      %v1754 = vadd.f32 0.0, %v1753
      %1755 = vmatmul.f32.gmra.mxu0 %v1629
      %v1756 = vpop.f32.mrf.mxu0
      %v1757 = vadd.f32 0.0, %v1756
      %1758 = vmatmul.f32.gmra.mxu0 %v1632
      %v1759 = vpop.f32.mrf.mxu0
      %v1760 = vadd.f32 0.0, %v1759
      %1761 = vmatmul.f32.gmra.mxu0 %v1635
      %v1762 = vpop.f32.mrf.mxu0
      %v1763 = vadd.f32 0.0, %v1762
      %1764 = vdwg.mxu0
      %v1766 = vsel %vm404, %v1454, 0
      %v1769 = vsel %vm404, %v1455, 0
      %v1772 = vsel %vm404, %v1456, 0
      %v1775 = vsel %vm404, %v1457, 0
      %v1778 = vsel %vm404, %v1458, 0
      %v1781 = vsel %vm404, %v1459, 0
      %v1784 = vsel %vm404, %v1460, 0
      %v1787 = vsel %vm404, %v1461, 0
      %v1790 = vsel %vm404, %v1462, 0
      %v1793 = vsel %vm404, %v1463, 0
      %v1796 = vsel %vm404, %v1464, 0
      %v1799 = vsel %vm404, %v1465, 0
      %v1802 = vsel %vm404, %v1466, 0
      %v1805 = vsel %vm404, %v1467, 0
      %v1808 = vsel %vm404, %v1468, 0
      %v1811 = vsel %vm404, %v1469, 0
      %v1814 = vsel %vm404, %v1470, 0
      %v1817 = vsel %vm404, %v1471, 0
      %v1820 = vsel %vm404, %v1472, 0
      %v1823 = vsel %vm404, %v1473, 0
      %v1826 = vsel %vm404, %v1474, 0
      %v1829 = vsel %vm404, %v1475, 0
      %v1832 = vsel %vm404, %v1476, 0
      %v1835 = vsel %vm404, %v1477, 0
      %v1838 = vsel %vm404, %v1478, 0
      %v1841 = vsel %vm404, %v1479, 0
      %v1844 = vsel %vm404, %v1480, 0
      %v1847 = vsel %vm404, %v1481, 0
      %v1850 = vsel %vm404, %v1482, 0
      %v1853 = vsel %vm404, %v1483, 0
      %v1856 = vsel %vm404, %v1484, 0
      %v1859 = vsel %vm404, %v1485, 0
      %v1862 = vsel %vm404, %v1486, 0
      %v1865 = vsel %vm404, %v1487, 0
      %v1868 = vsel %vm404, %v1488, 0
      %v1871 = vsel %vm404, %v1489, 0
      %v1874 = vsel %vm528, %v1490, 0
      %1876 = vmatpush.msra.mxu0 0.0
      %1877 = vmatpush.msra.mxu0 0.0
      %1878 = vmatpush.msra.mxu0 0.0
      %1879 = vmatpush.msra.mxu0 0.0
      %1880 = vmatpush.msra.mxu0 0.0
      %1881 = vmatpush.msra.mxu0 0.0
      %1882 = vmatpush.msra.mxu0 0.0
      %1883 = vmatpush.msra.mxu0 0.0
      %1884 = vmatpush.msra.mxu0 0.0
      %1885 = vmatpush.msra.mxu0 0.0
      %1886 = vmatpush.msra.mxu0 0.0
      %1887 = vmatpush.msra.mxu0 0.0
      %1888 = vmatpush.msra.mxu0 0.0
      %1889 = vmatpush.msra.mxu0 0.0
      %1890 = vmatpush.msra.mxu0 0.0
      %1891 = vmatpush.msra.mxu0 %v1874
      %1892 = vmatmul.f32.gmra.mxu0 %v1766
      %v1893 = vpop.f32.mrf.mxu0
      %v1894 = vadd.f32 %v1658, %v1893
      %1895 = vmatmul.f32.gmra.mxu0 %v1769
      %v1896 = vpop.f32.mrf.mxu0
      %v1897 = vadd.f32 %v1661, %v1896
      %1898 = vmatmul.f32.gmra.mxu0 %v1772
      %v1899 = vpop.f32.mrf.mxu0
      %v1900 = vadd.f32 %v1664, %v1899
      %1901 = vmatmul.f32.gmra.mxu0 %v1775
      %v1902 = vpop.f32.mrf.mxu0
      %v1903 = vadd.f32 %v1667, %v1902
      %1904 = vmatmul.f32.gmra.mxu0 %v1778
      %v1905 = vpop.f32.mrf.mxu0
      %v1906 = vadd.f32 %v1670, %v1905
      %1907 = vmatmul.f32.gmra.mxu0 %v1781
      %v1908 = vpop.f32.mrf.mxu0
      %v1909 = vadd.f32 %v1673, %v1908
      %1910 = vmatmul.f32.gmra.mxu0 %v1784
      %v1911 = vpop.f32.mrf.mxu0
      %v1912 = vadd.f32 %v1676, %v1911
      %1913 = vmatmul.f32.gmra.mxu0 %v1787
      %v1914 = vpop.f32.mrf.mxu0
      %v1915 = vadd.f32 %v1679, %v1914
      %1916 = vmatmul.f32.gmra.mxu0 %v1790
      %v1917 = vpop.f32.mrf.mxu0
      %v1918 = vadd.f32 %v1682, %v1917
      %1919 = vmatmul.f32.gmra.mxu0 %v1793
      %v1920 = vpop.f32.mrf.mxu0
      %v1921 = vadd.f32 %v1685, %v1920
      %1922 = vmatmul.f32.gmra.mxu0 %v1796
      %v1923 = vpop.f32.mrf.mxu0
      %v1924 = vadd.f32 %v1688, %v1923
      %1925 = vmatmul.f32.gmra.mxu0 %v1799
      %v1926 = vpop.f32.mrf.mxu0
      %v1927 = vadd.f32 %v1691, %v1926
      %1928 = vmatmul.f32.gmra.mxu0 %v1802
      %v1929 = vpop.f32.mrf.mxu0
      %v1930 = vadd.f32 %v1694, %v1929
      %1931 = vmatmul.f32.gmra.mxu0 %v1805
      %v1932 = vpop.f32.mrf.mxu0
      %v1933 = vadd.f32 %v1697, %v1932
      %1934 = vmatmul.f32.gmra.mxu0 %v1808
      %v1935 = vpop.f32.mrf.mxu0
      %v1936 = vadd.f32 %v1700, %v1935
      %1937 = vmatmul.f32.gmra.mxu0 %v1811
      %v1938 = vpop.f32.mrf.mxu0
      %v1939 = vadd.f32 %v1703, %v1938
      %1940 = vmatmul.f32.gmra.mxu0 %v1814
      %v1941 = vpop.f32.mrf.mxu0
      %v1942 = vadd.f32 %v1706, %v1941
      %1943 = vmatmul.f32.gmra.mxu0 %v1817
      %v1944 = vpop.f32.mrf.mxu0
      %v1945 = vadd.f32 %v1709, %v1944
      %1946 = vmatmul.f32.gmra.mxu0 %v1820
      %v1947 = vpop.f32.mrf.mxu0
      %v1948 = vadd.f32 %v1712, %v1947
      %1949 = vmatmul.f32.gmra.mxu0 %v1823
      %v1950 = vpop.f32.mrf.mxu0
      %v1951 = vadd.f32 %v1715, %v1950
      %1952 = vmatmul.f32.gmra.mxu0 %v1826
      %v1953 = vpop.f32.mrf.mxu0
      %v1954 = vadd.f32 %v1718, %v1953
      %1955 = vmatmul.f32.gmra.mxu0 %v1829
      %v1956 = vpop.f32.mrf.mxu0
      %v1957 = vadd.f32 %v1721, %v1956
      %1958 = vmatmul.f32.gmra.mxu0 %v1832
      %v1959 = vpop.f32.mrf.mxu0
      %v1960 = vadd.f32 %v1724, %v1959
      %1961 = vmatmul.f32.gmra.mxu0 %v1835
      %v1962 = vpop.f32.mrf.mxu0
      %v1963 = vadd.f32 %v1727, %v1962
      %1964 = vmatmul.f32.gmra.mxu0 %v1838
      %v1965 = vpop.f32.mrf.mxu0
      %v1966 = vadd.f32 %v1730, %v1965
      %1967 = vmatmul.f32.gmra.mxu0 %v1841
      %v1968 = vpop.f32.mrf.mxu0
      %v1969 = vadd.f32 %v1733, %v1968
      %1970 = vmatmul.f32.gmra.mxu0 %v1844
      %v1971 = vpop.f32.mrf.mxu0
      %v1972 = vadd.f32 %v1736, %v1971
      %1973 = vmatmul.f32.gmra.mxu0 %v1847
      %v1974 = vpop.f32.mrf.mxu0
      %v1975 = vadd.f32 %v1739, %v1974
      %1976 = vmatmul.f32.gmra.mxu0 %v1850
      %v1977 = vpop.f32.mrf.mxu0
      %v1978 = vadd.f32 %v1742, %v1977
      %1979 = vmatmul.f32.gmra.mxu0 %v1853
      %v1980 = vpop.f32.mrf.mxu0
      %v1981 = vadd.f32 %v1745, %v1980
      %1982 = vmatmul.f32.gmra.mxu0 %v1856
      %v1983 = vpop.f32.mrf.mxu0
      %v1984 = vadd.f32 %v1748, %v1983
      %1985 = vmatmul.f32.gmra.mxu0 %v1859
      %v1986 = vpop.f32.mrf.mxu0
      %v1987 = vadd.f32 %v1751, %v1986
      %1988 = vmatmul.f32.gmra.mxu0 %v1862
      %v1989 = vpop.f32.mrf.mxu0
      %v1990 = vadd.f32 %v1754, %v1989
      %1991 = vmatmul.f32.gmra.mxu0 %v1865
      %v1992 = vpop.f32.mrf.mxu0
      %v1993 = vadd.f32 %v1757, %v1992
      %1994 = vmatmul.f32.gmra.mxu0 %v1868
      %v1995 = vpop.f32.mrf.mxu0
      %v1996 = vadd.f32 %v1760, %v1995
      %1997 = vmatmul.f32.gmra.mxu0 %v1871
      %v1998 = vpop.f32.mrf.mxu0
      %v1999 = vadd.f32 %v1763, %v1998
      %2000 = vdwg.mxu0
      %v2001 = vld [vmem:[#allocation2 + $0x2] sm:$0xff]
      %v2002 = vld [vmem:[#allocation2 + $0xa] sm:$0xff]
      %v2003 = vld [vmem:[#allocation2 + $0x12] sm:$0xff]
      %v2004 = vld [vmem:[#allocation2 + $0x1a] sm:$0xff]
      %v2005 = vld [vmem:[#allocation2 + $0x22] sm:$0xff]
      %v2006 = vld [vmem:[#allocation2 + $0x2a] sm:$0xff]
      %v2007 = vld [vmem:[#allocation2 + $0x32] sm:$0xff]
      %v2008 = vld [vmem:[#allocation2 + $0x3a] sm:$0xff]
      %v2009 = vld [vmem:[#allocation2 + $0x42] sm:$0xff]
      %v2010 = vld [vmem:[#allocation2 + $0x4a] sm:$0xff]
      %v2011 = vld [vmem:[#allocation2 + $0x52] sm:$0xff]
      %v2012 = vld [vmem:[#allocation2 + $0x5a] sm:$0xff]
      %v2013 = vld [vmem:[#allocation2 + $0x62] sm:$0xff]
      %v2014 = vld [vmem:[#allocation2 + $0x6a] sm:$0xff]
      %v2015 = vld [vmem:[#allocation2 + $0x72] sm:$0xff]
      %v2016 = vld [vmem:[#allocation2 + $0x7a] sm:$0xff]
      %v2017 = vld [vmem:[#allocation2 + $0x82] sm:$0xff]
      %v2018 = vld [vmem:[#allocation2 + $0x8a] sm:$0xff]
      %v2019 = vld [vmem:[#allocation2 + $0x92] sm:$0xff]
      %v2020 = vld [vmem:[#allocation2 + $0x9a] sm:$0xff]
      %v2021 = vld [vmem:[#allocation2 + $0xa2] sm:$0xff]
      %v2022 = vld [vmem:[#allocation2 + $0xaa] sm:$0xff]
      %v2023 = vld [vmem:[#allocation2 + $0xb2] sm:$0xff]
      %v2024 = vld [vmem:[#allocation2 + $0xba] sm:$0xff]
      %v2025 = vld [vmem:[#allocation2 + $0xc2] sm:$0xff]
      %v2026 = vld [vmem:[#allocation2 + $0xca] sm:$0xff]
      %v2027 = vld [vmem:[#allocation2 + $0xd2] sm:$0xff]
      %v2028 = vld [vmem:[#allocation2 + $0xda] sm:$0xff]
      %v2029 = vld [vmem:[#allocation2 + $0xe2] sm:$0xff]
      %v2030 = vld [vmem:[#allocation2 + $0xea] sm:$0xff]
      %v2031 = vld [vmem:[#allocation2 + $0xf2] sm:$0xff]
      %v2032 = vld [vmem:[#allocation2 + $0xfa] sm:$0xff]
      %v2033 = vld [vmem:[#allocation2 + $0x102] sm:$0xff]
      %v2034 = vld [vmem:[#allocation2 + $0x10a] sm:$0xff]
      %v2035 = vld [vmem:[#allocation2 + $0x112] sm:$0xff]
      %v2036 = vld [vmem:[#allocation2 + $0x11a] sm:$0xff]
      %s2037 = scalar_lea.vmem %s3, 8
      %v2038 = vld [vmem:[%s2037] sm:$0xf]
      %v2040 = vsel %vm404, %v2001, 0
      %v2043 = vsel %vm404, %v2002, 0
      %v2046 = vsel %vm404, %v2003, 0
      %v2049 = vsel %vm404, %v2004, 0
      %v2052 = vsel %vm404, %v2005, 0
      %v2055 = vsel %vm404, %v2006, 0
      %v2058 = vsel %vm404, %v2007, 0
      %v2061 = vsel %vm404, %v2008, 0
      %v2064 = vsel %vm404, %v2009, 0
      %v2067 = vsel %vm404, %v2010, 0
      %v2070 = vsel %vm404, %v2011, 0
      %v2073 = vsel %vm404, %v2012, 0
      %v2076 = vsel %vm404, %v2013, 0
      %v2079 = vsel %vm404, %v2014, 0
      %v2082 = vsel %vm404, %v2015, 0
      %v2085 = vsel %vm404, %v2016, 0
      %v2088 = vsel %vm404, %v2017, 0
      %v2091 = vsel %vm404, %v2018, 0
      %v2094 = vsel %vm404, %v2019, 0
      %v2097 = vsel %vm404, %v2020, 0
      %v2100 = vsel %vm404, %v2021, 0
      %v2103 = vsel %vm404, %v2022, 0
      %v2106 = vsel %vm404, %v2023, 0
      %v2109 = vsel %vm404, %v2024, 0
      %v2112 = vsel %vm404, %v2025, 0
      %v2115 = vsel %vm404, %v2026, 0
      %v2118 = vsel %vm404, %v2027, 0
      %v2121 = vsel %vm404, %v2028, 0
      %v2124 = vsel %vm404, %v2029, 0
      %v2127 = vsel %vm404, %v2030, 0
      %v2130 = vsel %vm404, %v2031, 0
      %v2133 = vsel %vm404, %v2032, 0
      %v2136 = vsel %vm404, %v2033, 0
      %v2139 = vsel %vm404, %v2034, 0
      %v2142 = vsel %vm404, %v2035, 0
      %v2145 = vsel %vm404, %v2036, 0
      %v2148 = vsel %vm528, %v2038, 0
      %2150 = vmatpush.msra.mxu0 0.0
      %2151 = vmatpush.msra.mxu0 0.0
      %2152 = vmatpush.msra.mxu0 0.0
      %2153 = vmatpush.msra.mxu0 0.0
      %2154 = vmatpush.msra.mxu0 0.0
      %2155 = vmatpush.msra.mxu0 0.0
      %2156 = vmatpush.msra.mxu0 0.0
      %2157 = vmatpush.msra.mxu0 0.0
      %2158 = vmatpush.msra.mxu0 0.0
      %2159 = vmatpush.msra.mxu0 0.0
      %2160 = vmatpush.msra.mxu0 0.0
      %2161 = vmatpush.msra.mxu0 0.0
      %2162 = vmatpush.msra.mxu0 0.0
      %2163 = vmatpush.msra.mxu0 0.0
      %2164 = vmatpush.msra.mxu0 0.0
      %2165 = vmatpush.msra.mxu0 %v2148
      %2166 = vmatmul.f32.gmra.mxu0 %v2040
      %v2167 = vpop.f32.mrf.mxu0
      %v2168 = vadd.f32 0.0, %v2167
      %2169 = vmatmul.f32.gmra.mxu0 %v2043
      %v2170 = vpop.f32.mrf.mxu0
      %v2171 = vadd.f32 0.0, %v2170
      %2172 = vmatmul.f32.gmra.mxu0 %v2046
      %v2173 = vpop.f32.mrf.mxu0
      %v2174 = vadd.f32 0.0, %v2173
      %2175 = vmatmul.f32.gmra.mxu0 %v2049
      %v2176 = vpop.f32.mrf.mxu0
      %v2177 = vadd.f32 0.0, %v2176
      %2178 = vmatmul.f32.gmra.mxu0 %v2052
      %v2179 = vpop.f32.mrf.mxu0
      %v2180 = vadd.f32 0.0, %v2179
      %2181 = vmatmul.f32.gmra.mxu0 %v2055
      %v2182 = vpop.f32.mrf.mxu0
      %v2183 = vadd.f32 0.0, %v2182
      %2184 = vmatmul.f32.gmra.mxu0 %v2058
      %v2185 = vpop.f32.mrf.mxu0
      %v2186 = vadd.f32 0.0, %v2185
      %2187 = vmatmul.f32.gmra.mxu0 %v2061
      %v2188 = vpop.f32.mrf.mxu0
      %v2189 = vadd.f32 0.0, %v2188
      %2190 = vmatmul.f32.gmra.mxu0 %v2064
      %v2191 = vpop.f32.mrf.mxu0
      %v2192 = vadd.f32 0.0, %v2191
      %2193 = vmatmul.f32.gmra.mxu0 %v2067
      %v2194 = vpop.f32.mrf.mxu0
      %v2195 = vadd.f32 0.0, %v2194
      %2196 = vmatmul.f32.gmra.mxu0 %v2070
      %v2197 = vpop.f32.mrf.mxu0
      %v2198 = vadd.f32 0.0, %v2197
      %2199 = vmatmul.f32.gmra.mxu0 %v2073
      %v2200 = vpop.f32.mrf.mxu0
      %v2201 = vadd.f32 0.0, %v2200
      %2202 = vmatmul.f32.gmra.mxu0 %v2076
      %v2203 = vpop.f32.mrf.mxu0
      %v2204 = vadd.f32 0.0, %v2203
      %2205 = vmatmul.f32.gmra.mxu0 %v2079
      %v2206 = vpop.f32.mrf.mxu0
      %v2207 = vadd.f32 0.0, %v2206
      %2208 = vmatmul.f32.gmra.mxu0 %v2082
      %v2209 = vpop.f32.mrf.mxu0
      %v2210 = vadd.f32 0.0, %v2209
      %2211 = vmatmul.f32.gmra.mxu0 %v2085
      %v2212 = vpop.f32.mrf.mxu0
      %v2213 = vadd.f32 0.0, %v2212
      %2214 = vmatmul.f32.gmra.mxu0 %v2088
      %v2215 = vpop.f32.mrf.mxu0
      %v2216 = vadd.f32 0.0, %v2215
      %2217 = vmatmul.f32.gmra.mxu0 %v2091
      %v2218 = vpop.f32.mrf.mxu0
      %v2219 = vadd.f32 0.0, %v2218
      %2220 = vmatmul.f32.gmra.mxu0 %v2094
      %v2221 = vpop.f32.mrf.mxu0
      %v2222 = vadd.f32 0.0, %v2221
      %2223 = vmatmul.f32.gmra.mxu0 %v2097
      %v2224 = vpop.f32.mrf.mxu0
      %v2225 = vadd.f32 0.0, %v2224
      %2226 = vmatmul.f32.gmra.mxu0 %v2100
      %v2227 = vpop.f32.mrf.mxu0
      %v2228 = vadd.f32 0.0, %v2227
      %2229 = vmatmul.f32.gmra.mxu0 %v2103
      %v2230 = vpop.f32.mrf.mxu0
      %v2231 = vadd.f32 0.0, %v2230
      %2232 = vmatmul.f32.gmra.mxu0 %v2106
      %v2233 = vpop.f32.mrf.mxu0
      %v2234 = vadd.f32 0.0, %v2233
      %2235 = vmatmul.f32.gmra.mxu0 %v2109
      %v2236 = vpop.f32.mrf.mxu0
      %v2237 = vadd.f32 0.0, %v2236
      %2238 = vmatmul.f32.gmra.mxu0 %v2112
      %v2239 = vpop.f32.mrf.mxu0
      %v2240 = vadd.f32 0.0, %v2239
      %2241 = vmatmul.f32.gmra.mxu0 %v2115
      %v2242 = vpop.f32.mrf.mxu0
      %v2243 = vadd.f32 0.0, %v2242
      %2244 = vmatmul.f32.gmra.mxu0 %v2118
      %v2245 = vpop.f32.mrf.mxu0
      %v2246 = vadd.f32 0.0, %v2245
      %2247 = vmatmul.f32.gmra.mxu0 %v2121
      %v2248 = vpop.f32.mrf.mxu0
      %v2249 = vadd.f32 0.0, %v2248
      %2250 = vmatmul.f32.gmra.mxu0 %v2124
      %v2251 = vpop.f32.mrf.mxu0
      %v2252 = vadd.f32 0.0, %v2251
      %2253 = vmatmul.f32.gmra.mxu0 %v2127
      %v2254 = vpop.f32.mrf.mxu0
      %v2255 = vadd.f32 0.0, %v2254
      %2256 = vmatmul.f32.gmra.mxu0 %v2130
      %v2257 = vpop.f32.mrf.mxu0
      %v2258 = vadd.f32 0.0, %v2257
      %2259 = vmatmul.f32.gmra.mxu0 %v2133
      %v2260 = vpop.f32.mrf.mxu0
      %v2261 = vadd.f32 0.0, %v2260
      %2262 = vmatmul.f32.gmra.mxu0 %v2136
      %v2263 = vpop.f32.mrf.mxu0
      %v2264 = vadd.f32 0.0, %v2263
      %2265 = vmatmul.f32.gmra.mxu0 %v2139
      %v2266 = vpop.f32.mrf.mxu0
      %v2267 = vadd.f32 0.0, %v2266
      %2268 = vmatmul.f32.gmra.mxu0 %v2142
      %v2269 = vpop.f32.mrf.mxu0
      %v2270 = vadd.f32 0.0, %v2269
      %2271 = vmatmul.f32.gmra.mxu0 %v2145
      %v2272 = vpop.f32.mrf.mxu0
      %v2273 = vadd.f32 0.0, %v2272
      %2274 = vdwg.mxu0
      %v2275 = vadd.f32 %v1894, %v2168
      %v2276 = vadd.f32 %v1897, %v2171
      %v2277 = vadd.f32 %v1900, %v2174
      %v2278 = vadd.f32 %v1903, %v2177
      %v2279 = vadd.f32 %v1906, %v2180
      %v2280 = vadd.f32 %v1909, %v2183
      %v2281 = vadd.f32 %v1912, %v2186
      %v2282 = vadd.f32 %v1915, %v2189
      %v2283 = vadd.f32 %v1918, %v2192
      %v2284 = vadd.f32 %v1921, %v2195
      %v2285 = vadd.f32 %v1924, %v2198
      %v2286 = vadd.f32 %v1927, %v2201
      %v2287 = vadd.f32 %v1930, %v2204
      %v2288 = vadd.f32 %v1933, %v2207
      %v2289 = vadd.f32 %v1936, %v2210
      %v2290 = vadd.f32 %v1939, %v2213
      %v2291 = vadd.f32 %v1942, %v2216
      %v2292 = vadd.f32 %v1945, %v2219
      %v2293 = vadd.f32 %v1948, %v2222
      %v2294 = vadd.f32 %v1951, %v2225
      %v2295 = vadd.f32 %v1954, %v2228
      %v2296 = vadd.f32 %v1957, %v2231
      %v2297 = vadd.f32 %v1960, %v2234
      %v2298 = vadd.f32 %v1963, %v2237
      %v2299 = vadd.f32 %v1966, %v2240
      %v2300 = vadd.f32 %v1969, %v2243
      %v2301 = vadd.f32 %v1972, %v2246
      %v2302 = vadd.f32 %v1975, %v2249
      %v2303 = vadd.f32 %v1978, %v2252
      %v2304 = vadd.f32 %v1981, %v2255
      %v2305 = vadd.f32 %v1984, %v2258
      %v2306 = vadd.f32 %v1987, %v2261
      %v2307 = vadd.f32 %v1990, %v2264
      %v2308 = vadd.f32 %v1993, %v2267
      %v2309 = vadd.f32 %v1996, %v2270
      %v2310 = vadd.f32 %v1999, %v2273
      %v2311 = vld [vmem:[#allocation2 + $0x12] sm:$0xff]
      %v2312 = vld [vmem:[#allocation2 + $0x1a] sm:$0xff]
      %v2313 = vld [vmem:[#allocation2 + $0x22] sm:$0xff]
      %v2314 = vld [vmem:[#allocation2 + $0x2a] sm:$0xff]
      %v2315 = vld [vmem:[#allocation2 + $0x32] sm:$0xff]
      %v2316 = vld [vmem:[#allocation2 + $0x3a] sm:$0xff]
      %v2317 = vld [vmem:[#allocation2 + $0x42] sm:$0xff]
      %v2318 = vld [vmem:[#allocation2 + $0x4a] sm:$0xff]
      %v2319 = vld [vmem:[#allocation2 + $0x52] sm:$0xff]
      %v2320 = vld [vmem:[#allocation2 + $0x5a] sm:$0xff]
      %v2321 = vld [vmem:[#allocation2 + $0x62] sm:$0xff]
      %v2322 = vld [vmem:[#allocation2 + $0x6a] sm:$0xff]
      %v2323 = vld [vmem:[#allocation2 + $0x72] sm:$0xff]
      %v2324 = vld [vmem:[#allocation2 + $0x7a] sm:$0xff]
      %v2325 = vld [vmem:[#allocation2 + $0x82] sm:$0xff]
      %v2326 = vld [vmem:[#allocation2 + $0x8a] sm:$0xff]
      %v2327 = vld [vmem:[#allocation2 + $0x92] sm:$0xff]
      %v2328 = vld [vmem:[#allocation2 + $0x9a] sm:$0xff]
      %v2329 = vld [vmem:[#allocation2 + $0xa2] sm:$0xff]
      %v2330 = vld [vmem:[#allocation2 + $0xaa] sm:$0xff]
      %v2331 = vld [vmem:[#allocation2 + $0xb2] sm:$0xff]
      %v2332 = vld [vmem:[#allocation2 + $0xba] sm:$0xff]
      %v2333 = vld [vmem:[#allocation2 + $0xc2] sm:$0xff]
      %v2334 = vld [vmem:[#allocation2 + $0xca] sm:$0xff]
      %v2335 = vld [vmem:[#allocation2 + $0xd2] sm:$0xff]
      %v2336 = vld [vmem:[#allocation2 + $0xda] sm:$0xff]
      %v2337 = vld [vmem:[#allocation2 + $0xe2] sm:$0xff]
      %v2338 = vld [vmem:[#allocation2 + $0xea] sm:$0xff]
      %v2339 = vld [vmem:[#allocation2 + $0xf2] sm:$0xff]
      %v2340 = vld [vmem:[#allocation2 + $0xfa] sm:$0xff]
      %v2341 = vld [vmem:[#allocation2 + $0x102] sm:$0xff]
      %v2342 = vld [vmem:[#allocation2 + $0x10a] sm:$0xff]
      %v2343 = vld [vmem:[#allocation2 + $0x112] sm:$0xff]
      %v2344 = vld [vmem:[#allocation2 + $0x11a] sm:$0xff]
      %v2345 = vld [vmem:[#allocation2 + $0x122] sm:$0xff]
      %v2346 = vld [vmem:[#allocation2 + $0x12a] sm:$0xff]
      %s2347 = scalar_lea.vmem %s3, 12
      %v2348 = vld [vmem:[%s2347] sm:$0xf]
      %v2350 = vsel %vm404, %v2311, 0
      %v2353 = vsel %vm404, %v2312, 0
      %v2356 = vsel %vm404, %v2313, 0
      %v2359 = vsel %vm404, %v2314, 0
      %v2362 = vsel %vm404, %v2315, 0
      %v2365 = vsel %vm404, %v2316, 0
      %v2368 = vsel %vm404, %v2317, 0
      %v2371 = vsel %vm404, %v2318, 0
      %v2374 = vsel %vm404, %v2319, 0
      %v2377 = vsel %vm404, %v2320, 0
      %v2380 = vsel %vm404, %v2321, 0
      %v2383 = vsel %vm404, %v2322, 0
      %v2386 = vsel %vm404, %v2323, 0
      %v2389 = vsel %vm404, %v2324, 0
      %v2392 = vsel %vm404, %v2325, 0
      %v2395 = vsel %vm404, %v2326, 0
      %v2398 = vsel %vm404, %v2327, 0
      %v2401 = vsel %vm404, %v2328, 0
      %v2404 = vsel %vm404, %v2329, 0
      %v2407 = vsel %vm404, %v2330, 0
      %v2410 = vsel %vm404, %v2331, 0
      %v2413 = vsel %vm404, %v2332, 0
      %v2416 = vsel %vm404, %v2333, 0
      %v2419 = vsel %vm404, %v2334, 0
      %v2422 = vsel %vm404, %v2335, 0
      %v2425 = vsel %vm404, %v2336, 0
      %v2428 = vsel %vm404, %v2337, 0
      %v2431 = vsel %vm404, %v2338, 0
      %v2434 = vsel %vm404, %v2339, 0
      %v2437 = vsel %vm404, %v2340, 0
      %v2440 = vsel %vm404, %v2341, 0
      %v2443 = vsel %vm404, %v2342, 0
      %v2446 = vsel %vm404, %v2343, 0
      %v2449 = vsel %vm404, %v2344, 0
      %v2452 = vsel %vm404, %v2345, 0
      %v2455 = vsel %vm404, %v2346, 0
      %v2458 = vsel %vm528, %v2348, 0
      %2460 = vmatpush.msra.mxu0 0.0
      %2461 = vmatpush.msra.mxu0 0.0
      %2462 = vmatpush.msra.mxu0 0.0
      %2463 = vmatpush.msra.mxu0 0.0
      %2464 = vmatpush.msra.mxu0 0.0
      %2465 = vmatpush.msra.mxu0 0.0
      %2466 = vmatpush.msra.mxu0 0.0
      %2467 = vmatpush.msra.mxu0 0.0
      %2468 = vmatpush.msra.mxu0 0.0
      %2469 = vmatpush.msra.mxu0 0.0
      %2470 = vmatpush.msra.mxu0 0.0
      %2471 = vmatpush.msra.mxu0 0.0
      %2472 = vmatpush.msra.mxu0 0.0
      %2473 = vmatpush.msra.mxu0 0.0
      %2474 = vmatpush.msra.mxu0 0.0
      %2475 = vmatpush.msra.mxu0 %v2458
      %2476 = vmatmul.f32.gmra.mxu0 %v2350
      %v2477 = vpop.f32.mrf.mxu0
      %v2478 = vadd.f32 0.0, %v2477
      %2479 = vmatmul.f32.gmra.mxu0 %v2353
      %v2480 = vpop.f32.mrf.mxu0
      %v2481 = vadd.f32 0.0, %v2480
      %2482 = vmatmul.f32.gmra.mxu0 %v2356
      %v2483 = vpop.f32.mrf.mxu0
      %v2484 = vadd.f32 0.0, %v2483
      %2485 = vmatmul.f32.gmra.mxu0 %v2359
      %v2486 = vpop.f32.mrf.mxu0
      %v2487 = vadd.f32 0.0, %v2486
      %2488 = vmatmul.f32.gmra.mxu0 %v2362
      %v2489 = vpop.f32.mrf.mxu0
      %v2490 = vadd.f32 0.0, %v2489
      %2491 = vmatmul.f32.gmra.mxu0 %v2365
      %v2492 = vpop.f32.mrf.mxu0
      %v2493 = vadd.f32 0.0, %v2492
      %2494 = vmatmul.f32.gmra.mxu0 %v2368
      %v2495 = vpop.f32.mrf.mxu0
      %v2496 = vadd.f32 0.0, %v2495
      %2497 = vmatmul.f32.gmra.mxu0 %v2371
      %v2498 = vpop.f32.mrf.mxu0
      %v2499 = vadd.f32 0.0, %v2498
      %2500 = vmatmul.f32.gmra.mxu0 %v2374
      %v2501 = vpop.f32.mrf.mxu0
      %v2502 = vadd.f32 0.0, %v2501
      %2503 = vmatmul.f32.gmra.mxu0 %v2377
      %v2504 = vpop.f32.mrf.mxu0
      %v2505 = vadd.f32 0.0, %v2504
      %2506 = vmatmul.f32.gmra.mxu0 %v2380
      %v2507 = vpop.f32.mrf.mxu0
      %v2508 = vadd.f32 0.0, %v2507
      %2509 = vmatmul.f32.gmra.mxu0 %v2383
      %v2510 = vpop.f32.mrf.mxu0
      %v2511 = vadd.f32 0.0, %v2510
      %2512 = vmatmul.f32.gmra.mxu0 %v2386
      %v2513 = vpop.f32.mrf.mxu0
      %v2514 = vadd.f32 0.0, %v2513
      %2515 = vmatmul.f32.gmra.mxu0 %v2389
      %v2516 = vpop.f32.mrf.mxu0
      %v2517 = vadd.f32 0.0, %v2516
      %2518 = vmatmul.f32.gmra.mxu0 %v2392
      %v2519 = vpop.f32.mrf.mxu0
      %v2520 = vadd.f32 0.0, %v2519
      %2521 = vmatmul.f32.gmra.mxu0 %v2395
      %v2522 = vpop.f32.mrf.mxu0
      %v2523 = vadd.f32 0.0, %v2522
      %2524 = vmatmul.f32.gmra.mxu0 %v2398
      %v2525 = vpop.f32.mrf.mxu0
      %v2526 = vadd.f32 0.0, %v2525
      %2527 = vmatmul.f32.gmra.mxu0 %v2401
      %v2528 = vpop.f32.mrf.mxu0
      %v2529 = vadd.f32 0.0, %v2528
      %2530 = vmatmul.f32.gmra.mxu0 %v2404
      %v2531 = vpop.f32.mrf.mxu0
      %v2532 = vadd.f32 0.0, %v2531
      %2533 = vmatmul.f32.gmra.mxu0 %v2407
      %v2534 = vpop.f32.mrf.mxu0
      %v2535 = vadd.f32 0.0, %v2534
      %2536 = vmatmul.f32.gmra.mxu0 %v2410
      %v2537 = vpop.f32.mrf.mxu0
      %v2538 = vadd.f32 0.0, %v2537
      %2539 = vmatmul.f32.gmra.mxu0 %v2413
      %v2540 = vpop.f32.mrf.mxu0
      %v2541 = vadd.f32 0.0, %v2540
      %2542 = vmatmul.f32.gmra.mxu0 %v2416
      %v2543 = vpop.f32.mrf.mxu0
      %v2544 = vadd.f32 0.0, %v2543
      %2545 = vmatmul.f32.gmra.mxu0 %v2419
      %v2546 = vpop.f32.mrf.mxu0
      %v2547 = vadd.f32 0.0, %v2546
      %2548 = vmatmul.f32.gmra.mxu0 %v2422
      %v2549 = vpop.f32.mrf.mxu0
      %v2550 = vadd.f32 0.0, %v2549
      %2551 = vmatmul.f32.gmra.mxu0 %v2425
      %v2552 = vpop.f32.mrf.mxu0
      %v2553 = vadd.f32 0.0, %v2552
      %2554 = vmatmul.f32.gmra.mxu0 %v2428
      %v2555 = vpop.f32.mrf.mxu0
      %v2556 = vadd.f32 0.0, %v2555
      %2557 = vmatmul.f32.gmra.mxu0 %v2431
      %v2558 = vpop.f32.mrf.mxu0
      %v2559 = vadd.f32 0.0, %v2558
      %2560 = vmatmul.f32.gmra.mxu0 %v2434
      %v2561 = vpop.f32.mrf.mxu0
      %v2562 = vadd.f32 0.0, %v2561
      %2563 = vmatmul.f32.gmra.mxu0 %v2437
      %v2564 = vpop.f32.mrf.mxu0
      %v2565 = vadd.f32 0.0, %v2564
      %2566 = vmatmul.f32.gmra.mxu0 %v2440
      %v2567 = vpop.f32.mrf.mxu0
      %v2568 = vadd.f32 0.0, %v2567
      %2569 = vmatmul.f32.gmra.mxu0 %v2443
      %v2570 = vpop.f32.mrf.mxu0
      %v2571 = vadd.f32 0.0, %v2570
      %2572 = vmatmul.f32.gmra.mxu0 %v2446
      %v2573 = vpop.f32.mrf.mxu0
      %v2574 = vadd.f32 0.0, %v2573
      %2575 = vmatmul.f32.gmra.mxu0 %v2449
      %v2576 = vpop.f32.mrf.mxu0
      %v2577 = vadd.f32 0.0, %v2576
      %2578 = vmatmul.f32.gmra.mxu0 %v2452
      %v2579 = vpop.f32.mrf.mxu0
      %v2580 = vadd.f32 0.0, %v2579
      %2581 = vmatmul.f32.gmra.mxu0 %v2455
      %v2582 = vpop.f32.mrf.mxu0
      %v2583 = vadd.f32 0.0, %v2582
      %2584 = vdwg.mxu0
      %v2585 = vadd.f32 %v2275, %v2478
      %v2586 = vadd.f32 %v2276, %v2481
      %v2587 = vadd.f32 %v2277, %v2484
      %v2588 = vadd.f32 %v2278, %v2487
      %v2589 = vadd.f32 %v2279, %v2490
      %v2590 = vadd.f32 %v2280, %v2493
      %v2591 = vadd.f32 %v2281, %v2496
      %v2592 = vadd.f32 %v2282, %v2499
      %v2593 = vadd.f32 %v2283, %v2502
      %v2594 = vadd.f32 %v2284, %v2505
      %v2595 = vadd.f32 %v2285, %v2508
      %v2596 = vadd.f32 %v2286, %v2511
      %v2597 = vadd.f32 %v2287, %v2514
      %v2598 = vadd.f32 %v2288, %v2517
      %v2599 = vadd.f32 %v2289, %v2520
      %v2600 = vadd.f32 %v2290, %v2523
      %v2601 = vadd.f32 %v2291, %v2526
      %v2602 = vadd.f32 %v2292, %v2529
      %v2603 = vadd.f32 %v2293, %v2532
      %v2604 = vadd.f32 %v2294, %v2535
      %v2605 = vadd.f32 %v2295, %v2538
      %v2606 = vadd.f32 %v2296, %v2541
      %v2607 = vadd.f32 %v2297, %v2544
      %v2608 = vadd.f32 %v2298, %v2547
      %v2609 = vadd.f32 %v2299, %v2550
      %v2610 = vadd.f32 %v2300, %v2553
      %v2611 = vadd.f32 %v2301, %v2556
      %v2612 = vadd.f32 %v2302, %v2559
      %v2613 = vadd.f32 %v2303, %v2562
      %v2614 = vadd.f32 %v2304, %v2565
      %v2615 = vadd.f32 %v2305, %v2568
      %v2616 = vadd.f32 %v2306, %v2571
      %v2617 = vadd.f32 %v2307, %v2574
      %v2618 = vadd.f32 %v2308, %v2577
      %v2619 = vadd.f32 %v2309, %v2580
      %v2620 = vadd.f32 %v2310, %v2583
      %v2621 = vld [vmem:[#allocation2 + $0x13] sm:$0xff]
      %v2622 = vld [vmem:[#allocation2 + $0x1b] sm:$0xff]
      %v2623 = vld [vmem:[#allocation2 + $0x23] sm:$0xff]
      %v2624 = vld [vmem:[#allocation2 + $0x2b] sm:$0xff]
      %v2625 = vld [vmem:[#allocation2 + $0x33] sm:$0xff]
      %v2626 = vld [vmem:[#allocation2 + $0x3b] sm:$0xff]
      %v2627 = vld [vmem:[#allocation2 + $0x43] sm:$0xff]
      %v2628 = vld [vmem:[#allocation2 + $0x4b] sm:$0xff]
      %v2629 = vld [vmem:[#allocation2 + $0x53] sm:$0xff]
      %v2630 = vld [vmem:[#allocation2 + $0x5b] sm:$0xff]
      %v2631 = vld [vmem:[#allocation2 + $0x63] sm:$0xff]
      %v2632 = vld [vmem:[#allocation2 + $0x6b] sm:$0xff]
      %v2633 = vld [vmem:[#allocation2 + $0x73] sm:$0xff]
      %v2634 = vld [vmem:[#allocation2 + $0x7b] sm:$0xff]
      %v2635 = vld [vmem:[#allocation2 + $0x83] sm:$0xff]
      %v2636 = vld [vmem:[#allocation2 + $0x8b] sm:$0xff]
      %v2637 = vld [vmem:[#allocation2 + $0x93] sm:$0xff]
      %v2638 = vld [vmem:[#allocation2 + $0x9b] sm:$0xff]
      %v2639 = vld [vmem:[#allocation2 + $0xa3] sm:$0xff]
      %v2640 = vld [vmem:[#allocation2 + $0xab] sm:$0xff]
      %v2641 = vld [vmem:[#allocation2 + $0xb3] sm:$0xff]
      %v2642 = vld [vmem:[#allocation2 + $0xbb] sm:$0xff]
      %v2643 = vld [vmem:[#allocation2 + $0xc3] sm:$0xff]
      %v2644 = vld [vmem:[#allocation2 + $0xcb] sm:$0xff]
      %v2645 = vld [vmem:[#allocation2 + $0xd3] sm:$0xff]
      %v2646 = vld [vmem:[#allocation2 + $0xdb] sm:$0xff]
      %v2647 = vld [vmem:[#allocation2 + $0xe3] sm:$0xff]
      %v2648 = vld [vmem:[#allocation2 + $0xeb] sm:$0xff]
      %v2649 = vld [vmem:[#allocation2 + $0xf3] sm:$0xff]
      %v2650 = vld [vmem:[#allocation2 + $0xfb] sm:$0xff]
      %v2651 = vld [vmem:[#allocation2 + $0x103] sm:$0xff]
      %v2652 = vld [vmem:[#allocation2 + $0x10b] sm:$0xff]
      %v2653 = vld [vmem:[#allocation2 + $0x113] sm:$0xff]
      %v2654 = vld [vmem:[#allocation2 + $0x11b] sm:$0xff]
      %v2655 = vld [vmem:[#allocation2 + $0x123] sm:$0xff]
      %v2656 = vld [vmem:[#allocation2 + $0x12b] sm:$0xff]
      %s2657 = scalar_lea.vmem %s3, 16
      %v2658 = vld [vmem:[%s2657] sm:$0xf]
      %v2660 = vsel %vm404, %v2621, 0
      %v2663 = vsel %vm404, %v2622, 0
      %v2666 = vsel %vm404, %v2623, 0
      %v2669 = vsel %vm404, %v2624, 0
      %v2672 = vsel %vm404, %v2625, 0
      %v2675 = vsel %vm404, %v2626, 0
      %v2678 = vsel %vm404, %v2627, 0
      %v2681 = vsel %vm404, %v2628, 0
      %v2684 = vsel %vm404, %v2629, 0
      %v2687 = vsel %vm404, %v2630, 0
      %v2690 = vsel %vm404, %v2631, 0
      %v2693 = vsel %vm404, %v2632, 0
      %v2696 = vsel %vm404, %v2633, 0
      %v2699 = vsel %vm404, %v2634, 0
      %v2702 = vsel %vm404, %v2635, 0
      %v2705 = vsel %vm404, %v2636, 0
      %v2708 = vsel %vm404, %v2637, 0
      %v2711 = vsel %vm404, %v2638, 0
      %v2714 = vsel %vm404, %v2639, 0
      %v2717 = vsel %vm404, %v2640, 0
      %v2720 = vsel %vm404, %v2641, 0
      %v2723 = vsel %vm404, %v2642, 0
      %v2726 = vsel %vm404, %v2643, 0
      %v2729 = vsel %vm404, %v2644, 0
      %v2732 = vsel %vm404, %v2645, 0
      %v2735 = vsel %vm404, %v2646, 0
      %v2738 = vsel %vm404, %v2647, 0
      %v2741 = vsel %vm404, %v2648, 0
      %v2744 = vsel %vm404, %v2649, 0
      %v2747 = vsel %vm404, %v2650, 0
      %v2750 = vsel %vm404, %v2651, 0
      %v2753 = vsel %vm404, %v2652, 0
      %v2756 = vsel %vm404, %v2653, 0
      %v2759 = vsel %vm404, %v2654, 0
      %v2762 = vsel %vm404, %v2655, 0
      %v2765 = vsel %vm404, %v2656, 0
      %v2768 = vsel %vm528, %v2658, 0
      %2770 = vmatpush.msra.mxu0 0.0
      %2771 = vmatpush.msra.mxu0 0.0
      %2772 = vmatpush.msra.mxu0 0.0
      %2773 = vmatpush.msra.mxu0 0.0
      %2774 = vmatpush.msra.mxu0 0.0
      %2775 = vmatpush.msra.mxu0 0.0
      %2776 = vmatpush.msra.mxu0 0.0
      %2777 = vmatpush.msra.mxu0 0.0
      %2778 = vmatpush.msra.mxu0 0.0
      %2779 = vmatpush.msra.mxu0 0.0
      %2780 = vmatpush.msra.mxu0 0.0
      %2781 = vmatpush.msra.mxu0 0.0
      %2782 = vmatpush.msra.mxu0 0.0
      %2783 = vmatpush.msra.mxu0 0.0
      %2784 = vmatpush.msra.mxu0 0.0
      %2785 = vmatpush.msra.mxu0 %v2768
      %2786 = vmatmul.f32.gmra.mxu0 %v2660
      %v2787 = vpop.f32.mrf.mxu0
      %v2788 = vadd.f32 0.0, %v2787
      %2789 = vmatmul.f32.gmra.mxu0 %v2663
      %v2790 = vpop.f32.mrf.mxu0
      %v2791 = vadd.f32 0.0, %v2790
      %2792 = vmatmul.f32.gmra.mxu0 %v2666
      %v2793 = vpop.f32.mrf.mxu0
      %v2794 = vadd.f32 0.0, %v2793
      %2795 = vmatmul.f32.gmra.mxu0 %v2669
      %v2796 = vpop.f32.mrf.mxu0
      %v2797 = vadd.f32 0.0, %v2796
      %2798 = vmatmul.f32.gmra.mxu0 %v2672
      %v2799 = vpop.f32.mrf.mxu0
      %v2800 = vadd.f32 0.0, %v2799
      %2801 = vmatmul.f32.gmra.mxu0 %v2675
      %v2802 = vpop.f32.mrf.mxu0
      %v2803 = vadd.f32 0.0, %v2802
      %2804 = vmatmul.f32.gmra.mxu0 %v2678
      %v2805 = vpop.f32.mrf.mxu0
      %v2806 = vadd.f32 0.0, %v2805
      %2807 = vmatmul.f32.gmra.mxu0 %v2681
      %v2808 = vpop.f32.mrf.mxu0
      %v2809 = vadd.f32 0.0, %v2808
      %2810 = vmatmul.f32.gmra.mxu0 %v2684
      %v2811 = vpop.f32.mrf.mxu0
      %v2812 = vadd.f32 0.0, %v2811
      %2813 = vmatmul.f32.gmra.mxu0 %v2687
      %v2814 = vpop.f32.mrf.mxu0
      %v2815 = vadd.f32 0.0, %v2814
      %2816 = vmatmul.f32.gmra.mxu0 %v2690
      %v2817 = vpop.f32.mrf.mxu0
      %v2818 = vadd.f32 0.0, %v2817
      %2819 = vmatmul.f32.gmra.mxu0 %v2693
      %v2820 = vpop.f32.mrf.mxu0
      %v2821 = vadd.f32 0.0, %v2820
      %2822 = vmatmul.f32.gmra.mxu0 %v2696
      %v2823 = vpop.f32.mrf.mxu0
      %v2824 = vadd.f32 0.0, %v2823
      %2825 = vmatmul.f32.gmra.mxu0 %v2699
      %v2826 = vpop.f32.mrf.mxu0
      %v2827 = vadd.f32 0.0, %v2826
      %2828 = vmatmul.f32.gmra.mxu0 %v2702
      %v2829 = vpop.f32.mrf.mxu0
      %v2830 = vadd.f32 0.0, %v2829
      %2831 = vmatmul.f32.gmra.mxu0 %v2705
      %v2832 = vpop.f32.mrf.mxu0
      %v2833 = vadd.f32 0.0, %v2832
      %2834 = vmatmul.f32.gmra.mxu0 %v2708
      %v2835 = vpop.f32.mrf.mxu0
      %v2836 = vadd.f32 0.0, %v2835
      %2837 = vmatmul.f32.gmra.mxu0 %v2711
      %v2838 = vpop.f32.mrf.mxu0
      %v2839 = vadd.f32 0.0, %v2838
      %2840 = vmatmul.f32.gmra.mxu0 %v2714
      %v2841 = vpop.f32.mrf.mxu0
      %v2842 = vadd.f32 0.0, %v2841
      %2843 = vmatmul.f32.gmra.mxu0 %v2717
      %v2844 = vpop.f32.mrf.mxu0
      %v2845 = vadd.f32 0.0, %v2844
      %2846 = vmatmul.f32.gmra.mxu0 %v2720
      %v2847 = vpop.f32.mrf.mxu0
      %v2848 = vadd.f32 0.0, %v2847
      %2849 = vmatmul.f32.gmra.mxu0 %v2723
      %v2850 = vpop.f32.mrf.mxu0
      %v2851 = vadd.f32 0.0, %v2850
      %2852 = vmatmul.f32.gmra.mxu0 %v2726
      %v2853 = vpop.f32.mrf.mxu0
      %v2854 = vadd.f32 0.0, %v2853
      %2855 = vmatmul.f32.gmra.mxu0 %v2729
      %v2856 = vpop.f32.mrf.mxu0
      %v2857 = vadd.f32 0.0, %v2856
      %2858 = vmatmul.f32.gmra.mxu0 %v2732
      %v2859 = vpop.f32.mrf.mxu0
      %v2860 = vadd.f32 0.0, %v2859
      %2861 = vmatmul.f32.gmra.mxu0 %v2735
      %v2862 = vpop.f32.mrf.mxu0
      %v2863 = vadd.f32 0.0, %v2862
      %2864 = vmatmul.f32.gmra.mxu0 %v2738
      %v2865 = vpop.f32.mrf.mxu0
      %v2866 = vadd.f32 0.0, %v2865
      %2867 = vmatmul.f32.gmra.mxu0 %v2741
      %v2868 = vpop.f32.mrf.mxu0
      %v2869 = vadd.f32 0.0, %v2868
      %2870 = vmatmul.f32.gmra.mxu0 %v2744
      %v2871 = vpop.f32.mrf.mxu0
      %v2872 = vadd.f32 0.0, %v2871
      %2873 = vmatmul.f32.gmra.mxu0 %v2747
      %v2874 = vpop.f32.mrf.mxu0
      %v2875 = vadd.f32 0.0, %v2874
      %2876 = vmatmul.f32.gmra.mxu0 %v2750
      %v2877 = vpop.f32.mrf.mxu0
      %v2878 = vadd.f32 0.0, %v2877
      %2879 = vmatmul.f32.gmra.mxu0 %v2753
      %v2880 = vpop.f32.mrf.mxu0
      %v2881 = vadd.f32 0.0, %v2880
      %2882 = vmatmul.f32.gmra.mxu0 %v2756
      %v2883 = vpop.f32.mrf.mxu0
      %v2884 = vadd.f32 0.0, %v2883
      %2885 = vmatmul.f32.gmra.mxu0 %v2759
      %v2886 = vpop.f32.mrf.mxu0
      %v2887 = vadd.f32 0.0, %v2886
      %2888 = vmatmul.f32.gmra.mxu0 %v2762
      %v2889 = vpop.f32.mrf.mxu0
      %v2890 = vadd.f32 0.0, %v2889
      %2891 = vmatmul.f32.gmra.mxu0 %v2765
      %v2892 = vpop.f32.mrf.mxu0
      %v2893 = vadd.f32 0.0, %v2892
      %2894 = vdwg.mxu0
      %v2895 = vadd.f32 %v2585, %v2788
      %v2896 = vadd.f32 %v2586, %v2791
      %v2897 = vadd.f32 %v2587, %v2794
      %v2898 = vadd.f32 %v2588, %v2797
      %v2899 = vadd.f32 %v2589, %v2800
      %v2900 = vadd.f32 %v2590, %v2803
      %v2901 = vadd.f32 %v2591, %v2806
      %v2902 = vadd.f32 %v2592, %v2809
      %v2903 = vadd.f32 %v2593, %v2812
      %v2904 = vadd.f32 %v2594, %v2815
      %v2905 = vadd.f32 %v2595, %v2818
      %v2906 = vadd.f32 %v2596, %v2821
      %v2907 = vadd.f32 %v2597, %v2824
      %v2908 = vadd.f32 %v2598, %v2827
      %v2909 = vadd.f32 %v2599, %v2830
      %v2910 = vadd.f32 %v2600, %v2833
      %v2911 = vadd.f32 %v2601, %v2836
      %v2912 = vadd.f32 %v2602, %v2839
      %v2913 = vadd.f32 %v2603, %v2842
      %v2914 = vadd.f32 %v2604, %v2845
      %v2915 = vadd.f32 %v2605, %v2848
      %v2916 = vadd.f32 %v2606, %v2851
      %v2917 = vadd.f32 %v2607, %v2854
      %v2918 = vadd.f32 %v2608, %v2857
      %v2919 = vadd.f32 %v2609, %v2860
      %v2920 = vadd.f32 %v2610, %v2863
      %v2921 = vadd.f32 %v2611, %v2866
      %v2922 = vadd.f32 %v2612, %v2869
      %v2923 = vadd.f32 %v2613, %v2872
      %v2924 = vadd.f32 %v2614, %v2875
      %v2925 = vadd.f32 %v2615, %v2878
      %v2926 = vadd.f32 %v2616, %v2881
      %v2927 = vadd.f32 %v2617, %v2884
      %v2928 = vadd.f32 %v2618, %v2887
      %v2929 = vadd.f32 %v2619, %v2890
      %v2930 = vadd.f32 %v2620, %v2893
      %v2931 = vld [vmem:[#allocation2 + $0x14] sm:$0xff]
      %v2932 = vld [vmem:[#allocation2 + $0x1c] sm:$0xff]
      %v2933 = vld [vmem:[#allocation2 + $0x24] sm:$0xff]
      %v2934 = vld [vmem:[#allocation2 + $0x2c] sm:$0xff]
      %v2935 = vld [vmem:[#allocation2 + $0x34] sm:$0xff]
      %v2936 = vld [vmem:[#allocation2 + $0x3c] sm:$0xff]
      %v2937 = vld [vmem:[#allocation2 + $0x44] sm:$0xff]
      %v2938 = vld [vmem:[#allocation2 + $0x4c] sm:$0xff]
      %v2939 = vld [vmem:[#allocation2 + $0x54] sm:$0xff]
      %v2940 = vld [vmem:[#allocation2 + $0x5c] sm:$0xff]
      %v2941 = vld [vmem:[#allocation2 + $0x64] sm:$0xff]
      %v2942 = vld [vmem:[#allocation2 + $0x6c] sm:$0xff]
      %v2943 = vld [vmem:[#allocation2 + $0x74] sm:$0xff]
      %v2944 = vld [vmem:[#allocation2 + $0x7c] sm:$0xff]
      %v2945 = vld [vmem:[#allocation2 + $0x84] sm:$0xff]
      %v2946 = vld [vmem:[#allocation2 + $0x8c] sm:$0xff]
      %v2947 = vld [vmem:[#allocation2 + $0x94] sm:$0xff]
      %v2948 = vld [vmem:[#allocation2 + $0x9c] sm:$0xff]
      %v2949 = vld [vmem:[#allocation2 + $0xa4] sm:$0xff]
      %v2950 = vld [vmem:[#allocation2 + $0xac] sm:$0xff]
      %v2951 = vld [vmem:[#allocation2 + $0xb4] sm:$0xff]
      %v2952 = vld [vmem:[#allocation2 + $0xbc] sm:$0xff]
      %v2953 = vld [vmem:[#allocation2 + $0xc4] sm:$0xff]
      %v2954 = vld [vmem:[#allocation2 + $0xcc] sm:$0xff]
      %v2955 = vld [vmem:[#allocation2 + $0xd4] sm:$0xff]
      %v2956 = vld [vmem:[#allocation2 + $0xdc] sm:$0xff]
      %v2957 = vld [vmem:[#allocation2 + $0xe4] sm:$0xff]
      %v2958 = vld [vmem:[#allocation2 + $0xec] sm:$0xff]
      %v2959 = vld [vmem:[#allocation2 + $0xf4] sm:$0xff]
      %v2960 = vld [vmem:[#allocation2 + $0xfc] sm:$0xff]
      %v2961 = vld [vmem:[#allocation2 + $0x104] sm:$0xff]
      %v2962 = vld [vmem:[#allocation2 + $0x10c] sm:$0xff]
      %v2963 = vld [vmem:[#allocation2 + $0x114] sm:$0xff]
      %v2964 = vld [vmem:[#allocation2 + $0x11c] sm:$0xff]
      %v2965 = vld [vmem:[#allocation2 + $0x124] sm:$0xff]
      %v2966 = vld [vmem:[#allocation2 + $0x12c] sm:$0xff]
      %s2967 = scalar_lea.vmem %s3, 20
      %v2968 = vld [vmem:[%s2967] sm:$0xf]
      %v2970 = vsel %vm404, %v2931, 0
      %v2973 = vsel %vm404, %v2932, 0
      %v2976 = vsel %vm404, %v2933, 0
      %v2979 = vsel %vm404, %v2934, 0
      %v2982 = vsel %vm404, %v2935, 0
      %v2985 = vsel %vm404, %v2936, 0
      %v2988 = vsel %vm404, %v2937, 0
      %v2991 = vsel %vm404, %v2938, 0
      %v2994 = vsel %vm404, %v2939, 0
      %v2997 = vsel %vm404, %v2940, 0
      %v3000 = vsel %vm404, %v2941, 0
      %v3003 = vsel %vm404, %v2942, 0
      %v3006 = vsel %vm404, %v2943, 0
      %v3009 = vsel %vm404, %v2944, 0
      %v3012 = vsel %vm404, %v2945, 0
      %v3015 = vsel %vm404, %v2946, 0
      %v3018 = vsel %vm404, %v2947, 0
      %v3021 = vsel %vm404, %v2948, 0
      %v3024 = vsel %vm404, %v2949, 0
      %v3027 = vsel %vm404, %v2950, 0
      %v3030 = vsel %vm404, %v2951, 0
      %v3033 = vsel %vm404, %v2952, 0
      %v3036 = vsel %vm404, %v2953, 0
      %v3039 = vsel %vm404, %v2954, 0
      %v3042 = vsel %vm404, %v2955, 0
      %v3045 = vsel %vm404, %v2956, 0
      %v3048 = vsel %vm404, %v2957, 0
      %v3051 = vsel %vm404, %v2958, 0
      %v3054 = vsel %vm404, %v2959, 0
      %v3057 = vsel %vm404, %v2960, 0
      %v3060 = vsel %vm404, %v2961, 0
      %v3063 = vsel %vm404, %v2962, 0
      %v3066 = vsel %vm404, %v2963, 0
      %v3069 = vsel %vm404, %v2964, 0
      %v3072 = vsel %vm404, %v2965, 0
      %v3075 = vsel %vm404, %v2966, 0
      %v3078 = vsel %vm528, %v2968, 0
      %3080 = vmatpush.msra.mxu0 0.0
      %3081 = vmatpush.msra.mxu0 0.0
      %3082 = vmatpush.msra.mxu0 0.0
      %3083 = vmatpush.msra.mxu0 0.0
      %3084 = vmatpush.msra.mxu0 0.0
      %3085 = vmatpush.msra.mxu0 0.0
      %3086 = vmatpush.msra.mxu0 0.0
      %3087 = vmatpush.msra.mxu0 0.0
      %3088 = vmatpush.msra.mxu0 0.0
      %3089 = vmatpush.msra.mxu0 0.0
      %3090 = vmatpush.msra.mxu0 0.0
      %3091 = vmatpush.msra.mxu0 0.0
      %3092 = vmatpush.msra.mxu0 0.0
      %3093 = vmatpush.msra.mxu0 0.0
      %3094 = vmatpush.msra.mxu0 0.0
      %3095 = vmatpush.msra.mxu0 %v3078
      %3096 = vmatmul.f32.gmra.mxu0 %v2970
      %v3097 = vpop.f32.mrf.mxu0
      %v3098 = vadd.f32 0.0, %v3097
      %3099 = vmatmul.f32.gmra.mxu0 %v2973
      %v3100 = vpop.f32.mrf.mxu0
      %v3101 = vadd.f32 0.0, %v3100
      %3102 = vmatmul.f32.gmra.mxu0 %v2976
      %v3103 = vpop.f32.mrf.mxu0
      %v3104 = vadd.f32 0.0, %v3103
      %3105 = vmatmul.f32.gmra.mxu0 %v2979
      %v3106 = vpop.f32.mrf.mxu0
      %v3107 = vadd.f32 0.0, %v3106
      %3108 = vmatmul.f32.gmra.mxu0 %v2982
      %v3109 = vpop.f32.mrf.mxu0
      %v3110 = vadd.f32 0.0, %v3109
      %3111 = vmatmul.f32.gmra.mxu0 %v2985
      %v3112 = vpop.f32.mrf.mxu0
      %v3113 = vadd.f32 0.0, %v3112
      %3114 = vmatmul.f32.gmra.mxu0 %v2988
      %v3115 = vpop.f32.mrf.mxu0
      %v3116 = vadd.f32 0.0, %v3115
      %3117 = vmatmul.f32.gmra.mxu0 %v2991
      %v3118 = vpop.f32.mrf.mxu0
      %v3119 = vadd.f32 0.0, %v3118
      %3120 = vmatmul.f32.gmra.mxu0 %v2994
      %v3121 = vpop.f32.mrf.mxu0
      %v3122 = vadd.f32 0.0, %v3121
      %3123 = vmatmul.f32.gmra.mxu0 %v2997
      %v3124 = vpop.f32.mrf.mxu0
      %v3125 = vadd.f32 0.0, %v3124
      %3126 = vmatmul.f32.gmra.mxu0 %v3000
      %v3127 = vpop.f32.mrf.mxu0
      %v3128 = vadd.f32 0.0, %v3127
      %3129 = vmatmul.f32.gmra.mxu0 %v3003
      %v3130 = vpop.f32.mrf.mxu0
      %v3131 = vadd.f32 0.0, %v3130
      %3132 = vmatmul.f32.gmra.mxu0 %v3006
      %v3133 = vpop.f32.mrf.mxu0
      %v3134 = vadd.f32 0.0, %v3133
      %3135 = vmatmul.f32.gmra.mxu0 %v3009
      %v3136 = vpop.f32.mrf.mxu0
      %v3137 = vadd.f32 0.0, %v3136
      %3138 = vmatmul.f32.gmra.mxu0 %v3012
      %v3139 = vpop.f32.mrf.mxu0
      %v3140 = vadd.f32 0.0, %v3139
      %3141 = vmatmul.f32.gmra.mxu0 %v3015
      %v3142 = vpop.f32.mrf.mxu0
      %v3143 = vadd.f32 0.0, %v3142
      %3144 = vmatmul.f32.gmra.mxu0 %v3018
      %v3145 = vpop.f32.mrf.mxu0
      %v3146 = vadd.f32 0.0, %v3145
      %3147 = vmatmul.f32.gmra.mxu0 %v3021
      %v3148 = vpop.f32.mrf.mxu0
      %v3149 = vadd.f32 0.0, %v3148
      %3150 = vmatmul.f32.gmra.mxu0 %v3024
      %v3151 = vpop.f32.mrf.mxu0
      %v3152 = vadd.f32 0.0, %v3151
      %3153 = vmatmul.f32.gmra.mxu0 %v3027
      %v3154 = vpop.f32.mrf.mxu0
      %v3155 = vadd.f32 0.0, %v3154
      %3156 = vmatmul.f32.gmra.mxu0 %v3030
      %v3157 = vpop.f32.mrf.mxu0
      %v3158 = vadd.f32 0.0, %v3157
      %3159 = vmatmul.f32.gmra.mxu0 %v3033
      %v3160 = vpop.f32.mrf.mxu0
      %v3161 = vadd.f32 0.0, %v3160
      %3162 = vmatmul.f32.gmra.mxu0 %v3036
      %v3163 = vpop.f32.mrf.mxu0
      %v3164 = vadd.f32 0.0, %v3163
      %3165 = vmatmul.f32.gmra.mxu0 %v3039
      %v3166 = vpop.f32.mrf.mxu0
      %v3167 = vadd.f32 0.0, %v3166
      %3168 = vmatmul.f32.gmra.mxu0 %v3042
      %v3169 = vpop.f32.mrf.mxu0
      %v3170 = vadd.f32 0.0, %v3169
      %3171 = vmatmul.f32.gmra.mxu0 %v3045
      %v3172 = vpop.f32.mrf.mxu0
      %v3173 = vadd.f32 0.0, %v3172
      %3174 = vmatmul.f32.gmra.mxu0 %v3048
      %v3175 = vpop.f32.mrf.mxu0
      %v3176 = vadd.f32 0.0, %v3175
      %3177 = vmatmul.f32.gmra.mxu0 %v3051
      %v3178 = vpop.f32.mrf.mxu0
      %v3179 = vadd.f32 0.0, %v3178
      %3180 = vmatmul.f32.gmra.mxu0 %v3054
      %v3181 = vpop.f32.mrf.mxu0
      %v3182 = vadd.f32 0.0, %v3181
      %3183 = vmatmul.f32.gmra.mxu0 %v3057
      %v3184 = vpop.f32.mrf.mxu0
      %v3185 = vadd.f32 0.0, %v3184
      %3186 = vmatmul.f32.gmra.mxu0 %v3060
      %v3187 = vpop.f32.mrf.mxu0
      %v3188 = vadd.f32 0.0, %v3187
      %3189 = vmatmul.f32.gmra.mxu0 %v3063
      %v3190 = vpop.f32.mrf.mxu0
      %v3191 = vadd.f32 0.0, %v3190
      %3192 = vmatmul.f32.gmra.mxu0 %v3066
      %v3193 = vpop.f32.mrf.mxu0
      %v3194 = vadd.f32 0.0, %v3193
      %3195 = vmatmul.f32.gmra.mxu0 %v3069
      %v3196 = vpop.f32.mrf.mxu0
      %v3197 = vadd.f32 0.0, %v3196
      %3198 = vmatmul.f32.gmra.mxu0 %v3072
      %v3199 = vpop.f32.mrf.mxu0
      %v3200 = vadd.f32 0.0, %v3199
      %3201 = vmatmul.f32.gmra.mxu0 %v3075
      %v3202 = vpop.f32.mrf.mxu0
      %v3203 = vadd.f32 0.0, %v3202
      %3204 = vdwg.mxu0
      %v3205 = vadd.f32 %v2895, %v3098
      %v3206 = vadd.f32 %v2896, %v3101
      %v3207 = vadd.f32 %v2897, %v3104
      %v3208 = vadd.f32 %v2898, %v3107
      %v3209 = vadd.f32 %v2899, %v3110
      %v3210 = vadd.f32 %v2900, %v3113
      %v3211 = vadd.f32 %v2901, %v3116
      %v3212 = vadd.f32 %v2902, %v3119
      %v3213 = vadd.f32 %v2903, %v3122
      %v3214 = vadd.f32 %v2904, %v3125
      %v3215 = vadd.f32 %v2905, %v3128
      %v3216 = vadd.f32 %v2906, %v3131
      %v3217 = vadd.f32 %v2907, %v3134
      %v3218 = vadd.f32 %v2908, %v3137
      %v3219 = vadd.f32 %v2909, %v3140
      %v3220 = vadd.f32 %v2910, %v3143
      %v3221 = vadd.f32 %v2911, %v3146
      %v3222 = vadd.f32 %v2912, %v3149
      %v3223 = vadd.f32 %v2913, %v3152
      %v3224 = vadd.f32 %v2914, %v3155
      %v3225 = vadd.f32 %v2915, %v3158
      %v3226 = vadd.f32 %v2916, %v3161
      %v3227 = vadd.f32 %v2917, %v3164
      %v3228 = vadd.f32 %v2918, %v3167
      %v3229 = vadd.f32 %v2919, %v3170
      %v3230 = vadd.f32 %v2920, %v3173
      %v3231 = vadd.f32 %v2921, %v3176
      %v3232 = vadd.f32 %v2922, %v3179
      %v3233 = vadd.f32 %v2923, %v3182
      %v3234 = vadd.f32 %v2924, %v3185
      %v3235 = vadd.f32 %v2925, %v3188
      %v3236 = vadd.f32 %v2926, %v3191
      %v3237 = vadd.f32 %v2927, %v3194
      %v3238 = vadd.f32 %v2928, %v3197
      %v3239 = vadd.f32 %v2929, %v3200
      %v3240 = vadd.f32 %v2930, %v3203
      %v3241 = vld [vmem:[#allocation2 + $0x24] sm:$0xff]
      %v3242 = vld [vmem:[#allocation2 + $0x2c] sm:$0xff]
      %v3243 = vld [vmem:[#allocation2 + $0x34] sm:$0xff]
      %v3244 = vld [vmem:[#allocation2 + $0x3c] sm:$0xff]
      %v3245 = vld [vmem:[#allocation2 + $0x44] sm:$0xff]
      %v3246 = vld [vmem:[#allocation2 + $0x4c] sm:$0xff]
      %v3247 = vld [vmem:[#allocation2 + $0x54] sm:$0xff]
      %v3248 = vld [vmem:[#allocation2 + $0x5c] sm:$0xff]
      %v3249 = vld [vmem:[#allocation2 + $0x64] sm:$0xff]
      %v3250 = vld [vmem:[#allocation2 + $0x6c] sm:$0xff]
      %v3251 = vld [vmem:[#allocation2 + $0x74] sm:$0xff]
      %v3252 = vld [vmem:[#allocation2 + $0x7c] sm:$0xff]
      %v3253 = vld [vmem:[#allocation2 + $0x84] sm:$0xff]
      %v3254 = vld [vmem:[#allocation2 + $0x8c] sm:$0xff]
      %v3255 = vld [vmem:[#allocation2 + $0x94] sm:$0xff]
      %v3256 = vld [vmem:[#allocation2 + $0x9c] sm:$0xff]
      %v3257 = vld [vmem:[#allocation2 + $0xa4] sm:$0xff]
      %v3258 = vld [vmem:[#allocation2 + $0xac] sm:$0xff]
      %v3259 = vld [vmem:[#allocation2 + $0xb4] sm:$0xff]
      %v3260 = vld [vmem:[#allocation2 + $0xbc] sm:$0xff]
      %v3261 = vld [vmem:[#allocation2 + $0xc4] sm:$0xff]
      %v3262 = vld [vmem:[#allocation2 + $0xcc] sm:$0xff]
      %v3263 = vld [vmem:[#allocation2 + $0xd4] sm:$0xff]
      %v3264 = vld [vmem:[#allocation2 + $0xdc] sm:$0xff]
      %v3265 = vld [vmem:[#allocation2 + $0xe4] sm:$0xff]
      %v3266 = vld [vmem:[#allocation2 + $0xec] sm:$0xff]
      %v3267 = vld [vmem:[#allocation2 + $0xf4] sm:$0xff]
      %v3268 = vld [vmem:[#allocation2 + $0xfc] sm:$0xff]
      %v3269 = vld [vmem:[#allocation2 + $0x104] sm:$0xff]
      %v3270 = vld [vmem:[#allocation2 + $0x10c] sm:$0xff]
      %v3271 = vld [vmem:[#allocation2 + $0x114] sm:$0xff]
      %v3272 = vld [vmem:[#allocation2 + $0x11c] sm:$0xff]
      %v3273 = vld [vmem:[#allocation2 + $0x124] sm:$0xff]
      %v3274 = vld [vmem:[#allocation2 + $0x12c] sm:$0xff]
      %v3275 = vld [vmem:[#allocation2 + $0x134] sm:$0xff]
      %v3276 = vld [vmem:[#allocation2 + $0x13c] sm:$0xff]
      %s3277 = scalar_lea.vmem %s3, 24
      %v3278 = vld [vmem:[%s3277] sm:$0xf]
      %v3280 = vsel %vm404, %v3241, 0
      %v3283 = vsel %vm404, %v3242, 0
      %v3286 = vsel %vm404, %v3243, 0
      %v3289 = vsel %vm404, %v3244, 0
      %v3292 = vsel %vm404, %v3245, 0
      %v3295 = vsel %vm404, %v3246, 0
      %v3298 = vsel %vm404, %v3247, 0
      %v3301 = vsel %vm404, %v3248, 0
      %v3304 = vsel %vm404, %v3249, 0
      %v3307 = vsel %vm404, %v3250, 0
      %v3310 = vsel %vm404, %v3251, 0
      %v3313 = vsel %vm404, %v3252, 0
      %v3316 = vsel %vm404, %v3253, 0
      %v3319 = vsel %vm404, %v3254, 0
      %v3322 = vsel %vm404, %v3255, 0
      %v3325 = vsel %vm404, %v3256, 0
      %v3328 = vsel %vm404, %v3257, 0
      %v3331 = vsel %vm404, %v3258, 0
      %v3334 = vsel %vm404, %v3259, 0
      %v3337 = vsel %vm404, %v3260, 0
      %v3340 = vsel %vm404, %v3261, 0
      %v3343 = vsel %vm404, %v3262, 0
      %v3346 = vsel %vm404, %v3263, 0
      %v3349 = vsel %vm404, %v3264, 0
      %v3352 = vsel %vm404, %v3265, 0
      %v3355 = vsel %vm404, %v3266, 0
      %v3358 = vsel %vm404, %v3267, 0
      %v3361 = vsel %vm404, %v3268, 0
      %v3364 = vsel %vm404, %v3269, 0
      %v3367 = vsel %vm404, %v3270, 0
      %v3370 = vsel %vm404, %v3271, 0
      %v3373 = vsel %vm404, %v3272, 0
      %v3376 = vsel %vm404, %v3273, 0
      %v3379 = vsel %vm404, %v3274, 0
      %v3382 = vsel %vm404, %v3275, 0
      %v3385 = vsel %vm404, %v3276, 0
      %v3388 = vsel %vm528, %v3278, 0
      %3390 = vmatpush.msra.mxu0 0.0
      %3391 = vmatpush.msra.mxu0 0.0
      %3392 = vmatpush.msra.mxu0 0.0
      %3393 = vmatpush.msra.mxu0 0.0
      %3394 = vmatpush.msra.mxu0 0.0
      %3395 = vmatpush.msra.mxu0 0.0
      %3396 = vmatpush.msra.mxu0 0.0
      %3397 = vmatpush.msra.mxu0 0.0
      %3398 = vmatpush.msra.mxu0 0.0
      %3399 = vmatpush.msra.mxu0 0.0
      %3400 = vmatpush.msra.mxu0 0.0
      %3401 = vmatpush.msra.mxu0 0.0
      %3402 = vmatpush.msra.mxu0 0.0
      %3403 = vmatpush.msra.mxu0 0.0
      %3404 = vmatpush.msra.mxu0 0.0
      %3405 = vmatpush.msra.mxu0 %v3388
      %3406 = vmatmul.f32.gmra.mxu0 %v3280
      %v3407 = vpop.f32.mrf.mxu0
      %v3408 = vadd.f32 0.0, %v3407
      %3409 = vmatmul.f32.gmra.mxu0 %v3283
      %v3410 = vpop.f32.mrf.mxu0
      %v3411 = vadd.f32 0.0, %v3410
      %3412 = vmatmul.f32.gmra.mxu0 %v3286
      %v3413 = vpop.f32.mrf.mxu0
      %v3414 = vadd.f32 0.0, %v3413
      %3415 = vmatmul.f32.gmra.mxu0 %v3289
      %v3416 = vpop.f32.mrf.mxu0
      %v3417 = vadd.f32 0.0, %v3416
      %3418 = vmatmul.f32.gmra.mxu0 %v3292
      %v3419 = vpop.f32.mrf.mxu0
      %v3420 = vadd.f32 0.0, %v3419
      %3421 = vmatmul.f32.gmra.mxu0 %v3295
      %v3422 = vpop.f32.mrf.mxu0
      %v3423 = vadd.f32 0.0, %v3422
      %3424 = vmatmul.f32.gmra.mxu0 %v3298
      %v3425 = vpop.f32.mrf.mxu0
      %v3426 = vadd.f32 0.0, %v3425
      %3427 = vmatmul.f32.gmra.mxu0 %v3301
      %v3428 = vpop.f32.mrf.mxu0
      %v3429 = vadd.f32 0.0, %v3428
      %3430 = vmatmul.f32.gmra.mxu0 %v3304
      %v3431 = vpop.f32.mrf.mxu0
      %v3432 = vadd.f32 0.0, %v3431
      %3433 = vmatmul.f32.gmra.mxu0 %v3307
      %v3434 = vpop.f32.mrf.mxu0
      %v3435 = vadd.f32 0.0, %v3434
      %3436 = vmatmul.f32.gmra.mxu0 %v3310
      %v3437 = vpop.f32.mrf.mxu0
      %v3438 = vadd.f32 0.0, %v3437
      %3439 = vmatmul.f32.gmra.mxu0 %v3313
      %v3440 = vpop.f32.mrf.mxu0
      %v3441 = vadd.f32 0.0, %v3440
      %3442 = vmatmul.f32.gmra.mxu0 %v3316
      %v3443 = vpop.f32.mrf.mxu0
      %v3444 = vadd.f32 0.0, %v3443
      %3445 = vmatmul.f32.gmra.mxu0 %v3319
      %v3446 = vpop.f32.mrf.mxu0
      %v3447 = vadd.f32 0.0, %v3446
      %3448 = vmatmul.f32.gmra.mxu0 %v3322
      %v3449 = vpop.f32.mrf.mxu0
      %v3450 = vadd.f32 0.0, %v3449
      %3451 = vmatmul.f32.gmra.mxu0 %v3325
      %v3452 = vpop.f32.mrf.mxu0
      %v3453 = vadd.f32 0.0, %v3452
      %3454 = vmatmul.f32.gmra.mxu0 %v3328
      %v3455 = vpop.f32.mrf.mxu0
      %v3456 = vadd.f32 0.0, %v3455
      %3457 = vmatmul.f32.gmra.mxu0 %v3331
      %v3458 = vpop.f32.mrf.mxu0
      %v3459 = vadd.f32 0.0, %v3458
      %3460 = vmatmul.f32.gmra.mxu0 %v3334
      %v3461 = vpop.f32.mrf.mxu0
      %v3462 = vadd.f32 0.0, %v3461
      %3463 = vmatmul.f32.gmra.mxu0 %v3337
      %v3464 = vpop.f32.mrf.mxu0
      %v3465 = vadd.f32 0.0, %v3464
      %3466 = vmatmul.f32.gmra.mxu0 %v3340
      %v3467 = vpop.f32.mrf.mxu0
      %v3468 = vadd.f32 0.0, %v3467
      %3469 = vmatmul.f32.gmra.mxu0 %v3343
      %v3470 = vpop.f32.mrf.mxu0
      %v3471 = vadd.f32 0.0, %v3470
      %3472 = vmatmul.f32.gmra.mxu0 %v3346
      %v3473 = vpop.f32.mrf.mxu0
      %v3474 = vadd.f32 0.0, %v3473
      %3475 = vmatmul.f32.gmra.mxu0 %v3349
      %v3476 = vpop.f32.mrf.mxu0
      %v3477 = vadd.f32 0.0, %v3476
      %3478 = vmatmul.f32.gmra.mxu0 %v3352
      %v3479 = vpop.f32.mrf.mxu0
      %v3480 = vadd.f32 0.0, %v3479
      %3481 = vmatmul.f32.gmra.mxu0 %v3355
      %v3482 = vpop.f32.mrf.mxu0
      %v3483 = vadd.f32 0.0, %v3482
      %3484 = vmatmul.f32.gmra.mxu0 %v3358
      %v3485 = vpop.f32.mrf.mxu0
      %v3486 = vadd.f32 0.0, %v3485
      %3487 = vmatmul.f32.gmra.mxu0 %v3361
      %v3488 = vpop.f32.mrf.mxu0
      %v3489 = vadd.f32 0.0, %v3488
      %3490 = vmatmul.f32.gmra.mxu0 %v3364
      %v3491 = vpop.f32.mrf.mxu0
      %v3492 = vadd.f32 0.0, %v3491
      %3493 = vmatmul.f32.gmra.mxu0 %v3367
      %v3494 = vpop.f32.mrf.mxu0
      %v3495 = vadd.f32 0.0, %v3494
      %3496 = vmatmul.f32.gmra.mxu0 %v3370
      %v3497 = vpop.f32.mrf.mxu0
      %v3498 = vadd.f32 0.0, %v3497
      %3499 = vmatmul.f32.gmra.mxu0 %v3373
      %v3500 = vpop.f32.mrf.mxu0
      %v3501 = vadd.f32 0.0, %v3500
      %3502 = vmatmul.f32.gmra.mxu0 %v3376
      %v3503 = vpop.f32.mrf.mxu0
      %v3504 = vadd.f32 0.0, %v3503
      %3505 = vmatmul.f32.gmra.mxu0 %v3379
      %v3506 = vpop.f32.mrf.mxu0
      %v3507 = vadd.f32 0.0, %v3506
      %3508 = vmatmul.f32.gmra.mxu0 %v3382
      %v3509 = vpop.f32.mrf.mxu0
      %v3510 = vadd.f32 0.0, %v3509
      %3511 = vmatmul.f32.gmra.mxu0 %v3385
      %v3512 = vpop.f32.mrf.mxu0
      %v3513 = vadd.f32 0.0, %v3512
      %3514 = vdwg.mxu0
      %v3515 = vadd.f32 %v3205, %v3408
      %v3516 = vadd.f32 %v3206, %v3411
      %v3517 = vadd.f32 %v3207, %v3414
      %v3518 = vadd.f32 %v3208, %v3417
      %v3519 = vadd.f32 %v3209, %v3420
      %v3520 = vadd.f32 %v3210, %v3423
      %v3521 = vadd.f32 %v3211, %v3426
      %v3522 = vadd.f32 %v3212, %v3429
      %v3523 = vadd.f32 %v3213, %v3432
      %v3524 = vadd.f32 %v3214, %v3435
      %v3525 = vadd.f32 %v3215, %v3438
      %v3526 = vadd.f32 %v3216, %v3441
      %v3527 = vadd.f32 %v3217, %v3444
      %v3528 = vadd.f32 %v3218, %v3447
      %v3529 = vadd.f32 %v3219, %v3450
      %v3530 = vadd.f32 %v3220, %v3453
      %v3531 = vadd.f32 %v3221, %v3456
      %v3532 = vadd.f32 %v3222, %v3459
      %v3533 = vadd.f32 %v3223, %v3462
      %v3534 = vadd.f32 %v3224, %v3465
      %v3535 = vadd.f32 %v3225, %v3468
      %v3536 = vadd.f32 %v3226, %v3471
      %v3537 = vadd.f32 %v3227, %v3474
      %v3538 = vadd.f32 %v3228, %v3477
      %v3539 = vadd.f32 %v3229, %v3480
      %v3540 = vadd.f32 %v3230, %v3483
      %v3541 = vadd.f32 %v3231, %v3486
      %v3542 = vadd.f32 %v3232, %v3489
      %v3543 = vadd.f32 %v3233, %v3492
      %v3544 = vadd.f32 %v3234, %v3495
      %v3545 = vadd.f32 %v3235, %v3498
      %v3546 = vadd.f32 %v3236, %v3501
      %v3547 = vadd.f32 %v3237, %v3504
      %v3548 = vadd.f32 %v3238, %v3507
      %v3549 = vadd.f32 %v3239, %v3510
      %v3550 = vadd.f32 %v3240, %v3513
      %v3551 = vld [vmem:[#allocation2 + $0x25] sm:$0xff]
      %v3552 = vld [vmem:[#allocation2 + $0x2d] sm:$0xff]
      %v3553 = vld [vmem:[#allocation2 + $0x35] sm:$0xff]
      %v3554 = vld [vmem:[#allocation2 + $0x3d] sm:$0xff]
      %v3555 = vld [vmem:[#allocation2 + $0x45] sm:$0xff]
      %v3556 = vld [vmem:[#allocation2 + $0x4d] sm:$0xff]
      %v3557 = vld [vmem:[#allocation2 + $0x55] sm:$0xff]
      %v3558 = vld [vmem:[#allocation2 + $0x5d] sm:$0xff]
      %v3559 = vld [vmem:[#allocation2 + $0x65] sm:$0xff]
      %v3560 = vld [vmem:[#allocation2 + $0x6d] sm:$0xff]
      %v3561 = vld [vmem:[#allocation2 + $0x75] sm:$0xff]
      %v3562 = vld [vmem:[#allocation2 + $0x7d] sm:$0xff]
      %v3563 = vld [vmem:[#allocation2 + $0x85] sm:$0xff]
      %v3564 = vld [vmem:[#allocation2 + $0x8d] sm:$0xff]
      %v3565 = vld [vmem:[#allocation2 + $0x95] sm:$0xff]
      %v3566 = vld [vmem:[#allocation2 + $0x9d] sm:$0xff]
      %v3567 = vld [vmem:[#allocation2 + $0xa5] sm:$0xff]
      %v3568 = vld [vmem:[#allocation2 + $0xad] sm:$0xff]
      %v3569 = vld [vmem:[#allocation2 + $0xb5] sm:$0xff]
      %v3570 = vld [vmem:[#allocation2 + $0xbd] sm:$0xff]
      %v3571 = vld [vmem:[#allocation2 + $0xc5] sm:$0xff]
      %v3572 = vld [vmem:[#allocation2 + $0xcd] sm:$0xff]
      %v3573 = vld [vmem:[#allocation2 + $0xd5] sm:$0xff]
      %v3574 = vld [vmem:[#allocation2 + $0xdd] sm:$0xff]
      %v3575 = vld [vmem:[#allocation2 + $0xe5] sm:$0xff]
      %v3576 = vld [vmem:[#allocation2 + $0xed] sm:$0xff]
      %v3577 = vld [vmem:[#allocation2 + $0xf5] sm:$0xff]
      %v3578 = vld [vmem:[#allocation2 + $0xfd] sm:$0xff]
      %v3579 = vld [vmem:[#allocation2 + $0x105] sm:$0xff]
      %v3580 = vld [vmem:[#allocation2 + $0x10d] sm:$0xff]
      %v3581 = vld [vmem:[#allocation2 + $0x115] sm:$0xff]
      %v3582 = vld [vmem:[#allocation2 + $0x11d] sm:$0xff]
      %v3583 = vld [vmem:[#allocation2 + $0x125] sm:$0xff]
      %v3584 = vld [vmem:[#allocation2 + $0x12d] sm:$0xff]
      %v3585 = vld [vmem:[#allocation2 + $0x135] sm:$0xff]
      %v3586 = vld [vmem:[#allocation2 + $0x13d] sm:$0xff]
      %s3587 = scalar_lea.vmem %s3, 28
      %v3588 = vld [vmem:[%s3587] sm:$0xf]
      %v3590 = vsel %vm404, %v3551, 0
      %v3593 = vsel %vm404, %v3552, 0
      %v3596 = vsel %vm404, %v3553, 0
      %v3599 = vsel %vm404, %v3554, 0
      %v3602 = vsel %vm404, %v3555, 0
      %v3605 = vsel %vm404, %v3556, 0
      %v3608 = vsel %vm404, %v3557, 0
      %v3611 = vsel %vm404, %v3558, 0
      %v3614 = vsel %vm404, %v3559, 0
      %v3617 = vsel %vm404, %v3560, 0
      %v3620 = vsel %vm404, %v3561, 0
      %v3623 = vsel %vm404, %v3562, 0
      %v3626 = vsel %vm404, %v3563, 0
      %v3629 = vsel %vm404, %v3564, 0
      %v3632 = vsel %vm404, %v3565, 0
      %v3635 = vsel %vm404, %v3566, 0
      %v3638 = vsel %vm404, %v3567, 0
      %v3641 = vsel %vm404, %v3568, 0
      %v3644 = vsel %vm404, %v3569, 0
      %v3647 = vsel %vm404, %v3570, 0
      %v3650 = vsel %vm404, %v3571, 0
      %v3653 = vsel %vm404, %v3572, 0
      %v3656 = vsel %vm404, %v3573, 0
      %v3659 = vsel %vm404, %v3574, 0
      %v3662 = vsel %vm404, %v3575, 0
      %v3665 = vsel %vm404, %v3576, 0
      %v3668 = vsel %vm404, %v3577, 0
      %v3671 = vsel %vm404, %v3578, 0
      %v3674 = vsel %vm404, %v3579, 0
      %v3677 = vsel %vm404, %v3580, 0
      %v3680 = vsel %vm404, %v3581, 0
      %v3683 = vsel %vm404, %v3582, 0
      %v3686 = vsel %vm404, %v3583, 0
      %v3689 = vsel %vm404, %v3584, 0
      %v3692 = vsel %vm404, %v3585, 0
      %v3695 = vsel %vm404, %v3586, 0
      %v3698 = vsel %vm528, %v3588, 0
      %3700 = vmatpush.msra.mxu0 0.0
      %3701 = vmatpush.msra.mxu0 0.0
      %3702 = vmatpush.msra.mxu0 0.0
      %3703 = vmatpush.msra.mxu0 0.0
      %3704 = vmatpush.msra.mxu0 0.0
      %3705 = vmatpush.msra.mxu0 0.0
      %3706 = vmatpush.msra.mxu0 0.0
      %3707 = vmatpush.msra.mxu0 0.0
      %3708 = vmatpush.msra.mxu0 0.0
      %3709 = vmatpush.msra.mxu0 0.0
      %3710 = vmatpush.msra.mxu0 0.0
      %3711 = vmatpush.msra.mxu0 0.0
      %3712 = vmatpush.msra.mxu0 0.0
      %3713 = vmatpush.msra.mxu0 0.0
      %3714 = vmatpush.msra.mxu0 0.0
      %3715 = vmatpush.msra.mxu0 %v3698
      %3716 = vmatmul.f32.gmra.mxu0 %v3590
      %v3717 = vpop.f32.mrf.mxu0
      %v3718 = vadd.f32 0.0, %v3717
      %3719 = vmatmul.f32.gmra.mxu0 %v3593
      %v3720 = vpop.f32.mrf.mxu0
      %v3721 = vadd.f32 0.0, %v3720
      %3722 = vmatmul.f32.gmra.mxu0 %v3596
      %v3723 = vpop.f32.mrf.mxu0
      %v3724 = vadd.f32 0.0, %v3723
      %3725 = vmatmul.f32.gmra.mxu0 %v3599
      %v3726 = vpop.f32.mrf.mxu0
      %v3727 = vadd.f32 0.0, %v3726
      %3728 = vmatmul.f32.gmra.mxu0 %v3602
      %v3729 = vpop.f32.mrf.mxu0
      %v3730 = vadd.f32 0.0, %v3729
      %3731 = vmatmul.f32.gmra.mxu0 %v3605
      %v3732 = vpop.f32.mrf.mxu0
      %v3733 = vadd.f32 0.0, %v3732
      %3734 = vmatmul.f32.gmra.mxu0 %v3608
      %v3735 = vpop.f32.mrf.mxu0
      %v3736 = vadd.f32 0.0, %v3735
      %3737 = vmatmul.f32.gmra.mxu0 %v3611
      %v3738 = vpop.f32.mrf.mxu0
      %v3739 = vadd.f32 0.0, %v3738
      %3740 = vmatmul.f32.gmra.mxu0 %v3614
      %v3741 = vpop.f32.mrf.mxu0
      %v3742 = vadd.f32 0.0, %v3741
      %3743 = vmatmul.f32.gmra.mxu0 %v3617
      %v3744 = vpop.f32.mrf.mxu0
      %v3745 = vadd.f32 0.0, %v3744
      %3746 = vmatmul.f32.gmra.mxu0 %v3620
      %v3747 = vpop.f32.mrf.mxu0
      %v3748 = vadd.f32 0.0, %v3747
      %3749 = vmatmul.f32.gmra.mxu0 %v3623
      %v3750 = vpop.f32.mrf.mxu0
      %v3751 = vadd.f32 0.0, %v3750
      %3752 = vmatmul.f32.gmra.mxu0 %v3626
      %v3753 = vpop.f32.mrf.mxu0
      %v3754 = vadd.f32 0.0, %v3753
      %3755 = vmatmul.f32.gmra.mxu0 %v3629
      %v3756 = vpop.f32.mrf.mxu0
      %v3757 = vadd.f32 0.0, %v3756
      %3758 = vmatmul.f32.gmra.mxu0 %v3632
      %v3759 = vpop.f32.mrf.mxu0
      %v3760 = vadd.f32 0.0, %v3759
      %3761 = vmatmul.f32.gmra.mxu0 %v3635
      %v3762 = vpop.f32.mrf.mxu0
      %v3763 = vadd.f32 0.0, %v3762
      %3764 = vmatmul.f32.gmra.mxu0 %v3638
      %v3765 = vpop.f32.mrf.mxu0
      %v3766 = vadd.f32 0.0, %v3765
      %3767 = vmatmul.f32.gmra.mxu0 %v3641
      %v3768 = vpop.f32.mrf.mxu0
      %v3769 = vadd.f32 0.0, %v3768
      %3770 = vmatmul.f32.gmra.mxu0 %v3644
      %v3771 = vpop.f32.mrf.mxu0
      %v3772 = vadd.f32 0.0, %v3771
      %3773 = vmatmul.f32.gmra.mxu0 %v3647
      %v3774 = vpop.f32.mrf.mxu0
      %v3775 = vadd.f32 0.0, %v3774
      %3776 = vmatmul.f32.gmra.mxu0 %v3650
      %v3777 = vpop.f32.mrf.mxu0
      %v3778 = vadd.f32 0.0, %v3777
      %3779 = vmatmul.f32.gmra.mxu0 %v3653
      %v3780 = vpop.f32.mrf.mxu0
      %v3781 = vadd.f32 0.0, %v3780
      %3782 = vmatmul.f32.gmra.mxu0 %v3656
      %v3783 = vpop.f32.mrf.mxu0
      %v3784 = vadd.f32 0.0, %v3783
      %3785 = vmatmul.f32.gmra.mxu0 %v3659
      %v3786 = vpop.f32.mrf.mxu0
      %v3787 = vadd.f32 0.0, %v3786
      %3788 = vmatmul.f32.gmra.mxu0 %v3662
      %v3789 = vpop.f32.mrf.mxu0
      %v3790 = vadd.f32 0.0, %v3789
      %3791 = vmatmul.f32.gmra.mxu0 %v3665
      %v3792 = vpop.f32.mrf.mxu0
      %v3793 = vadd.f32 0.0, %v3792
      %3794 = vmatmul.f32.gmra.mxu0 %v3668
      %v3795 = vpop.f32.mrf.mxu0
      %v3796 = vadd.f32 0.0, %v3795
      %3797 = vmatmul.f32.gmra.mxu0 %v3671
      %v3798 = vpop.f32.mrf.mxu0
      %v3799 = vadd.f32 0.0, %v3798
      %3800 = vmatmul.f32.gmra.mxu0 %v3674
      %v3801 = vpop.f32.mrf.mxu0
      %v3802 = vadd.f32 0.0, %v3801
      %3803 = vmatmul.f32.gmra.mxu0 %v3677
      %v3804 = vpop.f32.mrf.mxu0
      %v3805 = vadd.f32 0.0, %v3804
      %3806 = vmatmul.f32.gmra.mxu0 %v3680
      %v3807 = vpop.f32.mrf.mxu0
      %v3808 = vadd.f32 0.0, %v3807
      %3809 = vmatmul.f32.gmra.mxu0 %v3683
      %v3810 = vpop.f32.mrf.mxu0
      %v3811 = vadd.f32 0.0, %v3810
      %3812 = vmatmul.f32.gmra.mxu0 %v3686
      %v3813 = vpop.f32.mrf.mxu0
      %v3814 = vadd.f32 0.0, %v3813
      %3815 = vmatmul.f32.gmra.mxu0 %v3689
      %v3816 = vpop.f32.mrf.mxu0
      %v3817 = vadd.f32 0.0, %v3816
      %3818 = vmatmul.f32.gmra.mxu0 %v3692
      %v3819 = vpop.f32.mrf.mxu0
      %v3820 = vadd.f32 0.0, %v3819
      %3821 = vmatmul.f32.gmra.mxu0 %v3695
      %v3822 = vpop.f32.mrf.mxu0
      %v3823 = vadd.f32 0.0, %v3822
      %3824 = vdwg.mxu0
      %v3825 = vadd.f32 %v3515, %v3718
      %v3826 = vadd.f32 %v3516, %v3721
      %v3827 = vadd.f32 %v3517, %v3724
      %v3828 = vadd.f32 %v3518, %v3727
      %v3829 = vadd.f32 %v3519, %v3730
      %v3830 = vadd.f32 %v3520, %v3733
      %v3831 = vadd.f32 %v3521, %v3736
      %v3832 = vadd.f32 %v3522, %v3739
      %v3833 = vadd.f32 %v3523, %v3742
      %v3834 = vadd.f32 %v3524, %v3745
      %v3835 = vadd.f32 %v3525, %v3748
      %v3836 = vadd.f32 %v3526, %v3751
      %v3837 = vadd.f32 %v3527, %v3754
      %v3838 = vadd.f32 %v3528, %v3757
      %v3839 = vadd.f32 %v3529, %v3760
      %v3840 = vadd.f32 %v3530, %v3763
      %v3841 = vadd.f32 %v3531, %v3766
      %v3842 = vadd.f32 %v3532, %v3769
      %v3843 = vadd.f32 %v3533, %v3772
      %v3844 = vadd.f32 %v3534, %v3775
      %v3845 = vadd.f32 %v3535, %v3778
      %v3846 = vadd.f32 %v3536, %v3781
      %v3847 = vadd.f32 %v3537, %v3784
      %v3848 = vadd.f32 %v3538, %v3787
      %v3849 = vadd.f32 %v3539, %v3790
      %v3850 = vadd.f32 %v3540, %v3793
      %v3851 = vadd.f32 %v3541, %v3796
      %v3852 = vadd.f32 %v3542, %v3799
      %v3853 = vadd.f32 %v3543, %v3802
      %v3854 = vadd.f32 %v3544, %v3805
      %v3855 = vadd.f32 %v3545, %v3808
      %v3856 = vadd.f32 %v3546, %v3811
      %v3857 = vadd.f32 %v3547, %v3814
      %v3858 = vadd.f32 %v3548, %v3817
      %v3859 = vadd.f32 %v3549, %v3820
      %v3860 = vadd.f32 %v3550, %v3823
      %v3861 = vld [vmem:[#allocation2 + $0x26] sm:$0xff]
      %v3862 = vld [vmem:[#allocation2 + $0x2e] sm:$0xff]
      %v3863 = vld [vmem:[#allocation2 + $0x36] sm:$0xff]
      %v3864 = vld [vmem:[#allocation2 + $0x3e] sm:$0xff]
      %v3865 = vld [vmem:[#allocation2 + $0x46] sm:$0xff]
      %v3866 = vld [vmem:[#allocation2 + $0x4e] sm:$0xff]
      %v3867 = vld [vmem:[#allocation2 + $0x56] sm:$0xff]
      %v3868 = vld [vmem:[#allocation2 + $0x5e] sm:$0xff]
      %v3869 = vld [vmem:[#allocation2 + $0x66] sm:$0xff]
      %v3870 = vld [vmem:[#allocation2 + $0x6e] sm:$0xff]
      %v3871 = vld [vmem:[#allocation2 + $0x76] sm:$0xff]
      %v3872 = vld [vmem:[#allocation2 + $0x7e] sm:$0xff]
      %v3873 = vld [vmem:[#allocation2 + $0x86] sm:$0xff]
      %v3874 = vld [vmem:[#allocation2 + $0x8e] sm:$0xff]
      %v3875 = vld [vmem:[#allocation2 + $0x96] sm:$0xff]
      %v3876 = vld [vmem:[#allocation2 + $0x9e] sm:$0xff]
      %v3877 = vld [vmem:[#allocation2 + $0xa6] sm:$0xff]
      %v3878 = vld [vmem:[#allocation2 + $0xae] sm:$0xff]
      %v3879 = vld [vmem:[#allocation2 + $0xb6] sm:$0xff]
      %v3880 = vld [vmem:[#allocation2 + $0xbe] sm:$0xff]
      %v3881 = vld [vmem:[#allocation2 + $0xc6] sm:$0xff]
      %v3882 = vld [vmem:[#allocation2 + $0xce] sm:$0xff]
      %v3883 = vld [vmem:[#allocation2 + $0xd6] sm:$0xff]
      %v3884 = vld [vmem:[#allocation2 + $0xde] sm:$0xff]
      %v3885 = vld [vmem:[#allocation2 + $0xe6] sm:$0xff]
      %v3886 = vld [vmem:[#allocation2 + $0xee] sm:$0xff]
      %v3887 = vld [vmem:[#allocation2 + $0xf6] sm:$0xff]
      %v3888 = vld [vmem:[#allocation2 + $0xfe] sm:$0xff]
      %v3889 = vld [vmem:[#allocation2 + $0x106] sm:$0xff]
      %v3890 = vld [vmem:[#allocation2 + $0x10e] sm:$0xff]
      %v3891 = vld [vmem:[#allocation2 + $0x116] sm:$0xff]
      %v3892 = vld [vmem:[#allocation2 + $0x11e] sm:$0xff]
      %v3893 = vld [vmem:[#allocation2 + $0x126] sm:$0xff]
      %v3894 = vld [vmem:[#allocation2 + $0x12e] sm:$0xff]
      %v3895 = vld [vmem:[#allocation2 + $0x136] sm:$0xff]
      %v3896 = vld [vmem:[#allocation2 + $0x13e] sm:$0xff]
      %s3897 = scalar_lea.vmem %s3, 32
      %v3898 = vld [vmem:[%s3897] sm:$0xf]
      %v3900 = vsel %vm404, %v3861, 0
      %v3903 = vsel %vm404, %v3862, 0
      %v3906 = vsel %vm404, %v3863, 0
      %v3909 = vsel %vm404, %v3864, 0
      %v3912 = vsel %vm404, %v3865, 0
      %v3915 = vsel %vm404, %v3866, 0
      %v3918 = vsel %vm404, %v3867, 0
      %v3921 = vsel %vm404, %v3868, 0
      %v3924 = vsel %vm404, %v3869, 0
      %v3927 = vsel %vm404, %v3870, 0
      %v3930 = vsel %vm404, %v3871, 0
      %v3933 = vsel %vm404, %v3872, 0
      %v3936 = vsel %vm404, %v3873, 0
      %v3939 = vsel %vm404, %v3874, 0
      %v3942 = vsel %vm404, %v3875, 0
      %v3945 = vsel %vm404, %v3876, 0
      %v3948 = vsel %vm404, %v3877, 0
      %v3951 = vsel %vm404, %v3878, 0
      %v3954 = vsel %vm404, %v3879, 0
      %v3957 = vsel %vm404, %v3880, 0
      %v3960 = vsel %vm404, %v3881, 0
      %v3963 = vsel %vm404, %v3882, 0
      %v3966 = vsel %vm404, %v3883, 0
      %v3969 = vsel %vm404, %v3884, 0
      %v3972 = vsel %vm404, %v3885, 0
      %v3975 = vsel %vm404, %v3886, 0
      %v3978 = vsel %vm404, %v3887, 0
      %v3981 = vsel %vm404, %v3888, 0
      %v3984 = vsel %vm404, %v3889, 0
      %v3987 = vsel %vm404, %v3890, 0
      %v3990 = vsel %vm404, %v3891, 0
      %v3993 = vsel %vm404, %v3892, 0
      %v3996 = vsel %vm404, %v3893, 0
      %v3999 = vsel %vm404, %v3894, 0
      %v4002 = vsel %vm404, %v3895, 0
      %v4005 = vsel %vm404, %v3896, 0
      %v4008 = vsel %vm528, %v3898, 0
      %4010 = vmatpush.msra.mxu0 0.0
      %4011 = vmatpush.msra.mxu0 0.0
      %4012 = vmatpush.msra.mxu0 0.0
      %4013 = vmatpush.msra.mxu0 0.0
      %4014 = vmatpush.msra.mxu0 0.0
      %4015 = vmatpush.msra.mxu0 0.0
      %4016 = vmatpush.msra.mxu0 0.0
      %4017 = vmatpush.msra.mxu0 0.0
      %4018 = vmatpush.msra.mxu0 0.0
      %4019 = vmatpush.msra.mxu0 0.0
      %4020 = vmatpush.msra.mxu0 0.0
      %4021 = vmatpush.msra.mxu0 0.0
      %4022 = vmatpush.msra.mxu0 0.0
      %4023 = vmatpush.msra.mxu0 0.0
      %4024 = vmatpush.msra.mxu0 0.0
      %4025 = vmatpush.msra.mxu0 %v4008
      %4026 = vmatmul.f32.gmra.mxu0 %v3900
      %v4027 = vpop.f32.mrf.mxu0
      %v4028 = vadd.f32 0.0, %v4027
      %4029 = vmatmul.f32.gmra.mxu0 %v3903
      %v4030 = vpop.f32.mrf.mxu0
      %v4031 = vadd.f32 0.0, %v4030
      %4032 = vmatmul.f32.gmra.mxu0 %v3906
      %v4033 = vpop.f32.mrf.mxu0
      %v4034 = vadd.f32 0.0, %v4033
      %4035 = vmatmul.f32.gmra.mxu0 %v3909
      %v4036 = vpop.f32.mrf.mxu0
      %v4037 = vadd.f32 0.0, %v4036
      %4038 = vmatmul.f32.gmra.mxu0 %v3912
      %v4039 = vpop.f32.mrf.mxu0
      %v4040 = vadd.f32 0.0, %v4039
      %4041 = vmatmul.f32.gmra.mxu0 %v3915
      %v4042 = vpop.f32.mrf.mxu0
      %v4043 = vadd.f32 0.0, %v4042
      %4044 = vmatmul.f32.gmra.mxu0 %v3918
      %v4045 = vpop.f32.mrf.mxu0
      %v4046 = vadd.f32 0.0, %v4045
      %4047 = vmatmul.f32.gmra.mxu0 %v3921
      %v4048 = vpop.f32.mrf.mxu0
      %v4049 = vadd.f32 0.0, %v4048
      %4050 = vmatmul.f32.gmra.mxu0 %v3924
      %v4051 = vpop.f32.mrf.mxu0
      %v4052 = vadd.f32 0.0, %v4051
      %4053 = vmatmul.f32.gmra.mxu0 %v3927
      %v4054 = vpop.f32.mrf.mxu0
      %v4055 = vadd.f32 0.0, %v4054
      %4056 = vmatmul.f32.gmra.mxu0 %v3930
      %v4057 = vpop.f32.mrf.mxu0
      %v4058 = vadd.f32 0.0, %v4057
      %4059 = vmatmul.f32.gmra.mxu0 %v3933
      %v4060 = vpop.f32.mrf.mxu0
      %v4061 = vadd.f32 0.0, %v4060
      %4062 = vmatmul.f32.gmra.mxu0 %v3936
      %v4063 = vpop.f32.mrf.mxu0
      %v4064 = vadd.f32 0.0, %v4063
      %4065 = vmatmul.f32.gmra.mxu0 %v3939
      %v4066 = vpop.f32.mrf.mxu0
      %v4067 = vadd.f32 0.0, %v4066
      %4068 = vmatmul.f32.gmra.mxu0 %v3942
      %v4069 = vpop.f32.mrf.mxu0
      %v4070 = vadd.f32 0.0, %v4069
      %4071 = vmatmul.f32.gmra.mxu0 %v3945
      %v4072 = vpop.f32.mrf.mxu0
      %v4073 = vadd.f32 0.0, %v4072
      %4074 = vmatmul.f32.gmra.mxu0 %v3948
      %v4075 = vpop.f32.mrf.mxu0
      %v4076 = vadd.f32 0.0, %v4075
      %4077 = vmatmul.f32.gmra.mxu0 %v3951
      %v4078 = vpop.f32.mrf.mxu0
      %v4079 = vadd.f32 0.0, %v4078
      %4080 = vmatmul.f32.gmra.mxu0 %v3954
      %v4081 = vpop.f32.mrf.mxu0
      %v4082 = vadd.f32 0.0, %v4081
      %4083 = vmatmul.f32.gmra.mxu0 %v3957
      %v4084 = vpop.f32.mrf.mxu0
      %v4085 = vadd.f32 0.0, %v4084
      %4086 = vmatmul.f32.gmra.mxu0 %v3960
      %v4087 = vpop.f32.mrf.mxu0
      %v4088 = vadd.f32 0.0, %v4087
      %4089 = vmatmul.f32.gmra.mxu0 %v3963
      %v4090 = vpop.f32.mrf.mxu0
      %v4091 = vadd.f32 0.0, %v4090
      %4092 = vmatmul.f32.gmra.mxu0 %v3966
      %v4093 = vpop.f32.mrf.mxu0
      %v4094 = vadd.f32 0.0, %v4093
      %4095 = vmatmul.f32.gmra.mxu0 %v3969
      %v4096 = vpop.f32.mrf.mxu0
      %v4097 = vadd.f32 0.0, %v4096
      %4098 = vmatmul.f32.gmra.mxu0 %v3972
      %v4099 = vpop.f32.mrf.mxu0
      %v4100 = vadd.f32 0.0, %v4099
      %4101 = vmatmul.f32.gmra.mxu0 %v3975
      %v4102 = vpop.f32.mrf.mxu0
      %v4103 = vadd.f32 0.0, %v4102
      %4104 = vmatmul.f32.gmra.mxu0 %v3978
      %v4105 = vpop.f32.mrf.mxu0
      %v4106 = vadd.f32 0.0, %v4105
      %4107 = vmatmul.f32.gmra.mxu0 %v3981
      %v4108 = vpop.f32.mrf.mxu0
      %v4109 = vadd.f32 0.0, %v4108
      %4110 = vmatmul.f32.gmra.mxu0 %v3984
      %v4111 = vpop.f32.mrf.mxu0
      %v4112 = vadd.f32 0.0, %v4111
      %4113 = vmatmul.f32.gmra.mxu0 %v3987
      %v4114 = vpop.f32.mrf.mxu0
      %v4115 = vadd.f32 0.0, %v4114
      %4116 = vmatmul.f32.gmra.mxu0 %v3990
      %v4117 = vpop.f32.mrf.mxu0
      %v4118 = vadd.f32 0.0, %v4117
      %4119 = vmatmul.f32.gmra.mxu0 %v3993
      %v4120 = vpop.f32.mrf.mxu0
      %v4121 = vadd.f32 0.0, %v4120
      %4122 = vmatmul.f32.gmra.mxu0 %v3996
      %v4123 = vpop.f32.mrf.mxu0
      %v4124 = vadd.f32 0.0, %v4123
      %4125 = vmatmul.f32.gmra.mxu0 %v3999
      %v4126 = vpop.f32.mrf.mxu0
      %v4127 = vadd.f32 0.0, %v4126
      %4128 = vmatmul.f32.gmra.mxu0 %v4002
      %v4129 = vpop.f32.mrf.mxu0
      %v4130 = vadd.f32 0.0, %v4129
      %4131 = vmatmul.f32.gmra.mxu0 %v4005
      %v4132 = vpop.f32.mrf.mxu0
      %v4133 = vadd.f32 0.0, %v4132
      %4134 = vdwg.mxu0
      %v4135 = vadd.f32 %v3825, %v4028
      %v4136 = vadd.f32 %v3826, %v4031
      %v4137 = vadd.f32 %v3827, %v4034
      %v4138 = vadd.f32 %v3828, %v4037
      %v4139 = vadd.f32 %v3829, %v4040
      %v4140 = vadd.f32 %v3830, %v4043
      %v4141 = vadd.f32 %v3831, %v4046
      %v4142 = vadd.f32 %v3832, %v4049
      %v4143 = vadd.f32 %v3833, %v4052
      %v4144 = vadd.f32 %v3834, %v4055
      %v4145 = vadd.f32 %v3835, %v4058
      %v4146 = vadd.f32 %v3836, %v4061
      %v4147 = vadd.f32 %v3837, %v4064
      %v4148 = vadd.f32 %v3838, %v4067
      %v4149 = vadd.f32 %v3839, %v4070
      %v4150 = vadd.f32 %v3840, %v4073
      %v4151 = vadd.f32 %v3841, %v4076
      %v4152 = vadd.f32 %v3842, %v4079
      %v4153 = vadd.f32 %v3843, %v4082
      %v4154 = vadd.f32 %v3844, %v4085
      %v4155 = vadd.f32 %v3845, %v4088
      %v4156 = vadd.f32 %v3846, %v4091
      %v4157 = vadd.f32 %v3847, %v4094
      %v4158 = vadd.f32 %v3848, %v4097
      %v4159 = vadd.f32 %v3849, %v4100
      %v4160 = vadd.f32 %v3850, %v4103
      %v4161 = vadd.f32 %v3851, %v4106
      %v4162 = vadd.f32 %v3852, %v4109
      %v4163 = vadd.f32 %v3853, %v4112
      %v4164 = vadd.f32 %v3854, %v4115
      %v4165 = vadd.f32 %v3855, %v4118
      %v4166 = vadd.f32 %v3856, %v4121
      %v4167 = vadd.f32 %v3857, %v4124
      %v4168 = vadd.f32 %v3858, %v4127
      %v4169 = vadd.f32 %v3859, %v4130
      %v4170 = vadd.f32 %v3860, %v4133
      %v4171 = vld [vmem:[%s4] sm:$0x1]
      %v4173 = vperm.slane %v4171, 0
      %v4175 = vadd.f32 %v4135, %v4173
      %v4176 = vadd.f32 %v4136, %v4173
      %v4177 = vadd.f32 %v4137, %v4173
      %v4178 = vadd.f32 %v4138, %v4173
      %v4179 = vadd.f32 %v4139, %v4173
      %v4180 = vadd.f32 %v4140, %v4173
      %v4181 = vadd.f32 %v4141, %v4173
      %v4182 = vadd.f32 %v4142, %v4173
      %v4183 = vadd.f32 %v4143, %v4173
      %v4184 = vadd.f32 %v4144, %v4173
      %v4185 = vadd.f32 %v4145, %v4173
      %v4186 = vadd.f32 %v4146, %v4173
      %v4187 = vadd.f32 %v4147, %v4173
      %v4188 = vadd.f32 %v4148, %v4173
      %v4189 = vadd.f32 %v4149, %v4173
      %v4190 = vadd.f32 %v4150, %v4173
      %v4191 = vadd.f32 %v4151, %v4173
      %v4192 = vadd.f32 %v4152, %v4173
      %v4193 = vadd.f32 %v4153, %v4173
      %v4194 = vadd.f32 %v4154, %v4173
      %v4195 = vadd.f32 %v4155, %v4173
      %v4196 = vadd.f32 %v4156, %v4173
      %v4197 = vadd.f32 %v4157, %v4173
      %v4198 = vadd.f32 %v4158, %v4173
      %v4199 = vadd.f32 %v4159, %v4173
      %v4200 = vadd.f32 %v4160, %v4173
      %v4201 = vadd.f32 %v4161, %v4173
      %v4202 = vadd.f32 %v4162, %v4173
      %v4203 = vadd.f32 %v4163, %v4173
      %v4204 = vadd.f32 %v4164, %v4173
      %v4205 = vadd.f32 %v4165, %v4173
      %v4206 = vadd.f32 %v4166, %v4173
      %v4207 = vadd.f32 %v4167, %v4173
      %v4208 = vadd.f32 %v4168, %v4173
      %v4209 = vadd.f32 %v4169, %v4173
      %v4210 = vadd.f32 %v4170, %v4173
      %v4211 = vmax.f32 %v4175, 0.0
      %v4212 = vmax.f32 %v4176, 0.0
      %v4213 = vmax.f32 %v4177, 0.0
      %v4214 = vmax.f32 %v4178, 0.0
      %v4215 = vmax.f32 %v4179, 0.0
      %v4216 = vmax.f32 %v4180, 0.0
      %v4217 = vmax.f32 %v4181, 0.0
      %v4218 = vmax.f32 %v4182, 0.0
      %v4219 = vmax.f32 %v4183, 0.0
      %v4220 = vmax.f32 %v4184, 0.0
      %v4221 = vmax.f32 %v4185, 0.0
      %v4222 = vmax.f32 %v4186, 0.0
      %v4223 = vmax.f32 %v4187, 0.0
      %v4224 = vmax.f32 %v4188, 0.0
      %v4225 = vmax.f32 %v4189, 0.0
      %v4226 = vmax.f32 %v4190, 0.0
      %v4227 = vmax.f32 %v4191, 0.0
      %v4228 = vmax.f32 %v4192, 0.0
      %v4229 = vmax.f32 %v4193, 0.0
      %v4230 = vmax.f32 %v4194, 0.0
      %v4231 = vmax.f32 %v4195, 0.0
      %v4232 = vmax.f32 %v4196, 0.0
      %v4233 = vmax.f32 %v4197, 0.0
      %v4234 = vmax.f32 %v4198, 0.0
      %v4235 = vmax.f32 %v4199, 0.0
      %v4236 = vmax.f32 %v4200, 0.0
      %v4237 = vmax.f32 %v4201, 0.0
      %v4238 = vmax.f32 %v4202, 0.0
      %v4239 = vmax.f32 %v4203, 0.0
      %v4240 = vmax.f32 %v4204, 0.0
      %v4241 = vmax.f32 %v4205, 0.0
      %v4242 = vmax.f32 %v4206, 0.0
      %v4243 = vmax.f32 %v4207, 0.0
      %v4244 = vmax.f32 %v4208, 0.0
      %v4245 = vmax.f32 %v4209, 0.0
      %v4246 = vmax.f32 %v4210, 0.0
      %v4247 = vld [vmem:[%s5] sm:$0xf]
      %v4248 = vld [vmem:[%s6] sm:$0x1]
      %v4250 = vperm.slane %v4248, 0
      %v4253 = vsel %vm404, %v4211, 0
      %v4256 = vsel %vm404, %v4212, 0
      %v4259 = vsel %vm404, %v4213, 0
      %v4262 = vsel %vm404, %v4214, 0
      %v4265 = vsel %vm404, %v4215, 0
      %v4268 = vsel %vm404, %v4216, 0
      %v4271 = vsel %vm404, %v4217, 0
      %v4274 = vsel %vm404, %v4218, 0
      %v4277 = vsel %vm404, %v4219, 0
      %v4280 = vsel %vm404, %v4220, 0
      %v4283 = vsel %vm404, %v4221, 0
      %v4286 = vsel %vm404, %v4222, 0
      %v4289 = vsel %vm404, %v4223, 0
      %v4292 = vsel %vm404, %v4224, 0
      %v4295 = vsel %vm404, %v4225, 0
      %v4298 = vsel %vm404, %v4226, 0
      %v4301 = vsel %vm404, %v4227, 0
      %v4304 = vsel %vm404, %v4228, 0
      %v4307 = vsel %vm404, %v4229, 0
      %v4310 = vsel %vm404, %v4230, 0
      %v4313 = vsel %vm404, %v4231, 0
      %v4316 = vsel %vm404, %v4232, 0
      %v4319 = vsel %vm404, %v4233, 0
      %v4322 = vsel %vm404, %v4234, 0
      %v4325 = vsel %vm404, %v4235, 0
      %v4328 = vsel %vm404, %v4236, 0
      %v4331 = vsel %vm404, %v4237, 0
      %v4334 = vsel %vm404, %v4238, 0
      %v4337 = vsel %vm404, %v4239, 0
      %v4340 = vsel %vm404, %v4240, 0
      %v4343 = vsel %vm404, %v4241, 0
      %v4346 = vsel %vm404, %v4242, 0
      %v4349 = vsel %vm404, %v4243, 0
      %v4352 = vsel %vm404, %v4244, 0
      %v4355 = vsel %vm404, %v4245, 0
      %v4358 = vsel %vm404, %v4246, 0
      %v4361 = vsel %vm528, %v4247, 0
      %4363 = vmatpush.msra.mxu0 0.0
      %4364 = vmatpush.msra.mxu0 0.0
      %4365 = vmatpush.msra.mxu0 0.0
      %4366 = vmatpush.msra.mxu0 0.0
      %4367 = vmatpush.msra.mxu0 0.0
      %4368 = vmatpush.msra.mxu0 0.0
      %4369 = vmatpush.msra.mxu0 0.0
      %4370 = vmatpush.msra.mxu0 0.0
      %4371 = vmatpush.msra.mxu0 0.0
      %4372 = vmatpush.msra.mxu0 0.0
      %4373 = vmatpush.msra.mxu0 0.0
      %4374 = vmatpush.msra.mxu0 0.0
      %4375 = vmatpush.msra.mxu0 0.0
      %4376 = vmatpush.msra.mxu0 0.0
      %4377 = vmatpush.msra.mxu0 0.0
      %4378 = vmatpush.msra.mxu0 %v4361
      %4379 = vmatmul.f32.gmra.mxu0 %v4253
      %v4380 = vpop.f32.mrf.mxu0
      %v4381 = vadd.f32 %v4250, %v4380
      %4382 = vmatmul.f32.gmra.mxu0 %v4256
      %v4383 = vpop.f32.mrf.mxu0
      %v4384 = vadd.f32 %v4250, %v4383
      %4385 = vmatmul.f32.gmra.mxu0 %v4259
      %v4386 = vpop.f32.mrf.mxu0
      %v4387 = vadd.f32 %v4250, %v4386
      %4388 = vmatmul.f32.gmra.mxu0 %v4262
      %v4389 = vpop.f32.mrf.mxu0
      %v4390 = vadd.f32 %v4250, %v4389
      %4391 = vmatmul.f32.gmra.mxu0 %v4265
      %v4392 = vpop.f32.mrf.mxu0
      %v4393 = vadd.f32 %v4250, %v4392
      %4394 = vmatmul.f32.gmra.mxu0 %v4268
      %v4395 = vpop.f32.mrf.mxu0
      %v4396 = vadd.f32 %v4250, %v4395
      %4397 = vmatmul.f32.gmra.mxu0 %v4271
      %v4398 = vpop.f32.mrf.mxu0
      %v4399 = vadd.f32 %v4250, %v4398
      %4400 = vmatmul.f32.gmra.mxu0 %v4274
      %v4401 = vpop.f32.mrf.mxu0
      %v4402 = vadd.f32 %v4250, %v4401
      %4403 = vmatmul.f32.gmra.mxu0 %v4277
      %v4404 = vpop.f32.mrf.mxu0
      %v4405 = vadd.f32 %v4250, %v4404
      %4406 = vmatmul.f32.gmra.mxu0 %v4280
      %v4407 = vpop.f32.mrf.mxu0
      %v4408 = vadd.f32 %v4250, %v4407
      %4409 = vmatmul.f32.gmra.mxu0 %v4283
      %v4410 = vpop.f32.mrf.mxu0
      %v4411 = vadd.f32 %v4250, %v4410
      %4412 = vmatmul.f32.gmra.mxu0 %v4286
      %v4413 = vpop.f32.mrf.mxu0
      %v4414 = vadd.f32 %v4250, %v4413
      %4415 = vmatmul.f32.gmra.mxu0 %v4289
      %v4416 = vpop.f32.mrf.mxu0
      %v4417 = vadd.f32 %v4250, %v4416
      %4418 = vmatmul.f32.gmra.mxu0 %v4292
      %v4419 = vpop.f32.mrf.mxu0
      %v4420 = vadd.f32 %v4250, %v4419
      %4421 = vmatmul.f32.gmra.mxu0 %v4295
      %v4422 = vpop.f32.mrf.mxu0
      %v4423 = vadd.f32 %v4250, %v4422
      %4424 = vmatmul.f32.gmra.mxu0 %v4298
      %v4425 = vpop.f32.mrf.mxu0
      %v4426 = vadd.f32 %v4250, %v4425
      %4427 = vmatmul.f32.gmra.mxu0 %v4301
      %v4428 = vpop.f32.mrf.mxu0
      %v4429 = vadd.f32 %v4250, %v4428
      %4430 = vmatmul.f32.gmra.mxu0 %v4304
      %v4431 = vpop.f32.mrf.mxu0
      %v4432 = vadd.f32 %v4250, %v4431
      %4433 = vmatmul.f32.gmra.mxu0 %v4307
      %v4434 = vpop.f32.mrf.mxu0
      %v4435 = vadd.f32 %v4250, %v4434
      %4436 = vmatmul.f32.gmra.mxu0 %v4310
      %v4437 = vpop.f32.mrf.mxu0
      %v4438 = vadd.f32 %v4250, %v4437
      %4439 = vmatmul.f32.gmra.mxu0 %v4313
      %v4440 = vpop.f32.mrf.mxu0
      %v4441 = vadd.f32 %v4250, %v4440
      %4442 = vmatmul.f32.gmra.mxu0 %v4316
      %v4443 = vpop.f32.mrf.mxu0
      %v4444 = vadd.f32 %v4250, %v4443
      %4445 = vmatmul.f32.gmra.mxu0 %v4319
      %v4446 = vpop.f32.mrf.mxu0
      %v4447 = vadd.f32 %v4250, %v4446
      %4448 = vmatmul.f32.gmra.mxu0 %v4322
      %v4449 = vpop.f32.mrf.mxu0
      %v4450 = vadd.f32 %v4250, %v4449
      %4451 = vmatmul.f32.gmra.mxu0 %v4325
      %v4452 = vpop.f32.mrf.mxu0
      %v4453 = vadd.f32 %v4250, %v4452
      %4454 = vmatmul.f32.gmra.mxu0 %v4328
      %v4455 = vpop.f32.mrf.mxu0
      %v4456 = vadd.f32 %v4250, %v4455
      %4457 = vmatmul.f32.gmra.mxu0 %v4331
      %v4458 = vpop.f32.mrf.mxu0
      %v4459 = vadd.f32 %v4250, %v4458
      %4460 = vmatmul.f32.gmra.mxu0 %v4334
      %v4461 = vpop.f32.mrf.mxu0
      %v4462 = vadd.f32 %v4250, %v4461
      %4463 = vmatmul.f32.gmra.mxu0 %v4337
      %v4464 = vpop.f32.mrf.mxu0
      %v4465 = vadd.f32 %v4250, %v4464
      %4466 = vmatmul.f32.gmra.mxu0 %v4340
      %v4467 = vpop.f32.mrf.mxu0
      %v4468 = vadd.f32 %v4250, %v4467
      %4469 = vmatmul.f32.gmra.mxu0 %v4343
      %v4470 = vpop.f32.mrf.mxu0
      %v4471 = vadd.f32 %v4250, %v4470
      %4472 = vmatmul.f32.gmra.mxu0 %v4346
      %v4473 = vpop.f32.mrf.mxu0
      %v4474 = vadd.f32 %v4250, %v4473
      %4475 = vmatmul.f32.gmra.mxu0 %v4349
      %v4476 = vpop.f32.mrf.mxu0
      %v4477 = vadd.f32 %v4250, %v4476
      %4478 = vmatmul.f32.gmra.mxu0 %v4352
      %v4479 = vpop.f32.mrf.mxu0
      %v4480 = vadd.f32 %v4250, %v4479
      %4481 = vmatmul.f32.gmra.mxu0 %v4355
      %v4482 = vpop.f32.mrf.mxu0
      %v4483 = vadd.f32 %v4250, %v4482
      %4484 = vmatmul.f32.gmra.mxu0 %v4358
      %v4485 = vpop.f32.mrf.mxu0
      %v4486 = vadd.f32 %v4250, %v4485
      %4487 = vdwg.mxu0
      %s4488 = sadd.s32 %s356, 19
      %s4489 = scalar_lea.vmem %s345, %s4488
      %v4490 = vld [vmem:[%s4489] sm:$0xff]
      %v4491 = vld [vmem:[%s4489 + $0x8] sm:$0xff]
      %v4492 = vld [vmem:[%s4489 + $0x10] sm:$0xff]
      %v4493 = vld [vmem:[%s4489 + $0x18] sm:$0xff]
      %v4494 = vld [vmem:[%s4489 + $0x20] sm:$0xff]
      %v4495 = vld [vmem:[%s4489 + $0x28] sm:$0xff]
      %v4496 = vld [vmem:[%s4489 + $0x30] sm:$0xff]
      %v4497 = vld [vmem:[%s4489 + $0x38] sm:$0xff]
      %v4498 = vld [vmem:[%s4489 + $0x40] sm:$0xff]
      %v4499 = vld [vmem:[%s4489 + $0x48] sm:$0xff]
      %v4500 = vld [vmem:[%s4489 + $0x50] sm:$0xff]
      %v4501 = vld [vmem:[%s4489 + $0x58] sm:$0xff]
      %v4502 = vld [vmem:[%s4489 + $0x60] sm:$0xff]
      %v4503 = vld [vmem:[%s4489 + $0x68] sm:$0xff]
      %v4504 = vld [vmem:[%s4489 + $0x70] sm:$0xff]
      %v4505 = vld [vmem:[%s4489 + $0x78] sm:$0xff]
      %v4506 = vld [vmem:[%s4489 + $0x80] sm:$0xff]
      %v4507 = vld [vmem:[%s4489 + $0x88] sm:$0xff]
      %v4508 = vld [vmem:[%s4489 + $0x90] sm:$0xff]
      %v4509 = vld [vmem:[%s4489 + $0x98] sm:$0xff]
      %v4510 = vld [vmem:[%s4489 + $0xa0] sm:$0xff]
      %v4511 = vld [vmem:[%s4489 + $0xa8] sm:$0xff]
      %v4512 = vld [vmem:[%s4489 + $0xb0] sm:$0xff]
      %v4513 = vld [vmem:[%s4489 + $0xb8] sm:$0xff]
      %v4514 = vld [vmem:[%s4489 + $0xc0] sm:$0xff]
      %v4515 = vld [vmem:[%s4489 + $0xc8] sm:$0xff]
      %v4516 = vld [vmem:[%s4489 + $0xd0] sm:$0xff]
      %v4517 = vld [vmem:[%s4489 + $0xd8] sm:$0xff]
      %v4518 = vld [vmem:[%s4489 + $0xe0] sm:$0xff]
      %v4519 = vld [vmem:[%s4489 + $0xe8] sm:$0xff]
      %v4520 = vld [vmem:[%s4489 + $0xf0] sm:$0xff]
      %v4521 = vld [vmem:[%s4489 + $0xf8] sm:$0xff]
      %v4522 = vld [vmem:[%s4489 + $0x100] sm:$0xff]
      %v4523 = vld [vmem:[%s4489 + $0x108] sm:$0xff]
      %v4524 = vld [vmem:[%s4489 + $0x110] sm:$0xff]
      %v4525 = vld [vmem:[%s4489 + $0x118] sm:$0xff]
      %v4526 = vld [vmem:[%s7] sm:$0xf]
      %v4527 = vld [vmem:[%s8] sm:$0x1]
      %v4529 = vperm.slane %v4527, 0
      %v4532 = vsel %vm404, %v4490, 0
      %v4535 = vsel %vm404, %v4491, 0
      %v4538 = vsel %vm404, %v4492, 0
      %v4541 = vsel %vm404, %v4493, 0
      %v4544 = vsel %vm404, %v4494, 0
      %v4547 = vsel %vm404, %v4495, 0
      %v4550 = vsel %vm404, %v4496, 0
      %v4553 = vsel %vm404, %v4497, 0
      %v4556 = vsel %vm404, %v4498, 0
      %v4559 = vsel %vm404, %v4499, 0
      %v4562 = vsel %vm404, %v4500, 0
      %v4565 = vsel %vm404, %v4501, 0
      %v4568 = vsel %vm404, %v4502, 0
      %v4571 = vsel %vm404, %v4503, 0
      %v4574 = vsel %vm404, %v4504, 0
      %v4577 = vsel %vm404, %v4505, 0
      %v4580 = vsel %vm404, %v4506, 0
      %v4583 = vsel %vm404, %v4507, 0
      %v4586 = vsel %vm404, %v4508, 0
      %v4589 = vsel %vm404, %v4509, 0
      %v4592 = vsel %vm404, %v4510, 0
      %v4595 = vsel %vm404, %v4511, 0
      %v4598 = vsel %vm404, %v4512, 0
      %v4601 = vsel %vm404, %v4513, 0
      %v4604 = vsel %vm404, %v4514, 0
      %v4607 = vsel %vm404, %v4515, 0
      %v4610 = vsel %vm404, %v4516, 0
      %v4613 = vsel %vm404, %v4517, 0
      %v4616 = vsel %vm404, %v4518, 0
      %v4619 = vsel %vm404, %v4519, 0
      %v4622 = vsel %vm404, %v4520, 0
      %v4625 = vsel %vm404, %v4521, 0
      %v4628 = vsel %vm404, %v4522, 0
      %v4631 = vsel %vm404, %v4523, 0
      %v4634 = vsel %vm404, %v4524, 0
      %v4637 = vsel %vm404, %v4525, 0
      %v4640 = vsel %vm528, %v4526, 0
      %4642 = vmatpush.msra.mxu0 0.0
      %4643 = vmatpush.msra.mxu0 0.0
      %4644 = vmatpush.msra.mxu0 0.0
      %4645 = vmatpush.msra.mxu0 0.0
      %4646 = vmatpush.msra.mxu0 0.0
      %4647 = vmatpush.msra.mxu0 0.0
      %4648 = vmatpush.msra.mxu0 0.0
      %4649 = vmatpush.msra.mxu0 0.0
      %4650 = vmatpush.msra.mxu0 0.0
      %4651 = vmatpush.msra.mxu0 0.0
      %4652 = vmatpush.msra.mxu0 0.0
      %4653 = vmatpush.msra.mxu0 0.0
      %4654 = vmatpush.msra.mxu0 0.0
      %4655 = vmatpush.msra.mxu0 0.0
      %4656 = vmatpush.msra.mxu0 0.0
      %4657 = vmatpush.msra.mxu0 %v4640
      %4658 = vmatmul.f32.gmra.mxu0 %v4532
      %v4659 = vpop.f32.mrf.mxu0
      %v4660 = vadd.f32 %v4529, %v4659
      %4661 = vmatmul.f32.gmra.mxu0 %v4535
      %v4662 = vpop.f32.mrf.mxu0
      %v4663 = vadd.f32 %v4529, %v4662
      %4664 = vmatmul.f32.gmra.mxu0 %v4538
      %v4665 = vpop.f32.mrf.mxu0
      %v4666 = vadd.f32 %v4529, %v4665
      %4667 = vmatmul.f32.gmra.mxu0 %v4541
      %v4668 = vpop.f32.mrf.mxu0
      %v4669 = vadd.f32 %v4529, %v4668
      %4670 = vmatmul.f32.gmra.mxu0 %v4544
      %v4671 = vpop.f32.mrf.mxu0
      %v4672 = vadd.f32 %v4529, %v4671
      %4673 = vmatmul.f32.gmra.mxu0 %v4547
      %v4674 = vpop.f32.mrf.mxu0
      %v4675 = vadd.f32 %v4529, %v4674
      %4676 = vmatmul.f32.gmra.mxu0 %v4550
      %v4677 = vpop.f32.mrf.mxu0
      %v4678 = vadd.f32 %v4529, %v4677
      %4679 = vmatmul.f32.gmra.mxu0 %v4553
      %v4680 = vpop.f32.mrf.mxu0
      %v4681 = vadd.f32 %v4529, %v4680
      %4682 = vmatmul.f32.gmra.mxu0 %v4556
      %v4683 = vpop.f32.mrf.mxu0
      %v4684 = vadd.f32 %v4529, %v4683
      %4685 = vmatmul.f32.gmra.mxu0 %v4559
      %v4686 = vpop.f32.mrf.mxu0
      %v4687 = vadd.f32 %v4529, %v4686
      %4688 = vmatmul.f32.gmra.mxu0 %v4562
      %v4689 = vpop.f32.mrf.mxu0
      %v4690 = vadd.f32 %v4529, %v4689
      %4691 = vmatmul.f32.gmra.mxu0 %v4565
      %v4692 = vpop.f32.mrf.mxu0
      %v4693 = vadd.f32 %v4529, %v4692
      %4694 = vmatmul.f32.gmra.mxu0 %v4568
      %v4695 = vpop.f32.mrf.mxu0
      %v4696 = vadd.f32 %v4529, %v4695
      %4697 = vmatmul.f32.gmra.mxu0 %v4571
      %v4698 = vpop.f32.mrf.mxu0
      %v4699 = vadd.f32 %v4529, %v4698
      %4700 = vmatmul.f32.gmra.mxu0 %v4574
      %v4701 = vpop.f32.mrf.mxu0
      %v4702 = vadd.f32 %v4529, %v4701
      %4703 = vmatmul.f32.gmra.mxu0 %v4577
      %v4704 = vpop.f32.mrf.mxu0
      %v4705 = vadd.f32 %v4529, %v4704
      %4706 = vmatmul.f32.gmra.mxu0 %v4580
      %v4707 = vpop.f32.mrf.mxu0
      %v4708 = vadd.f32 %v4529, %v4707
      %4709 = vmatmul.f32.gmra.mxu0 %v4583
      %v4710 = vpop.f32.mrf.mxu0
      %v4711 = vadd.f32 %v4529, %v4710
      %4712 = vmatmul.f32.gmra.mxu0 %v4586
      %v4713 = vpop.f32.mrf.mxu0
      %v4714 = vadd.f32 %v4529, %v4713
      %4715 = vmatmul.f32.gmra.mxu0 %v4589
      %v4716 = vpop.f32.mrf.mxu0
      %v4717 = vadd.f32 %v4529, %v4716
      %4718 = vmatmul.f32.gmra.mxu0 %v4592
      %v4719 = vpop.f32.mrf.mxu0
      %v4720 = vadd.f32 %v4529, %v4719
      %4721 = vmatmul.f32.gmra.mxu0 %v4595
      %v4722 = vpop.f32.mrf.mxu0
      %v4723 = vadd.f32 %v4529, %v4722
      %4724 = vmatmul.f32.gmra.mxu0 %v4598
      %v4725 = vpop.f32.mrf.mxu0
      %v4726 = vadd.f32 %v4529, %v4725
      %4727 = vmatmul.f32.gmra.mxu0 %v4601
      %v4728 = vpop.f32.mrf.mxu0
      %v4729 = vadd.f32 %v4529, %v4728
      %4730 = vmatmul.f32.gmra.mxu0 %v4604
      %v4731 = vpop.f32.mrf.mxu0
      %v4732 = vadd.f32 %v4529, %v4731
      %4733 = vmatmul.f32.gmra.mxu0 %v4607
      %v4734 = vpop.f32.mrf.mxu0
      %v4735 = vadd.f32 %v4529, %v4734
      %4736 = vmatmul.f32.gmra.mxu0 %v4610
      %v4737 = vpop.f32.mrf.mxu0
      %v4738 = vadd.f32 %v4529, %v4737
      %4739 = vmatmul.f32.gmra.mxu0 %v4613
      %v4740 = vpop.f32.mrf.mxu0
      %v4741 = vadd.f32 %v4529, %v4740
      %4742 = vmatmul.f32.gmra.mxu0 %v4616
      %v4743 = vpop.f32.mrf.mxu0
      %v4744 = vadd.f32 %v4529, %v4743
      %4745 = vmatmul.f32.gmra.mxu0 %v4619
      %v4746 = vpop.f32.mrf.mxu0
      %v4747 = vadd.f32 %v4529, %v4746
      %4748 = vmatmul.f32.gmra.mxu0 %v4622
      %v4749 = vpop.f32.mrf.mxu0
      %v4750 = vadd.f32 %v4529, %v4749
      %4751 = vmatmul.f32.gmra.mxu0 %v4625
      %v4752 = vpop.f32.mrf.mxu0
      %v4753 = vadd.f32 %v4529, %v4752
      %4754 = vmatmul.f32.gmra.mxu0 %v4628
      %v4755 = vpop.f32.mrf.mxu0
      %v4756 = vadd.f32 %v4529, %v4755
      %4757 = vmatmul.f32.gmra.mxu0 %v4631
      %v4758 = vpop.f32.mrf.mxu0
      %v4759 = vadd.f32 %v4529, %v4758
      %4760 = vmatmul.f32.gmra.mxu0 %v4634
      %v4761 = vpop.f32.mrf.mxu0
      %v4762 = vadd.f32 %v4529, %v4761
      %4763 = vmatmul.f32.gmra.mxu0 %v4637
      %v4764 = vpop.f32.mrf.mxu0
      %v4765 = vadd.f32 %v4529, %v4764
      %4766 = vdwg.mxu0
      %v4767 = vadd.f32 %v4381, %v4660
      %v4768 = vadd.f32 %v4384, %v4663
      %v4769 = vadd.f32 %v4387, %v4666
      %v4770 = vadd.f32 %v4390, %v4669
      %v4771 = vadd.f32 %v4393, %v4672
      %v4772 = vadd.f32 %v4396, %v4675
      %v4773 = vadd.f32 %v4399, %v4678
      %v4774 = vadd.f32 %v4402, %v4681
      %v4775 = vadd.f32 %v4405, %v4684
      %v4776 = vadd.f32 %v4408, %v4687
      %v4777 = vadd.f32 %v4411, %v4690
      %v4778 = vadd.f32 %v4414, %v4693
      %v4779 = vadd.f32 %v4417, %v4696
      %v4780 = vadd.f32 %v4420, %v4699
      %v4781 = vadd.f32 %v4423, %v4702
      %v4782 = vadd.f32 %v4426, %v4705
      %v4783 = vadd.f32 %v4429, %v4708
      %v4784 = vadd.f32 %v4432, %v4711
      %v4785 = vadd.f32 %v4435, %v4714
      %v4786 = vadd.f32 %v4438, %v4717
      %v4787 = vadd.f32 %v4441, %v4720
      %v4788 = vadd.f32 %v4444, %v4723
      %v4789 = vadd.f32 %v4447, %v4726
      %v4790 = vadd.f32 %v4450, %v4729
      %v4791 = vadd.f32 %v4453, %v4732
      %v4792 = vadd.f32 %v4456, %v4735
      %v4793 = vadd.f32 %v4459, %v4738
      %v4794 = vadd.f32 %v4462, %v4741
      %v4795 = vadd.f32 %v4465, %v4744
      %v4796 = vadd.f32 %v4468, %v4747
      %v4797 = vadd.f32 %v4471, %v4750
      %v4798 = vadd.f32 %v4474, %v4753
      %v4799 = vadd.f32 %v4477, %v4756
      %v4800 = vadd.f32 %v4480, %v4759
      %v4801 = vadd.f32 %v4483, %v4762
      %v4802 = vadd.f32 %v4486, %v4765
      %v4803 = vmax.f32 %v4767, 0.0
      %v4804 = vmax.f32 %v4768, 0.0
      %v4805 = vmax.f32 %v4769, 0.0
      %v4806 = vmax.f32 %v4770, 0.0
      %v4807 = vmax.f32 %v4771, 0.0
      %v4808 = vmax.f32 %v4772, 0.0
      %v4809 = vmax.f32 %v4773, 0.0
      %v4810 = vmax.f32 %v4774, 0.0
      %v4811 = vmax.f32 %v4775, 0.0
      %v4812 = vmax.f32 %v4776, 0.0
      %v4813 = vmax.f32 %v4777, 0.0
      %v4814 = vmax.f32 %v4778, 0.0
      %v4815 = vmax.f32 %v4779, 0.0
      %v4816 = vmax.f32 %v4780, 0.0
      %v4817 = vmax.f32 %v4781, 0.0
      %v4818 = vmax.f32 %v4782, 0.0
      %v4819 = vmax.f32 %v4783, 0.0
      %v4820 = vmax.f32 %v4784, 0.0
      %v4821 = vmax.f32 %v4785, 0.0
      %v4822 = vmax.f32 %v4786, 0.0
      %v4823 = vmax.f32 %v4787, 0.0
      %v4824 = vmax.f32 %v4788, 0.0
      %v4825 = vmax.f32 %v4789, 0.0
      %v4826 = vmax.f32 %v4790, 0.0
      %v4827 = vmax.f32 %v4791, 0.0
      %v4828 = vmax.f32 %v4792, 0.0
      %v4829 = vmax.f32 %v4793, 0.0
      %v4830 = vmax.f32 %v4794, 0.0
      %v4831 = vmax.f32 %v4795, 0.0
      %v4832 = vmax.f32 %v4796, 0.0
      %v4833 = vmax.f32 %v4797, 0.0
      %v4834 = vmax.f32 %v4798, 0.0
      %v4835 = vmax.f32 %v4799, 0.0
      %v4836 = vmax.f32 %v4800, 0.0
      %v4837 = vmax.f32 %v4801, 0.0
      %v4838 = vmax.f32 %v4802, 0.0
      %vm4839 = vcmask 130048
      %4840 = vst.msk [vmem:[%s354] sm:$0xff] %vm4839, %v4803
      %4841 = vst.msk [vmem:[%s354 + $0x8] sm:$0xff] %vm4839, %v4804
      %4842 = vst.msk [vmem:[%s354 + $0x10] sm:$0xff] %vm4839, %v4805
      %4843 = vst.msk [vmem:[%s354 + $0x18] sm:$0xff] %vm4839, %v4806
      %4844 = vst.msk [vmem:[%s354 + $0x20] sm:$0xff] %vm4839, %v4807
      %4845 = vst.msk [vmem:[%s354 + $0x28] sm:$0xff] %vm4839, %v4808
      %4846 = vst.msk [vmem:[%s354 + $0x30] sm:$0xff] %vm4839, %v4809
      %4847 = vst.msk [vmem:[%s354 + $0x38] sm:$0xff] %vm4839, %v4810
      %4848 = vst.msk [vmem:[%s354 + $0x40] sm:$0xff] %vm4839, %v4811
      %4849 = vst.msk [vmem:[%s354 + $0x48] sm:$0xff] %vm4839, %v4812
      %4850 = vst.msk [vmem:[%s354 + $0x50] sm:$0xff] %vm4839, %v4813
      %4851 = vst.msk [vmem:[%s354 + $0x58] sm:$0xff] %vm4839, %v4814
      %4852 = vst.msk [vmem:[%s354 + $0x60] sm:$0xff] %vm4839, %v4815
      %4853 = vst.msk [vmem:[%s354 + $0x68] sm:$0xff] %vm4839, %v4816
      %4854 = vst.msk [vmem:[%s354 + $0x70] sm:$0xff] %vm4839, %v4817
      %4855 = vst.msk [vmem:[%s354 + $0x78] sm:$0xff] %vm4839, %v4818
      %4856 = vst.msk [vmem:[%s354 + $0x80] sm:$0xff] %vm4839, %v4819
      %4857 = vst.msk [vmem:[%s354 + $0x88] sm:$0xff] %vm4839, %v4820
      %4858 = vst.msk [vmem:[%s354 + $0x90] sm:$0xff] %vm4839, %v4821
      %4859 = vst.msk [vmem:[%s354 + $0x98] sm:$0xff] %vm4839, %v4822
      %4860 = vst.msk [vmem:[%s354 + $0xa0] sm:$0xff] %vm4839, %v4823
      %4861 = vst.msk [vmem:[%s354 + $0xa8] sm:$0xff] %vm4839, %v4824
      %4862 = vst.msk [vmem:[%s354 + $0xb0] sm:$0xff] %vm4839, %v4825
      %4863 = vst.msk [vmem:[%s354 + $0xb8] sm:$0xff] %vm4839, %v4826
      %4864 = vst.msk [vmem:[%s354 + $0xc0] sm:$0xff] %vm4839, %v4827
      %4865 = vst.msk [vmem:[%s354 + $0xc8] sm:$0xff] %vm4839, %v4828
      %4866 = vst.msk [vmem:[%s354 + $0xd0] sm:$0xff] %vm4839, %v4829
      %4867 = vst.msk [vmem:[%s354 + $0xd8] sm:$0xff] %vm4839, %v4830
      %4868 = vst.msk [vmem:[%s354 + $0xe0] sm:$0xff] %vm4839, %v4831
      %4869 = vst.msk [vmem:[%s354 + $0xe8] sm:$0xff] %vm4839, %v4832
      %4870 = vst.msk [vmem:[%s354 + $0xf0] sm:$0xff] %vm4839, %v4833
      %4871 = vst.msk [vmem:[%s354 + $0xf8] sm:$0xff] %vm4839, %v4834
      %4872 = vst.msk [vmem:[%s354 + $0x100] sm:$0xff] %vm4839, %v4835
      %4873 = vst.msk [vmem:[%s354 + $0x108] sm:$0xff] %vm4839, %v4836
      %4874 = vst.msk [vmem:[%s354 + $0x110] sm:$0xff] %vm4839, %v4837
      %4875 = vst.msk [vmem:[%s354 + $0x118] sm:$0xff] %vm4839, %v4838
      %s4876 = smul.u32 36, %s25
      %p4877 = scmp.lt.s32.totalorder %s24, 1
      %s4878 = scalar_select %p4877, %s24, 1
      %p4879 = scmp.lt.s32.totalorder %s4876, 35
      %s4880 = scalar_select %p4879, %s4876, 35
      %s4881 = smul.addr %s4878, 36
      %s4882 = sadd.s32 %s4880, %s4881
      %s4883 = smul.addr %s4882, 8
      %s4884 = scalar_lea.vmem %s9, %s4883
      // Predicated region
      $region57: #{tpu_custom_call.1} parent=55 // pred_check
        %p4885 = pneg %p246
      $region58: #{tpu_custom_call.1} parent=55 // pred_check_branch
        %4887 = sbr.rel (%p4885) target = $region60
      $region59: #{tpu_custom_call.1} parent=55 // pred_region
        %s4888 = smul.u32 36, %s25
      $region60: #{tpu_custom_call.1} parent=55 // pred_fallthru
        _
    $region56: #{tpu_custom_call.1} parent=5 // pred_fallthru
      _
    %p4889 = scmp.le.s32.totalorder 2, %s15
    // Predicated region
    $region61: #{tpu_custom_call.1} parent=5 // pred_check
      %p4890 = pneg %p4889
    $region62: #{tpu_custom_call.1} parent=5 // pred_check_branch
      %4892 = sbr.rel (%p4890) target = $region64
    $region63: #{tpu_custom_call.1} parent=5 // pred_region
      %s4893 = ssub.s32 %s15, 2
      // Predicated region
      $region65: #{tpu_custom_call.1} parent=63 // pred_check
        %p4894 = pneg %p252
      $region66: #{tpu_custom_call.1} parent=63 // pred_check_branch
        %4896 = sbr.rel (%p4894) target = $region68
      $region67: #{tpu_custom_call.1} parent=63 // pred_region
        %s4897 = smul.u32 36, %s27
        %p4898 = scmp.lt.s32.totalorder %s26, 1
        %s4899 = scalar_select %p4898, %s26, 1
        %p4900 = scmp.lt.s32.totalorder %s4897, 35
        %s4901 = scalar_select %p4900, %s4897, 35
        %s4902 = smul.addr %s4899, 36
        %s4903 = sadd.s32 %s4901, %s4902
        %s4904 = smul.addr %s4903, 8
        %s4905 = scalar_lea.vmem %s9, %s4904
      $region68: #{tpu_custom_call.1} parent=63 // pred_fallthru
        _
    $region64: #{tpu_custom_call.1} parent=5 // pred_fallthru
      _
  $region6: #{tpu_custom_call.1} parent=0 // loop_footer
    %s19 = sadd.s32 1, %s15
  $region7: #{tpu_custom_call.1} parent=0 // loop_footer_branch
    %14 = sbr.rel target = $region3
  $region8: #{tpu_custom_call.1} parent=0 // loop_exit
    _

</llo_original>
